<compile_context>
chip_gen: v5e
topology: v5e:2x2
jax: 0.10.0
libtpu: 0.0.40
codegen_flags: <defaults>
</compile_context>

<pallas_src>
import functools

import numpy as np
import jax
import jax.numpy as jnp
from jax.experimental import pallas as pl
from jax.experimental.pallas import tpu as pltpu


# ----------------------------------------------------------------------------
# In-kernel helpers
# ----------------------------------------------------------------------------
def _refine3x3(c1p, c2u, w9_ref, br_ref, wm_ref, pad_ref, *, W, Cm, pad):
    """3x3 conv (pad=1, bias folded from BN) + ReLU on cat([c1p, c2u], channels).

    c1p, c2u : (Cm, M) f32 values, M = H*W flattened spatial (lanes)
    w9_ref   : (9, Cm, 2*Cm) bf16 folded weights, tap order kh*3+kw
    br_ref   : (Cm, 1) f32 bias
    wm_ref   : (3, 1, M) f32 lane masks for dw = -1 / 0 / +1 (row-wrap zeroing)
    pad_ref  : (2*Cm, M + 2*pad) bf16 VMEM scratch; valid data at lane offset `pad`
    """
    M = c1p.shape[1]

    # Zero-padded, channel-concatenated tap buffer (zeros cover the h-overflow
    # reads; the w-overflow reads are killed by the lane masks below).
    pad_ref[...] = jnp.zeros_like(pad_ref)
    pad_ref[0:Cm, pad:pad + M] = c1p.astype(pad_ref.dtype)
    pad_ref[Cm:2 * Cm, pad:pad + M] = c2u.astype(pad_ref.dtype)

    acc = jnp.zeros((Cm, M), jnp.float32)
    for kh in range(3):               # static unroll: 9 small MXU matmuls
        for kw in range(3):
            shift = (kh - 1) * W + (kw - 1)
            tap = pad_ref[:, pad + shift:pad + shift + M]      # (2*Cm, M) bf16
            contrib = jnp.dot(w9_ref[kh * 3 + kw], tap,
                              preferred_element_type=jnp.float32)
            if kw != 1:               # zero taps that wrapped across a row edge
                contrib = contrib * wm_ref[kw]
            acc = acc + contrib
    return jnp.maximum(acc + br_ref[...], 0.0)


def _lu4_kernel(c3_ref, c4_ref, w5_ref, b5_ref, wc_ref, bc_ref, u_ref,
                w9_ref, br_ref, wm_ref, o_ref, pad_ref, *, W, Cm, pad):
    """Fused conv5(c4) -> localUp4(c3, .) for one batch element."""
    # conv5: 1x1 conv + folded BN + ReLU                               (Cm, Ms)
    c4 = c4_ref[0].astype(jnp.bfloat16)
    prev = jnp.dot(w5_ref[...], c4, preferred_element_type=jnp.float32)
    prev = jnp.maximum(prev + b5_ref[...], 0.0)

    # localUp4.connect: 1x1 conv + folded BN + ReLU on c3              (Cm, M)
    c3 = c3_ref[0].astype(jnp.bfloat16)
    c1p = jnp.dot(wc_ref[...], c3, preferred_element_type=jnp.float32)
    c1p = jnp.maximum(c1p + bc_ref[...], 0.0)

    # bilinear upsample (align_corners=True) as a single matmul        (Cm, M)
    c2u = jnp.dot(prev.astype(jnp.bfloat16), u_ref[...],
                  preferred_element_type=jnp.float32)

    out = _refine3x3(c1p, c2u, w9_ref, br_ref, wm_ref, pad_ref,
                     W=W, Cm=Cm, pad=pad)
    o_ref[0] = out.astype(o_ref.dtype)


def _lu3_conv6_kernel(c2_ref, p_ref, wc_ref, bc_ref, u_ref, w9_ref, br_ref,
                      wl_ref, bl_ref, wm_ref, o_ref, pad_ref, *, W, Cm, pad):
    """Fused localUp3(c2, out3) + conv6 for one batch element."""
    c2 = c2_ref[0].astype(jnp.bfloat16)
    c1p = jnp.dot(wc_ref[...], c2, preferred_element_type=jnp.float32)
    c1p = jnp.maximum(c1p + bc_ref[...], 0.0)

    c2u = jnp.dot(p_ref[0], u_ref[...], preferred_element_type=jnp.float32)

    refined = _refine3x3(c1p, c2u, w9_ref, br_ref, wm_ref, pad_ref,
                         W=W, Cm=Cm, pad=pad)

    # conv6: Dropout2d(0.1) is identity in eval; 1x1 conv with bias.
    # TODO(synk): training-mode channel dropout not implemented.
    logits = jnp.dot(wl_ref[...], refined.astype(jnp.bfloat16),
                     preferred_element_type=jnp.float32) + bl_ref[...]
    o_ref[0] = logits.astype(o_ref.dtype)


# ----------------------------------------------------------------------------
# Trace-time constants (pure numpy -> baked in, no runtime glue)
# ----------------------------------------------------------------------------
def _interp_matrix(out_size, in_size):
    """align_corners=True bilinear interpolation matrix (out_size, in_size)."""
    if out_size == 1 or in_size == 1:
        src = np.zeros((out_size,), np.float64)
    else:
        src = np.arange(out_size, dtype=np.float64) * (in_size - 1) / (out_size - 1)
    lo = np.clip(np.floor(src).astype(np.int64), 0, in_size - 1)
    hi = np.clip(lo + 1, 0, in_size - 1)
    frac = src - lo
    A = np.zeros((out_size, in_size), np.float64)
    A[np.arange(out_size), lo] += 1.0 - frac
    A[np.arange(out_size), hi] += frac
    return A


def _upsample_matrix(out_h, out_w, in_h, in_w):
    """U of shape (in_h*in_w, out_h*out_w) s.t. x_flat @ U == bilinear_ac(x)."""
    K = np.kron(_interp_matrix(out_h, in_h), _interp_matrix(out_w, in_w))
    return jnp.asarray(K.T, dtype=jnp.bfloat16)


def _row_masks(H, W):
    """(3, 1, H*W) f32 masks that zero 3x3 taps wrapping across a row edge."""
    w_idx = np.tile(np.arange(W), H)
    masks = np.stack([(w_idx >= 1), np.ones(H * W, bool), (w_idx <= W - 2)], 0)
    return jnp.asarray(masks.astype(np.float32).reshape(3, 1, H * W))


def _pad_lanes(W):
    return ((W + 1 + 127) // 128) * 128   # lane-tile aligned halo offset


# ----------------------------------------------------------------------------
# pallas_call wrappers
# ----------------------------------------------------------------------------
def _fused_localup4(p, c3f, c4f, H, W, Hs, Ws):
    N, C3, M = c3f.shape
    _, C4, Ms = c4f.shape
    Cm = p["conv5_w"].shape[0]
    pad = _pad_lanes(W)
    U = _upsample_matrix(H, W, Hs, Ws)            # (Ms, M) bf16
    wm = _row_masks(H, W)                         # (3, 1, M) f32

    row = lambda n: (n, 0, 0)
    c2d = lambda n: (0, 0)
    c3d = lambda n: (0, 0, 0)
    return pl.pallas_call(
        functools.partial(_lu4_kernel, W=W, Cm=Cm, pad=pad),
        out_shape=jax.ShapeDtypeStruct((N, Cm, M), jnp.bfloat16),
        grid=(N,),
        in_specs=[
            pl.BlockSpec((1, C3, M), row),
            pl.BlockSpec((1, C4, Ms), row),
            pl.BlockSpec((Cm, C4), c2d),
            pl.BlockSpec((Cm, 1), c2d),
            pl.BlockSpec((Cm, C3), c2d),
            pl.BlockSpec((Cm, 1), c2d),
            pl.BlockSpec((Ms, M), c2d),
            pl.BlockSpec((9, Cm, 2 * Cm), c3d),
            pl.BlockSpec((Cm, 1), c2d),
            pl.BlockSpec((3, 1, M), c3d),
        ],
        out_specs=pl.BlockSpec((1, Cm, M), row),
        scratch_shapes=[pltpu.VMEM((2 * Cm, M + 2 * pad), jnp.bfloat16)],
        compiler_params=pltpu.CompilerParams(dimension_semantics=("parallel",)),
    )(c3f, c4f, p["conv5_w"], p["conv5_b"],
      p["lu4"]["connect_w"], p["lu4"]["connect_b"], U,
      p["lu4"]["refine_w9"], p["lu4"]["refine_b"], wm)


def _fused_localup3_conv6(p, c2f, out3, H, W, Hs, Ws):
    N, C2, M = c2f.shape
    _, Cm, Ms = out3.shape
    ncls = p["conv6_w"].shape[0]
    pad = _pad_lanes(W)
    U = _upsample_matrix(H, W, Hs, Ws)
    wm = _row_masks(H, W)

    row = lambda n: (n, 0, 0)
    c2d = lambda n: (0, 0)
    c3d = lambda n: (0, 0, 0)
    return pl.pallas_call(
        functools.partial(_lu3_conv6_kernel, W=W, Cm=Cm, pad=pad),
        out_shape=jax.ShapeDtypeStruct((N, ncls, M), jnp.float32),
        grid=(N,),
        in_specs=[
            pl.BlockSpec((1, C2, M), row),
            pl.BlockSpec((1, Cm, Ms), row),
            pl.BlockSpec((Cm, C2), c2d),
            pl.BlockSpec((Cm, 1), c2d),
            pl.BlockSpec((Ms, M), c2d),
            pl.BlockSpec((9, Cm, 2 * Cm), c3d),
            pl.BlockSpec((Cm, 1), c2d),
            pl.BlockSpec((ncls, Cm), c2d),
            pl.BlockSpec((ncls, 1), c2d),
            pl.BlockSpec((3, 1, M), c3d),
        ],
        out_specs=pl.BlockSpec((1, ncls, M), row),
        scratch_shapes=[pltpu.VMEM((2 * Cm, M + 2 * pad), jnp.bfloat16)],
        compiler_params=pltpu.CompilerParams(dimension_semantics=("parallel",)),
    )(c2f, out3, p["lu3"]["connect_w"], p["lu3"]["connect_b"], U,
      p["lu3"]["refine_w9"], p["lu3"]["refine_b"],
      p["conv6_w"], p["conv6_b"], wm)


# ----------------------------------------------------------------------------
# Module forward
# ----------------------------------------------------------------------------
def fpn_cat3x3_head_forward(params, c1, c2, c3, c4):
    # c1 is unused by the reference forward; accepted for signature fidelity.
    del c1
    N, _, H2, W2 = c2.shape
    _, _, H3, W3 = c3.shape
    _, _, H4, W4 = c4.shape
    # channels-first, spatial flattened -> free reshapes (no transposes)
    c2f = c2.reshape(N, c2.shape[1], H2 * W2)
    c3f = c3.reshape(N, c3.shape[1], H3 * W3)
    c4f = c4.reshape(N, c4.shape[1], H4 * W4)

    out3 = _fused_localup4(params, c3f, c4f, H3, W3, H4, W4)          # (N,Cm,M3)
    logits = _fused_localup3_conv6(params, c2f, out3, H2, W2, H3, W3)  # (N,K,M2)
    return logits.reshape(N, -1, H2, W2)   # already NCHW


# ----------------------------------------------------------------------------
# Deterministic parameters (BatchNorm folded into weights, eval mode)
# ----------------------------------------------------------------------------
def _bn_affine(key, C, eps=1e-5):
    k1, k2, k3, k4 = jax.random.split(key, 4)
    gamma = 1.0 + 0.1 * jax.random.normal(k1, (C,))
    beta = 0.1 * jax.random.normal(k2, (C,))
    mean = 0.1 * jax.random.normal(k3, (C,))
    var = 1.0 + 0.1 * jnp.abs(jax.random.normal(k4, (C,)))
    scale = gamma / jnp.sqrt(var + eps)
    bias = beta - mean * scale
    return scale.astype(jnp.float32), bias.astype(jnp.float32)


def _folded_conv1x1(key, cin, cout, scale):
    """torch (cout,cin,1,1) weight with BN scale folded -> (cout, cin) bf16."""
    w = 0.05 * jax.random.normal(key, (cout, cin))
    return (w * scale[:, None]).astype(jnp.bfloat16)


def _folded_conv3x3(key, cin, cout, scale):
    """torch (cout,cin,3,3) weight with BN scale folded -> (9, cout, cin) bf16."""
    w = 0.05 * jax.random.normal(key, (cout, cin, 3, 3)) * scale[:, None, None, None]
    return jnp.transpose(w, (2, 3, 0, 1)).reshape(9, cout, cin).astype(jnp.bfloat16)


def make_params(key, in_channels, out_channels):
    inter = in_channels // 4
    keys = jax.random.split(key, 12)
    s5, b5 = _bn_affine(keys[1], inter)
    s4c, b4c = _bn_affine(keys[3], inter)
    s4r, b4r = _bn_affine(keys[5], inter)
    s3c, b3c = _bn_affine(keys[7], inter)
    s3r, b3r = _bn_affine(keys[9], inter)
    col = lambda b: b.reshape(-1, 1)
    return {
        "conv5_w": _folded_conv1x1(keys[0], in_channels, inter, s5),
        "conv5_b": col(b5),
        "lu4": {  # localUp(1024, inter)
            "connect_w": _folded_conv1x1(keys[2], 1024, inter, s4c),
            "connect_b": col(b4c),
            "refine_w9": _folded_conv3x3(keys[4], 2 * inter, inter, s4r),
            "refine_b": col(b4r),
        },
        "lu3": {  # localUp(512, inter)
            "connect_w": _folded_conv1x1(keys[6], 512, inter, s3c),
            "connect_b": col(b3c),
            "refine_w9": _folded_conv3x3(keys[8], 2 * inter, inter, s3r),
            "refine_b": col(b3r),
        },
        "conv6_w": (0.05 * jax.random.normal(keys[10], (out_channels, inter))
                    ).astype(jnp.bfloat16),
        "conv6_b": (0.05 * jax.random.normal(keys[11], (out_channels, 1))
                    ).astype(jnp.float32),
    }


# ----------------------------------------------------------------------------
if __name__ == "__main__":
    key = jax.random.PRNGKey(0)
    k_p, k1, k2, k3, k4 = jax.random.split(key, 5)

    in_channels = 64       # -> inter_channels = 16
    out_channels = 8       # number of classes
    N = 2

    params = make_params(k_p, in_channels, out_channels)

    # NCHW inputs (PyTorch convention); c2/c3 channel counts fixed by the module.
    c1 = jax.random.normal(k1, (N, 64, 32, 32), jnp.float32)   # unused by forward
    c2 = jax.random.normal(k2, (N, 512, 16, 16), jnp.float32)
    c3 = jax.random.normal(k3, (N, 1024, 8, 8), jnp.float32)
    c4 = jax.random.normal(k4, (N, in_channels, 4, 4), jnp.float32)

    out = jax.jit(fpn_cat3x3_head_forward)(params, c1, c2, c3, c4)
    jax.block_until_ready(out)
    assert out.shape == (N, out_channels, 16, 16), out.shape
    print("KERNEL_OK")
</pallas_src>

<mosaic_0001>
module attributes {stable_mosaic.version = 11 : i64} {
  func.func @_lu4_kernel(%arg0: i32, %arg1: memref<1x1024x64xf32, #tpu.memory_space<vmem>>, %arg2: memref<1x64x16xf32, #tpu.memory_space<vmem>>, %arg3: memref<16x64xbf16, #tpu.memory_space<vmem>>, %arg4: memref<16x1xf32, #tpu.memory_space<vmem>>, %arg5: memref<16x1024xbf16, #tpu.memory_space<vmem>>, %arg6: memref<16x1xf32, #tpu.memory_space<vmem>>, %arg7: memref<16x64xbf16, #tpu.memory_space<vmem>>, %arg8: memref<9x16x32xbf16, #tpu.memory_space<vmem>>, %arg9: memref<16x1xf32, #tpu.memory_space<vmem>>, %arg10: memref<3x1x64xf32, #tpu.memory_space<vmem>>, %arg11: memref<1x16x64xbf16, #tpu.memory_space<vmem>>, %arg12: memref<32x320xbf16, #tpu.memory_space<vmem>>) attributes {dimension_semantics = [#tpu.dimension_semantics<parallel>], iteration_bounds = array<i64: 2>, scalar_prefetch = 0 : i64, scratch_operands = 1 : i64, tpu.core_type = #tpu.core_type<tc>, window_params = [{transform_indices = @transform_0, window_bounds = array<i64: 1, 1024, 64>}, {transform_indices = @transform_1, window_bounds = array<i64: 1, 64, 16>}, {pipeline_mode = #tpu.pipeline_mode<synchronous>, transform_indices = @transform_2, window_bounds = array<i64: 16, 64>}, {pipeline_mode = #tpu.pipeline_mode<synchronous>, transform_indices = @transform_3, window_bounds = array<i64: 16, 1>}, {pipeline_mode = #tpu.pipeline_mode<synchronous>, transform_indices = @transform_4, window_bounds = array<i64: 16, 1024>}, {pipeline_mode = #tpu.pipeline_mode<synchronous>, transform_indices = @transform_5, window_bounds = array<i64: 16, 1>}, {pipeline_mode = #tpu.pipeline_mode<synchronous>, transform_indices = @transform_6, window_bounds = array<i64: 16, 64>}, {pipeline_mode = #tpu.pipeline_mode<synchronous>, transform_indices = @transform_7, window_bounds = array<i64: 9, 16, 32>}, {pipeline_mode = #tpu.pipeline_mode<synchronous>, transform_indices = @transform_8, window_bounds = array<i64: 16, 1>}, {pipeline_mode = #tpu.pipeline_mode<synchronous>, transform_indices = @transform_9, window_bounds = array<i64: 3, 1, 64>}, {transform_indices = @transform_10, window_bounds = array<i64: 1, 16, 64>}]} {
    %c0 = arith.constant 0 : index
    %c0_0 = arith.constant 0 : index
    %c0_1 = arith.constant 0 : index
    %0 = vector.load %arg2[%c0, %c0_0, %c0_1] : memref<1x64x16xf32, #tpu.memory_space<vmem>>, vector<1x64x16xf32>
    %1 = vector.shape_cast %0 : vector<1x64x16xf32> to vector<64x16xf32>
    %2 = arith.truncf %1 : vector<64x16xf32> to vector<64x16xbf16>
    %c0_2 = arith.constant 0 : index
    %c0_3 = arith.constant 0 : index
    %3 = vector.load %arg3[%c0_2, %c0_3] : memref<16x64xbf16, #tpu.memory_space<vmem>>, vector<16x64xbf16>
    %cst = arith.constant dense<0.000000e+00> : vector<16x16xf32>
    %4 = tpu.matmul %3, %2, %cst {dimension_numbers = #tpu.dot_dimension_numbers<[1], [0], [0], [1], [0, 0, 1, 1], [], []>} : vector<16x64xbf16>, vector<64x16xbf16>, vector<16x16xf32> -> vector<16x16xf32>
    %c0_4 = arith.constant 0 : index
    %c0_5 = arith.constant 0 : index
    %5 = vector.load %arg4[%c0_4, %c0_5] : memref<16x1xf32, #tpu.memory_space<vmem>>, vector<16x1xf32>
    %6 = vector.broadcast %5 : vector<16x1xf32> to vector<16x16xf32>
    %7 = arith.addf %4, %6 : vector<16x16xf32>
    %cst_6 = arith.constant 0.000000e+00 : f32
    %8 = vector.broadcast %cst_6 : f32 to vector<16x16xf32>
    %9 = arith.maximumf %7, %8 : vector<16x16xf32>
    %c0_7 = arith.constant 0 : index
    %c0_8 = arith.constant 0 : index
    %c0_9 = arith.constant 0 : index
    %10 = vector.load %arg1[%c0_7, %c0_8, %c0_9] : memref<1x1024x64xf32, #tpu.memory_space<vmem>>, vector<1x1024x64xf32>
    %11 = vector.shape_cast %10 : vector<1x1024x64xf32> to vector<1024x64xf32>
    %12 = arith.truncf %11 : vector<1024x64xf32> to vector<1024x64xbf16>
    %c0_10 = arith.constant 0 : index
    %c0_11 = arith.constant 0 : index
    %13 = vector.load %arg5[%c0_10, %c0_11] : memref<16x1024xbf16, #tpu.memory_space<vmem>>, vector<16x1024xbf16>
    %cst_12 = arith.constant dense<0.000000e+00> : vector<16x64xf32>
    %14 = tpu.matmul %13, %12, %cst_12 {dimension_numbers = #tpu.dot_dimension_numbers<[1], [0], [0], [1], [0, 0, 1, 1], [], []>} : vector<16x1024xbf16>, vector<1024x64xbf16>, vector<16x64xf32> -> vector<16x64xf32>
    %c0_13 = arith.constant 0 : index
    %c0_14 = arith.constant 0 : index
    %15 = vector.load %arg6[%c0_13, %c0_14] : memref<16x1xf32, #tpu.memory_space<vmem>>, vector<16x1xf32>
    %16 = vector.broadcast %15 : vector<16x1xf32> to vector<16x64xf32>
    %17 = arith.addf %14, %16 : vector<16x64xf32>
    %cst_15 = arith.constant 0.000000e+00 : f32
    %18 = vector.broadcast %cst_15 : f32 to vector<16x64xf32>
    %19 = arith.maximumf %17, %18 : vector<16x64xf32>
    %20 = arith.truncf %9 : vector<16x16xf32> to vector<16x16xbf16>
    %c0_16 = arith.constant 0 : index
    %c0_17 = arith.constant 0 : index
    %21 = vector.load %arg7[%c0_16, %c0_17] : memref<16x64xbf16, #tpu.memory_space<vmem>>, vector<16x64xbf16>
    %cst_18 = arith.constant dense<0.000000e+00> : vector<16x64xf32>
    %22 = tpu.matmul %20, %21, %cst_18 {dimension_numbers = #tpu.dot_dimension_numbers<[1], [0], [0], [1], [0, 0, 1, 1], [], []>} : vector<16x16xbf16>, vector<16x64xbf16>, vector<16x64xf32> -> vector<16x64xf32>
    %cst_19 = arith.constant 0.000000e+00 : bf16
    %23 = vector.broadcast %cst_19 : bf16 to vector<32x320xbf16>
    %c0_20 = arith.constant 0 : index
    %c0_21 = arith.constant 0 : index
    %24 = vector.load %arg12[%c0_20, %c0_21] : memref<32x320xbf16, #tpu.memory_space<vmem>>, vector<32x320xbf16>
    tpu.vector_store %arg12[%c0_20, %c0_21], %23 {strides = array<i32>} : memref<32x320xbf16, #tpu.memory_space<vmem>>, vector<32x320xbf16>,
    %25 = arith.truncf %19 : vector<16x64xf32> to vector<16x64xbf16>
    %c0_22 = arith.constant 0 : index
    %c128 = arith.constant 128 : index
    %26 = vector.load %arg12[%c0_22, %c128] : memref<32x320xbf16, #tpu.memory_space<vmem>>, vector<16x64xbf16>
    tpu.vector_store %arg12[%c0_22, %c128], %25 {strides = array<i32>} : memref<32x320xbf16, #tpu.memory_space<vmem>>, vector<16x64xbf16>,
    %27 = arith.truncf %22 : vector<16x64xf32> to vector<16x64xbf16>
    %c16 = arith.constant 16 : index
    %c128_23 = arith.constant 128 : index
    %28 = vector.load %arg12[%c16, %c128_23] : memref<32x320xbf16, #tpu.memory_space<vmem>>, vector<16x64xbf16>
    tpu.vector_store %arg12[%c16, %c128_23], %27 {strides = array<i32>} : memref<32x320xbf16, #tpu.memory_space<vmem>>, vector<16x64xbf16>,
    %cst_24 = arith.constant 0.000000e+00 : f32
    %29 = vector.broadcast %cst_24 : f32 to vector<16x64xf32>
    %c0_25 = arith.constant 0 : index
    %c119 = arith.constant 119 : index
    %30 = vector.load %arg12[%c0_25, %c119] : memref<32x320xbf16, #tpu.memory_space<vmem>>, vector<32x64xbf16>
    %c0_26 = arith.constant 0 : index
    %c0_27 = arith.constant 0 : index
    %c0_28 = arith.constant 0 : index
    %31 = vector.load %arg8[%c0_26, %c0_27, %c0_28] : memref<9x16x32xbf16, #tpu.memory_space<vmem>>, vector<1x16x32xbf16>
    %32 = vector.shape_cast %31 : vector<1x16x32xbf16> to vector<16x32xbf16>
    %cst_29 = arith.constant dense<0.000000e+00> : vector<16x64xf32>
    %33 = tpu.matmul %32, %30, %cst_29 {dimension_numbers = #tpu.dot_dimension_numbers<[1], [0], [0], [1], [0, 0, 1, 1], [], []>} : vector<16x32xbf16>, vector<32x64xbf16>, vector<16x64xf32> -> vector<16x64xf32>
    %c0_30 = arith.constant 0 : index
    %c0_31 = arith.constant 0 : index
    %c0_32 = arith.constant 0 : index
    %34 = vector.load %arg10[%c0_30, %c0_31, %c0_32] : memref<3x1x64xf32, #tpu.memory_space<vmem>>, vector<1x1x64xf32>
    %35 = vector.shape_cast %34 : vector<1x1x64xf32> to vector<1x64xf32>
    %36 = vector.broadcast %35 : vector<1x64xf32> to vector<16x64xf32>
    %37 = arith.mulf %33, %36 : vector<16x64xf32>
    %38 = arith.addf %29, %37 : vector<16x64xf32>
    %c0_33 = arith.constant 0 : index
    %c120 = arith.constant 120 : index
    %39 = vector.load %arg12[%c0_33, %c120] : memref<32x320xbf16, #tpu.memory_space<vmem>>, vector<32x64xbf16>
    %c1 = arith.constant 1 : index
    %c0_34 = arith.constant 0 : index
    %c0_35 = arith.constant 0 : index
    %40 = vector.load %arg8[%c1, %c0_34, %c0_35] : memref<9x16x32xbf16, #tpu.memory_space<vmem>>, vector<1x16x32xbf16>
    %41 = vector.shape_cast %40 : vector<1x16x32xbf16> to vector<16x32xbf16>
    %cst_36 = arith.constant dense<0.000000e+00> : vector<16x64xf32>
    %42 = tpu.matmul %41, %39, %cst_36 {dimension_numbers = #tpu.dot_dimension_numbers<[1], [0], [0], [1], [0, 0, 1, 1], [], []>} : vector<16x32xbf16>, vector<32x64xbf16>, vector<16x64xf32> -> vector<16x64xf32>
    %43 = arith.addf %38, %42 : vector<16x64xf32>
    %c0_37 = arith.constant 0 : index
    %c121 = arith.constant 121 : index
    %44 = vector.load %arg12[%c0_37, %c121] : memref<32x320xbf16, #tpu.memory_space<vmem>>, vector<32x64xbf16>
    %c2 = arith.constant 2 : index
    %c0_38 = arith.constant 0 : index
    %c0_39 = arith.constant 0 : index
    %45 = vector.load %arg8[%c2, %c0_38, %c0_39] : memref<9x16x32xbf16, #tpu.memory_space<vmem>>, vector<1x16x32xbf16>
    %46 = vector.shape_cast %45 : vector<1x16x32xbf16> to vector<16x32xbf16>
    %cst_40 = arith.constant dense<0.000000e+00> : vector<16x64xf32>
    %47 = tpu.matmul %46, %44, %cst_40 {dimension_numbers = #tpu.dot_dimension_numbers<[1], [0], [0], [1], [0, 0, 1, 1], [], []>} : vector<16x32xbf16>, vector<32x64xbf16>, vector<16x64xf32> -> vector<16x64xf32>
    %c2_41 = arith.constant 2 : index
    %c0_42 = arith.constant 0 : index
    %c0_43 = arith.constant 0 : index
    %48 = vector.load %arg10[%c2_41, %c0_42, %c0_43] : memref<3x1x64xf32, #tpu.memory_space<vmem>>, vector<1x1x64xf32>
    %49 = vector.shape_cast %48 : vector<1x1x64xf32> to vector<1x64xf32>
    %50 = vector.broadcast %49 : vector<1x64xf32> to vector<16x64xf32>
    %51 = arith.mulf %47, %50 : vector<16x64xf32>
    %52 = arith.addf %43, %51 : vector<16x64xf32>
    %c0_44 = arith.constant 0 : index
    %c127 = arith.constant 127 : index
    %53 = vector.load %arg12[%c0_44, %c127] : memref<32x320xbf16, #tpu.memory_space<vmem>>, vector<32x64xbf16>
    %c3 = arith.constant 3 : index
    %c0_45 = arith.constant 0 : index
    %c0_46 = arith.constant 0 : index
    %54 = vector.load %arg8[%c3, %c0_45, %c0_46] : memref<9x16x32xbf16, #tpu.memory_space<vmem>>, vector<1x16x32xbf16>
    %55 = vector.shape_cast %54 : vector<1x16x32xbf16> to vector<16x32xbf16>
    %cst_47 = arith.constant dense<0.000000e+00> : vector<16x64xf32>
    %56 = tpu.matmul %55, %53, %cst_47 {dimension_numbers = #tpu.dot_dimension_numbers<[1], [0], [0], [1], [0, 0, 1, 1], [], []>} : vector<16x32xbf16>, vector<32x64xbf16>, vector<16x64xf32> -> vector<16x64xf32>
    %c0_48 = arith.constant 0 : index
    %c0_49 = arith.constant 0 : index
    %c0_50 = arith.constant 0 : index
    %57 = vector.load %arg10[%c0_48, %c0_49, %c0_50] : memref<3x1x64xf32, #tpu.memory_space<vmem>>, vector<1x1x64xf32>
    %58 = vector.shape_cast %57 : vector<1x1x64xf32> to vector<1x64xf32>
    %59 = vector.broadcast %58 : vector<1x64xf32> to vector<16x64xf32>
    %60 = arith.mulf %56, %59 : vector<16x64xf32>
    %61 = arith.addf %52, %60 : vector<16x64xf32>
    %c0_51 = arith.constant 0 : index
    %c128_52 = arith.constant 128 : index
    %62 = vector.load %arg12[%c0_51, %c128_52] : memref<32x320xbf16, #tpu.memory_space<vmem>>, vector<32x64xbf16>
    %c4 = arith.constant 4 : index
    %c0_53 = arith.constant 0 : index
    %c0_54 = arith.constant 0 : index
    %63 = vector.load %arg8[%c4, %c0_53, %c0_54] : memref<9x16x32xbf16, #tpu.memory_space<vmem>>, vector<1x16x32xbf16>
    %64 = vector.shape_cast %63 : vector<1x16x32xbf16> to vector<16x32xbf16>
    %cst_55 = arith.constant dense<0.000000e+00> : vector<16x64xf32>
    %65 = tpu.matmul %64, %62, %cst_55 {dimension_numbers = #tpu.dot_dimension_numbers<[1], [0], [0], [1], [0, 0, 1, 1], [], []>} : vector<16x32xbf16>, vector<32x64xbf16>, vector<16x64xf32> -> vector<16x64xf32>
    %66 = arith.addf %61, %65 : vector<16x64xf32>
    %c0_56 = arith.constant 0 : index
    %c129 = arith.constant 129 : index
    %67 = vector.load %arg12[%c0_56, %c129] : memref<32x320xbf16, #tpu.memory_space<vmem>>, vector<32x64xbf16>
    %c5 = arith.constant 5 : index
    %c0_57 = arith.constant 0 : index
    %c0_58 = arith.constant 0 : index
    %68 = vector.load %arg8[%c5, %c0_57, %c0_58] : memref<9x16x32xbf16, #tpu.memory_space<vmem>>, vector<1x16x32xbf16>
    %69 = vector.shape_cast %68 : vector<1x16x32xbf16> to vector<16x32xbf16>
    %cst_59 = arith.constant dense<0.000000e+00> : vector<16x64xf32>
    %70 = tpu.matmul %69, %67, %cst_59 {dimension_numbers = #tpu.dot_dimension_numbers<[1], [0], [0], [1], [0, 0, 1, 1], [], []>} : vector<16x32xbf16>, vector<32x64xbf16>, vector<16x64xf32> -> vector<16x64xf32>
    %c2_60 = arith.constant 2 : index
    %c0_61 = arith.constant 0 : index
    %c0_62 = arith.constant 0 : index
    %71 = vector.load %arg10[%c2_60, %c0_61, %c0_62] : memref<3x1x64xf32, #tpu.memory_space<vmem>>, vector<1x1x64xf32>
    %72 = vector.shape_cast %71 : vector<1x1x64xf32> to vector<1x64xf32>
    %73 = vector.broadcast %72 : vector<1x64xf32> to vector<16x64xf32>
    %74 = arith.mulf %70, %73 : vector<16x64xf32>
    %75 = arith.addf %66, %74 : vector<16x64xf32>
    %c0_63 = arith.constant 0 : index
    %c135 = arith.constant 135 : index
    %76 = vector.load %arg12[%c0_63, %c135] : memref<32x320xbf16, #tpu.memory_space<vmem>>, vector<32x64xbf16>
    %c6 = arith.constant 6 : index
    %c0_64 = arith.constant 0 : index
    %c0_65 = arith.constant 0 : index
    %77 = vector.load %arg8[%c6, %c0_64, %c0_65] : memref<9x16x32xbf16, #tpu.memory_space<vmem>>, vector<1x16x32xbf16>
    %78 = vector.shape_cast %77 : vector<1x16x32xbf16> to vector<16x32xbf16>
    %cst_66 = arith.constant dense<0.000000e+00> : vector<16x64xf32>
    %79 = tpu.matmul %78, %76, %cst_66 {dimension_numbers = #tpu.dot_dimension_numbers<[1], [0], [0], [1], [0, 0, 1, 1], [], []>} : vector<16x32xbf16>, vector<32x64xbf16>, vector<16x64xf32> -> vector<16x64xf32>
    %c0_67 = arith.constant 0 : index
    %c0_68 = arith.constant 0 : index
    %c0_69 = arith.constant 0 : index
    %80 = vector.load %arg10[%c0_67, %c0_68, %c0_69] : memref<3x1x64xf32, #tpu.memory_space<vmem>>, vector<1x1x64xf32>
    %81 = vector.shape_cast %80 : vector<1x1x64xf32> to vector<1x64xf32>
    %82 = vector.broadcast %81 : vector<1x64xf32> to vector<16x64xf32>
    %83 = arith.mulf %79, %82 : vector<16x64xf32>
    %84 = arith.addf %75, %83 : vector<16x64xf32>
    %c0_70 = arith.constant 0 : index
    %c136 = arith.constant 136 : index
    %85 = vector.load %arg12[%c0_70, %c136] : memref<32x320xbf16, #tpu.memory_space<vmem>>, vector<32x64xbf16>
    %c7 = arith.constant 7 : index
    %c0_71 = arith.constant 0 : index
    %c0_72 = arith.constant 0 : index
    %86 = vector.load %arg8[%c7, %c0_71, %c0_72] : memref<9x16x32xbf16, #tpu.memory_space<vmem>>, vector<1x16x32xbf16>
    %87 = vector.shape_cast %86 : vector<1x16x32xbf16> to vector<16x32xbf16>
    %cst_73 = arith.constant dense<0.000000e+00> : vector<16x64xf32>
    %88 = tpu.matmul %87, %85, %cst_73 {dimension_numbers = #tpu.dot_dimension_numbers<[1], [0], [0], [1], [0, 0, 1, 1], [], []>} : vector<16x32xbf16>, vector<32x64xbf16>, vector<16x64xf32> -> vector<16x64xf32>
    %89 = arith.addf %84, %88 : vector<16x64xf32>
    %c0_74 = arith.constant 0 : index
    %c137 = arith.constant 137 : index
    %90 = vector.load %arg12[%c0_74, %c137] : memref<32x320xbf16, #tpu.memory_space<vmem>>, vector<32x64xbf16>
    %c8 = arith.constant 8 : index
    %c0_75 = arith.constant 0 : index
    %c0_76 = arith.constant 0 : index
    %91 = vector.load %arg8[%c8, %c0_75, %c0_76] : memref<9x16x32xbf16, #tpu.memory_space<vmem>>, vector<1x16x32xbf16>
    %92 = vector.shape_cast %91 : vector<1x16x32xbf16> to vector<16x32xbf16>
    %cst_77 = arith.constant dense<0.000000e+00> : vector<16x64xf32>
    %93 = tpu.matmul %92, %90, %cst_77 {dimension_numbers = #tpu.dot_dimension_numbers<[1], [0], [0], [1], [0, 0, 1, 1], [], []>} : vector<16x32xbf16>, vector<32x64xbf16>, vector<16x64xf32> -> vector<16x64xf32>
    %c2_78 = arith.constant 2 : index
    %c0_79 = arith.constant 0 : index
    %c0_80 = arith.constant 0 : index
    %94 = vector.load %arg10[%c2_78, %c0_79, %c0_80] : memref<3x1x64xf32, #tpu.memory_space<vmem>>, vector<1x1x64xf32>
    %95 = vector.shape_cast %94 : vector<1x1x64xf32> to vector<1x64xf32>
    %96 = vector.broadcast %95 : vector<1x64xf32> to vector<16x64xf32>
    %97 = arith.mulf %93, %96 : vector<16x64xf32>
    %98 = arith.addf %89, %97 : vector<16x64xf32>
    %c0_81 = arith.constant 0 : index
    %c0_82 = arith.constant 0 : index
    %99 = vector.load %arg9[%c0_81, %c0_82] : memref<16x1xf32, #tpu.memory_space<vmem>>, vector<16x1xf32>
    %100 = vector.broadcast %99 : vector<16x1xf32> to vector<16x64xf32>
    %101 = arith.addf %98, %100 : vector<16x64xf32>
    %cst_83 = arith.constant 0.000000e+00 : f32
    %102 = vector.broadcast %cst_83 : f32 to vector<16x64xf32>
    %103 = arith.maximumf %101, %102 : vector<16x64xf32>
    %104 = arith.truncf %103 : vector<16x64xf32> to vector<16x64xbf16>
    %c0_84 = arith.constant 0 : index
    %c0_85 = arith.constant 0 : index
    %c0_86 = arith.constant 0 : index
    %105 = vector.load %arg11[%c0_84, %c0_85, %c0_86] : memref<1x16x64xbf16, #tpu.memory_space<vmem>>, vector<1x16x64xbf16>
    %106 = vector.shape_cast %105 : vector<1x16x64xbf16> to vector<16x64xbf16>
    %107 = vector.shape_cast %104 : vector<16x64xbf16> to vector<1x16x64xbf16>
    tpu.vector_store %arg11[%c0_84, %c0_85, %c0_86], %107 {strides = array<i32>} : memref<1x16x64xbf16, #tpu.memory_space<vmem>>, vector<1x16x64xbf16>,
    return
  }
  func.func @transform_0(%arg0: i32) -> (i32, i32, i32) {
    %c0_i32 = arith.constant 0 : i32
    %c0_i32_0 = arith.constant 0 : i32
    %c0_i32_1 = arith.constant 0 : i32
    return %arg0, %c0_i32, %c0_i32_0 : i32, i32, i32
  }
  func.func @transform_1(%arg0: i32) -> (i32, i32, i32) {
    %c0_i32 = arith.constant 0 : i32
    %c0_i32_0 = arith.constant 0 : i32
    %c0_i32_1 = arith.constant 0 : i32
    return %arg0, %c0_i32, %c0_i32_0 : i32, i32, i32
  }
  func.func @transform_2(%arg0: i32) -> (i32, i32) {
    %c0_i32 = arith.constant 0 : i32
    %c0_i32_0 = arith.constant 0 : i32
    %c0_i32_1 = arith.constant 0 : i32
    return %c0_i32, %c0_i32_0 : i32, i32
  }
  func.func @transform_3(%arg0: i32) -> (i32, i32) {
    %c0_i32 = arith.constant 0 : i32
    %c0_i32_0 = arith.constant 0 : i32
    %c0_i32_1 = arith.constant 0 : i32
    return %c0_i32, %c0_i32_0 : i32, i32
  }
  func.func @transform_4(%arg0: i32) -> (i32, i32) {
    %c0_i32 = arith.constant 0 : i32
    %c0_i32_0 = arith.constant 0 : i32
    %c0_i32_1 = arith.constant 0 : i32
    return %c0_i32, %c0_i32_0 : i32, i32
  }
  func.func @transform_5(%arg0: i32) -> (i32, i32) {
    %c0_i32 = arith.constant 0 : i32
    %c0_i32_0 = arith.constant 0 : i32
    %c0_i32_1 = arith.constant 0 : i32
    return %c0_i32, %c0_i32_0 : i32, i32
  }
  func.func @transform_6(%arg0: i32) -> (i32, i32) {
    %c0_i32 = arith.constant 0 : i32
    %c0_i32_0 = arith.constant 0 : i32
    %c0_i32_1 = arith.constant 0 : i32
    return %c0_i32, %c0_i32_0 : i32, i32
  }
  func.func @transform_7(%arg0: i32) -> (i32, i32, i32) {
    %c0_i32 = arith.constant 0 : i32
    %c0_i32_0 = arith.constant 0 : i32
    %c0_i32_1 = arith.constant 0 : i32
    %c0_i32_2 = arith.constant 0 : i32
    return %c0_i32, %c0_i32_0, %c0_i32_1 : i32, i32, i32
  }
  func.func @transform_8(%arg0: i32) -> (i32, i32) {
    %c0_i32 = arith.constant 0 : i32
    %c0_i32_0 = arith.constant 0 : i32
    %c0_i32_1 = arith.constant 0 : i32
    return %c0_i32, %c0_i32_0 : i32, i32
  }
  func.func @transform_9(%arg0: i32) -> (i32, i32, i32) {
    %c0_i32 = arith.constant 0 : i32
    %c0_i32_0 = arith.constant 0 : i32
    %c0_i32_1 = arith.constant 0 : i32
    %c0_i32_2 = arith.constant 0 : i32
    return %c0_i32, %c0_i32_0, %c0_i32_1 : i32, i32, i32
  }
  func.func @transform_10(%arg0: i32) -> (i32, i32, i32) {
    %c0_i32 = arith.constant 0 : i32
    %c0_i32_0 = arith.constant 0 : i32
    %c0_i32_1 = arith.constant 0 : i32
    return %arg0, %c0_i32, %c0_i32_0 : i32, i32, i32
  }
}

module attributes {stable_mosaic.version = 11 : i64} {
  func.func @_lu3_conv6_kernel(%arg0: i32, %arg1: memref<1x512x256xf32, #tpu.memory_space<vmem>>, %arg2: memref<1x16x64xbf16, #tpu.memory_space<vmem>>, %arg3: memref<16x512xbf16, #tpu.memory_space<vmem>>, %arg4: memref<16x1xf32, #tpu.memory_space<vmem>>, %arg5: memref<64x256xbf16, #tpu.memory_space<vmem>>, %arg6: memref<9x16x32xbf16, #tpu.memory_space<vmem>>, %arg7: memref<16x1xf32, #tpu.memory_space<vmem>>, %arg8: memref<8x16xbf16, #tpu.memory_space<vmem>>, %arg9: memref<8x1xf32, #tpu.memory_space<vmem>>, %arg10: memref<3x1x256xf32, #tpu.memory_space<vmem>>, %arg11: memref<1x8x256xf32, #tpu.memory_space<vmem>>, %arg12: memref<32x512xbf16, #tpu.memory_space<vmem>>) attributes {dimension_semantics = [#tpu.dimension_semantics<parallel>], iteration_bounds = array<i64: 2>, scalar_prefetch = 0 : i64, scratch_operands = 1 : i64, tpu.core_type = #tpu.core_type<tc>, window_params = [{transform_indices = @transform_0, window_bounds = array<i64: 1, 512, 256>}, {transform_indices = @transform_1, window_bounds = array<i64: 1, 16, 64>}, {pipeline_mode = #tpu.pipeline_mode<synchronous>, transform_indices = @transform_2, window_bounds = array<i64: 16, 512>}, {pipeline_mode = #tpu.pipeline_mode<synchronous>, transform_indices = @transform_3, window_bounds = array<i64: 16, 1>}, {pipeline_mode = #tpu.pipeline_mode<synchronous>, transform_indices = @transform_4, window_bounds = array<i64: 64, 256>}, {pipeline_mode = #tpu.pipeline_mode<synchronous>, transform_indices = @transform_5, window_bounds = array<i64: 9, 16, 32>}, {pipeline_mode = #tpu.pipeline_mode<synchronous>, transform_indices = @transform_6, window_bounds = array<i64: 16, 1>}, {pipeline_mode = #tpu.pipeline_mode<synchronous>, transform_indices = @transform_7, window_bounds = array<i64: 8, 16>}, {pipeline_mode = #tpu.pipeline_mode<synchronous>, transform_indices = @transform_8, window_bounds = array<i64: 8, 1>}, {pipeline_mode = #tpu.pipeline_mode<synchronous>, transform_indices = @transform_9, window_bounds = array<i64: 3, 1, 256>}, {transform_indices = @transform_10, window_bounds = array<i64: 1, 8, 256>}]} {
    %c0 = arith.constant 0 : index
    %c0_0 = arith.constant 0 : index
    %c0_1 = arith.constant 0 : index
    %0 = vector.load %arg1[%c0, %c0_0, %c0_1] : memref<1x512x256xf32, #tpu.memory_space<vmem>>, vector<1x512x256xf32>
    %1 = vector.shape_cast %0 : vector<1x512x256xf32> to vector<512x256xf32>
    %2 = arith.truncf %1 : vector<512x256xf32> to vector<512x256xbf16>
    %c0_2 = arith.constant 0 : index
    %c0_3 = arith.constant 0 : index
    %3 = vector.load %arg3[%c0_2, %c0_3] : memref<16x512xbf16, #tpu.memory_space<vmem>>, vector<16x512xbf16>
    %cst = arith.constant dense<0.000000e+00> : vector<16x256xf32>
    %4 = tpu.matmul %3, %2, %cst {dimension_numbers = #tpu.dot_dimension_numbers<[1], [0], [0], [1], [0, 0, 1, 1], [], []>} : vector<16x512xbf16>, vector<512x256xbf16>, vector<16x256xf32> -> vector<16x256xf32>
    %c0_4 = arith.constant 0 : index
    %c0_5 = arith.constant 0 : index
    %5 = vector.load %arg4[%c0_4, %c0_5] : memref<16x1xf32, #tpu.memory_space<vmem>>, vector<16x1xf32>
    %6 = vector.broadcast %5 : vector<16x1xf32> to vector<16x256xf32>
    %7 = arith.addf %4, %6 : vector<16x256xf32>
    %cst_6 = arith.constant 0.000000e+00 : f32
    %8 = vector.broadcast %cst_6 : f32 to vector<16x256xf32>
    %9 = arith.maximumf %7, %8 : vector<16x256xf32>
    %c0_7 = arith.constant 0 : index
    %c0_8 = arith.constant 0 : index
    %c0_9 = arith.constant 0 : index
    %10 = vector.load %arg2[%c0_7, %c0_8, %c0_9] : memref<1x16x64xbf16, #tpu.memory_space<vmem>>, vector<1x16x64xbf16>
    %11 = vector.shape_cast %10 : vector<1x16x64xbf16> to vector<16x64xbf16>
    %c0_10 = arith.constant 0 : index
    %c0_11 = arith.constant 0 : index
    %12 = vector.load %arg5[%c0_10, %c0_11] : memref<64x256xbf16, #tpu.memory_space<vmem>>, vector<64x256xbf16>
    %cst_12 = arith.constant dense<0.000000e+00> : vector<16x256xf32>
    %13 = tpu.matmul %11, %12, %cst_12 {dimension_numbers = #tpu.dot_dimension_numbers<[1], [0], [0], [1], [0, 0, 1, 1], [], []>} : vector<16x64xbf16>, vector<64x256xbf16>, vector<16x256xf32> -> vector<16x256xf32>
    %cst_13 = arith.constant 0.000000e+00 : bf16
    %14 = vector.broadcast %cst_13 : bf16 to vector<32x512xbf16>
    %c0_14 = arith.constant 0 : index
    %c0_15 = arith.constant 0 : index
    %15 = vector.load %arg12[%c0_14, %c0_15] : memref<32x512xbf16, #tpu.memory_space<vmem>>, vector<32x512xbf16>
    tpu.vector_store %arg12[%c0_14, %c0_15], %14 {strides = array<i32>} : memref<32x512xbf16, #tpu.memory_space<vmem>>, vector<32x512xbf16>,
    %16 = arith.truncf %9 : vector<16x256xf32> to vector<16x256xbf16>
    %c0_16 = arith.constant 0 : index
    %c128 = arith.constant 128 : index
    %17 = vector.load %arg12[%c0_16, %c128] : memref<32x512xbf16, #tpu.memory_space<vmem>>, vector<16x256xbf16>
    tpu.vector_store %arg12[%c0_16, %c128], %16 {strides = array<i32>} : memref<32x512xbf16, #tpu.memory_space<vmem>>, vector<16x256xbf16>,
    %18 = arith.truncf %13 : vector<16x256xf32> to vector<16x256xbf16>
    %c16 = arith.constant 16 : index
    %c128_17 = arith.constant 128 : index
    %19 = vector.load %arg12[%c16, %c128_17] : memref<32x512xbf16, #tpu.memory_space<vmem>>, vector<16x256xbf16>
    tpu.vector_store %arg12[%c16, %c128_17], %18 {strides = array<i32>} : memref<32x512xbf16, #tpu.memory_space<vmem>>, vector<16x256xbf16>,
    %cst_18 = arith.constant 0.000000e+00 : f32
    %20 = vector.broadcast %cst_18 : f32 to vector<16x256xf32>
    %c0_19 = arith.constant 0 : index
    %c111 = arith.constant 111 : index
    %21 = vector.load %arg12[%c0_19, %c111] : memref<32x512xbf16, #tpu.memory_space<vmem>>, vector<32x256xbf16>
    %c0_20 = arith.constant 0 : index
    %c0_21 = arith.constant 0 : index
    %c0_22 = arith.constant 0 : index
    %22 = vector.load %arg6[%c0_20, %c0_21, %c0_22] : memref<9x16x32xbf16, #tpu.memory_space<vmem>>, vector<1x16x32xbf16>
    %23 = vector.shape_cast %22 : vector<1x16x32xbf16> to vector<16x32xbf16>
    %cst_23 = arith.constant dense<0.000000e+00> : vector<16x256xf32>
    %24 = tpu.matmul %23, %21, %cst_23 {dimension_numbers = #tpu.dot_dimension_numbers<[1], [0], [0], [1], [0, 0, 1, 1], [], []>} : vector<16x32xbf16>, vector<32x256xbf16>, vector<16x256xf32> -> vector<16x256xf32>
    %c0_24 = arith.constant 0 : index
    %c0_25 = arith.constant 0 : index
    %c0_26 = arith.constant 0 : index
    %25 = vector.load %arg10[%c0_24, %c0_25, %c0_26] : memref<3x1x256xf32, #tpu.memory_space<vmem>>, vector<1x1x256xf32>
    %26 = vector.shape_cast %25 : vector<1x1x256xf32> to vector<1x256xf32>
    %27 = vector.broadcast %26 : vector<1x256xf32> to vector<16x256xf32>
    %28 = arith.mulf %24, %27 : vector<16x256xf32>
    %29 = arith.addf %20, %28 : vector<16x256xf32>
    %c0_27 = arith.constant 0 : index
    %c112 = arith.constant 112 : index
    %30 = vector.load %arg12[%c0_27, %c112] : memref<32x512xbf16, #tpu.memory_space<vmem>>, vector<32x256xbf16>
    %c1 = arith.constant 1 : index
    %c0_28 = arith.constant 0 : index
    %c0_29 = arith.constant 0 : index
    %31 = vector.load %arg6[%c1, %c0_28, %c0_29] : memref<9x16x32xbf16, #tpu.memory_space<vmem>>, vector<1x16x32xbf16>
    %32 = vector.shape_cast %31 : vector<1x16x32xbf16> to vector<16x32xbf16>
    %cst_30 = arith.constant dense<0.000000e+00> : vector<16x256xf32>
    %33 = tpu.matmul %32, %30, %cst_30 {dimension_numbers = #tpu.dot_dimension_numbers<[1], [0], [0], [1], [0, 0, 1, 1], [], []>} : vector<16x32xbf16>, vector<32x256xbf16>, vector<16x256xf32> -> vector<16x256xf32>
    %34 = arith.addf %29, %33 : vector<16x256xf32>
    %c0_31 = arith.constant 0 : index
    %c113 = arith.constant 113 : index
    %35 = vector.load %arg12[%c0_31, %c113] : memref<32x512xbf16, #tpu.memory_space<vmem>>, vector<32x256xbf16>
    %c2 = arith.constant 2 : index
    %c0_32 = arith.constant 0 : index
    %c0_33 = arith.constant 0 : index
    %36 = vector.load %arg6[%c2, %c0_32, %c0_33] : memref<9x16x32xbf16, #tpu.memory_space<vmem>>, vector<1x16x32xbf16>
    %37 = vector.shape_cast %36 : vector<1x16x32xbf16> to vector<16x32xbf16>
    %cst_34 = arith.constant dense<0.000000e+00> : vector<16x256xf32>
    %38 = tpu.matmul %37, %35, %cst_34 {dimension_numbers = #tpu.dot_dimension_numbers<[1], [0], [0], [1], [0, 0, 1, 1], [], []>} : vector<16x32xbf16>, vector<32x256xbf16>, vector<16x256xf32> -> vector<16x256xf32>
    %c2_35 = arith.constant 2 : index
    %c0_36 = arith.constant 0 : index
    %c0_37 = arith.constant 0 : index
    %39 = vector.load %arg10[%c2_35, %c0_36, %c0_37] : memref<3x1x256xf32, #tpu.memory_space<vmem>>, vector<1x1x256xf32>
    %40 = vector.shape_cast %39 : vector<1x1x256xf32> to vector<1x256xf32>
    %41 = vector.broadcast %40 : vector<1x256xf32> to vector<16x256xf32>
    %42 = arith.mulf %38, %41 : vector<16x256xf32>
    %43 = arith.addf %34, %42 : vector<16x256xf32>
    %c0_38 = arith.constant 0 : index
    %c127 = arith.constant 127 : index
    %44 = vector.load %arg12[%c0_38, %c127] : memref<32x512xbf16, #tpu.memory_space<vmem>>, vector<32x256xbf16>
    %c3 = arith.constant 3 : index
    %c0_39 = arith.constant 0 : index
    %c0_40 = arith.constant 0 : index
    %45 = vector.load %arg6[%c3, %c0_39, %c0_40] : memref<9x16x32xbf16, #tpu.memory_space<vmem>>, vector<1x16x32xbf16>
    %46 = vector.shape_cast %45 : vector<1x16x32xbf16> to vector<16x32xbf16>
    %cst_41 = arith.constant dense<0.000000e+00> : vector<16x256xf32>
    %47 = tpu.matmul %46, %44, %cst_41 {dimension_numbers = #tpu.dot_dimension_numbers<[1], [0], [0], [1], [0, 0, 1, 1], [], []>} : vector<16x32xbf16>, vector<32x256xbf16>, vector<16x256xf32> -> vector<16x256xf32>
    %c0_42 = arith.constant 0 : index
    %c0_43 = arith.constant 0 : index
    %c0_44 = arith.constant 0 : index
    %48 = vector.load %arg10[%c0_42, %c0_43, %c0_44] : memref<3x1x256xf32, #tpu.memory_space<vmem>>, vector<1x1x256xf32>
    %49 = vector.shape_cast %48 : vector<1x1x256xf32> to vector<1x256xf32>
    %50 = vector.broadcast %49 : vector<1x256xf32> to vector<16x256xf32>
    %51 = arith.mulf %47, %50 : vector<16x256xf32>
    %52 = arith.addf %43, %51 : vector<16x256xf32>
    %c0_45 = arith.constant 0 : index
    %c128_46 = arith.constant 128 : index
    %53 = vector.load %arg12[%c0_45, %c128_46] : memref<32x512xbf16, #tpu.memory_space<vmem>>, vector<32x256xbf16>
    %c4 = arith.constant 4 : index
    %c0_47 = arith.constant 0 : index
    %c0_48 = arith.constant 0 : index
    %54 = vector.load %arg6[%c4, %c0_47, %c0_48] : memref<9x16x32xbf16, #tpu.memory_space<vmem>>, vector<1x16x32xbf16>
    %55 = vector.shape_cast %54 : vector<1x16x32xbf16> to vector<16x32xbf16>
    %cst_49 = arith.constant dense<0.000000e+00> : vector<16x256xf32>
    %56 = tpu.matmul %55, %53, %cst_49 {dimension_numbers = #tpu.dot_dimension_numbers<[1], [0], [0], [1], [0, 0, 1, 1], [], []>} : vector<16x32xbf16>, vector<32x256xbf16>, vector<16x256xf32> -> vector<16x256xf32>
    %57 = arith.addf %52, %56 : vector<16x256xf32>
    %c0_50 = arith.constant 0 : index
    %c129 = arith.constant 129 : index
    %58 = vector.load %arg12[%c0_50, %c129] : memref<32x512xbf16, #tpu.memory_space<vmem>>, vector<32x256xbf16>
    %c5 = arith.constant 5 : index
    %c0_51 = arith.constant 0 : index
    %c0_52 = arith.constant 0 : index
    %59 = vector.load %arg6[%c5, %c0_51, %c0_52] : memref<9x16x32xbf16, #tpu.memory_space<vmem>>, vector<1x16x32xbf16>
    %60 = vector.shape_cast %59 : vector<1x16x32xbf16> to vector<16x32xbf16>
    %cst_53 = arith.constant dense<0.000000e+00> : vector<16x256xf32>
    %61 = tpu.matmul %60, %58, %cst_53 {dimension_numbers = #tpu.dot_dimension_numbers<[1], [0], [0], [1], [0, 0, 1, 1], [], []>} : vector<16x32xbf16>, vector<32x256xbf16>, vector<16x256xf32> -> vector<16x256xf32>
    %c2_54 = arith.constant 2 : index
    %c0_55 = arith.constant 0 : index
    %c0_56 = arith.constant 0 : index
    %62 = vector.load %arg10[%c2_54, %c0_55, %c0_56] : memref<3x1x256xf32, #tpu.memory_space<vmem>>, vector<1x1x256xf32>
    %63 = vector.shape_cast %62 : vector<1x1x256xf32> to vector<1x256xf32>
    %64 = vector.broadcast %63 : vector<1x256xf32> to vector<16x256xf32>
    %65 = arith.mulf %61, %64 : vector<16x256xf32>
    %66 = arith.addf %57, %65 : vector<16x256xf32>
    %c0_57 = arith.constant 0 : index
    %c143 = arith.constant 143 : index
    %67 = vector.load %arg12[%c0_57, %c143] : memref<32x512xbf16, #tpu.memory_space<vmem>>, vector<32x256xbf16>
    %c6 = arith.constant 6 : index
    %c0_58 = arith.constant 0 : index
    %c0_59 = arith.constant 0 : index
    %68 = vector.load %arg6[%c6, %c0_58, %c0_59] : memref<9x16x32xbf16, #tpu.memory_space<vmem>>, vector<1x16x32xbf16>
    %69 = vector.shape_cast %68 : vector<1x16x32xbf16> to vector<16x32xbf16>
    %cst_60 = arith.constant dense<0.000000e+00> : vector<16x256xf32>
    %70 = tpu.matmul %69, %67, %cst_60 {dimension_numbers = #tpu.dot_dimension_numbers<[1], [0], [0], [1], [0, 0, 1, 1], [], []>} : vector<16x32xbf16>, vector<32x256xbf16>, vector<16x256xf32> -> vector<16x256xf32>
    %c0_61 = arith.constant 0 : index
    %c0_62 = arith.constant 0 : index
    %c0_63 = arith.constant 0 : index
    %71 = vector.load %arg10[%c0_61, %c0_62, %c0_63] : memref<3x1x256xf32, #tpu.memory_space<vmem>>, vector<1x1x256xf32>
    %72 = vector.shape_cast %71 : vector<1x1x256xf32> to vector<1x256xf32>
    %73 = vector.broadcast %72 : vector<1x256xf32> to vector<16x256xf32>
    %74 = arith.mulf %70, %73 : vector<16x256xf32>
    %75 = arith.addf %66, %74 : vector<16x256xf32>
    %c0_64 = arith.constant 0 : index
    %c144 = arith.constant 144 : index
    %76 = vector.load %arg12[%c0_64, %c144] : memref<32x512xbf16, #tpu.memory_space<vmem>>, vector<32x256xbf16>
    %c7 = arith.constant 7 : index
    %c0_65 = arith.constant 0 : index
    %c0_66 = arith.constant 0 : index
    %77 = vector.load %arg6[%c7, %c0_65, %c0_66] : memref<9x16x32xbf16, #tpu.memory_space<vmem>>, vector<1x16x32xbf16>
    %78 = vector.shape_cast %77 : vector<1x16x32xbf16> to vector<16x32xbf16>
    %cst_67 = arith.constant dense<0.000000e+00> : vector<16x256xf32>
    %79 = tpu.matmul %78, %76, %cst_67 {dimension_numbers = #tpu.dot_dimension_numbers<[1], [0], [0], [1], [0, 0, 1, 1], [], []>} : vector<16x32xbf16>, vector<32x256xbf16>, vector<16x256xf32> -> vector<16x256xf32>
    %80 = arith.addf %75, %79 : vector<16x256xf32>
    %c0_68 = arith.constant 0 : index
    %c145 = arith.constant 145 : index
    %81 = vector.load %arg12[%c0_68, %c145] : memref<32x512xbf16, #tpu.memory_space<vmem>>, vector<32x256xbf16>
    %c8 = arith.constant 8 : index
    %c0_69 = arith.constant 0 : index
    %c0_70 = arith.constant 0 : index
    %82 = vector.load %arg6[%c8, %c0_69, %c0_70] : memref<9x16x32xbf16, #tpu.memory_space<vmem>>, vector<1x16x32xbf16>
    %83 = vector.shape_cast %82 : vector<1x16x32xbf16> to vector<16x32xbf16>
    %cst_71 = arith.constant dense<0.000000e+00> : vector<16x256xf32>
    %84 = tpu.matmul %83, %81, %cst_71 {dimension_numbers = #tpu.dot_dimension_numbers<[1], [0], [0], [1], [0, 0, 1, 1], [], []>} : vector<16x32xbf16>, vector<32x256xbf16>, vector<16x256xf32> -> vector<16x256xf32>
    %c2_72 = arith.constant 2 : index
    %c0_73 = arith.constant 0 : index
    %c0_74 = arith.constant 0 : index
    %85 = vector.load %arg10[%c2_72, %c0_73, %c0_74] : memref<3x1x256xf32, #tpu.memory_space<vmem>>, vector<1x1x256xf32>
    %86 = vector.shape_cast %85 : vector<1x1x256xf32> to vector<1x256xf32>
    %87 = vector.broadcast %86 : vector<1x256xf32> to vector<16x256xf32>
    %88 = arith.mulf %84, %87 : vector<16x256xf32>
    %89 = arith.addf %80, %88 : vector<16x256xf32>
    %c0_75 = arith.constant 0 : index
    %c0_76 = arith.constant 0 : index
    %90 = vector.load %arg7[%c0_75, %c0_76] : memref<16x1xf32, #tpu.memory_space<vmem>>, vector<16x1xf32>
    %91 = vector.broadcast %90 : vector<16x1xf32> to vector<16x256xf32>
    %92 = arith.addf %89, %91 : vector<16x256xf32>
    %cst_77 = arith.constant 0.000000e+00 : f32
    %93 = vector.broadcast %cst_77 : f32 to vector<16x256xf32>
    %94 = arith.maximumf %92, %93 : vector<16x256xf32>
    %c0_78 = arith.constant 0 : index
    %c0_79 = arith.constant 0 : index
    %95 = vector.load %arg8[%c0_78, %c0_79] : memref<8x16xbf16, #tpu.memory_space<vmem>>, vector<8x16xbf16>
    %96 = arith.truncf %94 : vector<16x256xf32> to vector<16x256xbf16>
    %cst_80 = arith.constant dense<0.000000e+00> : vector<8x256xf32>
    %97 = tpu.matmul %95, %96, %cst_80 {dimension_numbers = #tpu.dot_dimension_numbers<[1], [0], [0], [1], [0, 0, 1, 1], [], []>} : vector<8x16xbf16>, vector<16x256xbf16>, vector<8x256xf32> -> vector<8x256xf32>
    %c0_81 = arith.constant 0 : index
    %c0_82 = arith.constant 0 : index
    %98 = vector.load %arg9[%c0_81, %c0_82] : memref<8x1xf32, #tpu.memory_space<vmem>>, vector<8x1xf32>
    %99 = vector.broadcast %98 : vector<8x1xf32> to vector<8x256xf32>
    %100 = arith.addf %97, %99 : vector<8x256xf32>
    %c0_83 = arith.constant 0 : index
    %c0_84 = arith.constant 0 : index
    %c0_85 = arith.constant 0 : index
    %101 = vector.load %arg11[%c0_83, %c0_84, %c0_85] : memref<1x8x256xf32, #tpu.memory_space<vmem>>, vector<1x8x256xf32>
    %102 = vector.shape_cast %101 : vector<1x8x256xf32> to vector<8x256xf32>
    %103 = vector.shape_cast %100 : vector<8x256xf32> to vector<1x8x256xf32>
    tpu.vector_store %arg11[%c0_83, %c0_84, %c0_85], %103 {strides = array<i32>} : memref<1x8x256xf32, #tpu.memory_space<vmem>>, vector<1x8x256xf32>,
    return
  }
  func.func @transform_0(%arg0: i32) -> (i32, i32, i32) {
    %c0_i32 = arith.constant 0 : i32
    %c0_i32_0 = arith.constant 0 : i32
    %c0_i32_1 = arith.constant 0 : i32
    return %arg0, %c0_i32, %c0_i32_0 : i32, i32, i32
  }
  func.func @transform_1(%arg0: i32) -> (i32, i32, i32) {
    %c0_i32 = arith.constant 0 : i32
    %c0_i32_0 = arith.constant 0 : i32
    %c0_i32_1 = arith.constant 0 : i32
    return %arg0, %c0_i32, %c0_i32_0 : i32, i32, i32
  }
  func.func @transform_2(%arg0: i32) -> (i32, i32) {
    %c0_i32 = arith.constant 0 : i32
    %c0_i32_0 = arith.constant 0 : i32
    %c0_i32_1 = arith.constant 0 : i32
    return %c0_i32, %c0_i32_0 : i32, i32
  }
  func.func @transform_3(%arg0: i32) -> (i32, i32) {
    %c0_i32 = arith.constant 0 : i32
    %c0_i32_0 = arith.constant 0 : i32
    %c0_i32_1 = arith.constant 0 : i32
    return %c0_i32, %c0_i32_0 : i32, i32
  }
  func.func @transform_4(%arg0: i32) -> (i32, i32) {
    %c0_i32 = arith.constant 0 : i32
    %c0_i32_0 = arith.constant 0 : i32
    %c0_i32_1 = arith.constant 0 : i32
    return %c0_i32, %c0_i32_0 : i32, i32
  }
  func.func @transform_5(%arg0: i32) -> (i32, i32, i32) {
    %c0_i32 = arith.constant 0 : i32
    %c0_i32_0 = arith.constant 0 : i32
    %c0_i32_1 = arith.constant 0 : i32
    %c0_i32_2 = arith.constant 0 : i32
    return %c0_i32, %c0_i32_0, %c0_i32_1 : i32, i32, i32
  }
  func.func @transform_6(%arg0: i32) -> (i32, i32) {
    %c0_i32 = arith.constant 0 : i32
    %c0_i32_0 = arith.constant 0 : i32
    %c0_i32_1 = arith.constant 0 : i32
    return %c0_i32, %c0_i32_0 : i32, i32
  }
  func.func @transform_7(%arg0: i32) -> (i32, i32) {
    %c0_i32 = arith.constant 0 : i32
    %c0_i32_0 = arith.constant 0 : i32
    %c0_i32_1 = arith.constant 0 : i32
    return %c0_i32, %c0_i32_0 : i32, i32
  }
  func.func @transform_8(%arg0: i32) -> (i32, i32) {
    %c0_i32 = arith.constant 0 : i32
    %c0_i32_0 = arith.constant 0 : i32
    %c0_i32_1 = arith.constant 0 : i32
    return %c0_i32, %c0_i32_0 : i32, i32
  }
  func.func @transform_9(%arg0: i32) -> (i32, i32, i32) {
    %c0_i32 = arith.constant 0 : i32
    %c0_i32_0 = arith.constant 0 : i32
    %c0_i32_1 = arith.constant 0 : i32
    %c0_i32_2 = arith.constant 0 : i32
    return %c0_i32, %c0_i32_0, %c0_i32_1 : i32, i32, i32
  }
  func.func @transform_10(%arg0: i32) -> (i32, i32, i32) {
    %c0_i32 = arith.constant 0 : i32
    %c0_i32_0 = arith.constant 0 : i32
    %c0_i32_1 = arith.constant 0 : i32
    return %arg0, %c0_i32, %c0_i32_0 : i32, i32, i32
  }
}

</mosaic_0001>

<llo_original>
// kernel: fpn_cat3x3_head_forward.2
$region0: #{fpn_cat3x3_head_forward.2}
  #allocation0 [shape = 'u32[]', space=smem, size = 0x4, offset = 0x4, fixed_abs, tag = 'smem constant byte address 0x4 - core index']
  #allocation1 [shape = 'u32[72,128]{1,0:T(1,128)}', space=vmem, size = 0x9000, scoped, tag = 'internal scratch']
  #allocation2 [shape = 'bf16[32,320]{1,0:T(8,128)(2,1)}', space=vmem, size = 0x6000, scoped, tag = 'scratch operand']
  %s0 = inlined_call_operand.vmem [shape: f32[2,1024,64], index: 0, kind: input, shape index: {}]
  %s1 = inlined_call_operand.vmem [shape: f32[2,64,16], index: 1, kind: input, shape index: {}]
  %s2 = inlined_call_operand.vmem [shape: bf16[16,64], index: 2, kind: input, shape index: {}]
  %s3 = inlined_call_operand.vmem [shape: f32[16,1], index: 3, kind: input, shape index: {}]
  %s4 = inlined_call_operand.vmem [shape: bf16[16,1024], index: 4, kind: input, shape index: {}]
  %s5 = inlined_call_operand.vmem [shape: f32[16,1], index: 5, kind: input, shape index: {}]
  %s6 = inlined_call_operand.vmem [shape: bf16[16,64], index: 6, kind: input, shape index: {}]
  %s7 = inlined_call_operand.vmem [shape: bf16[9,16,32], index: 7, kind: input, shape index: {}]
  %s8 = inlined_call_operand.vmem [shape: f32[16,1], index: 8, kind: input, shape index: {}]
  %s9 = inlined_call_operand.vmem [shape: f32[3,1,64], index: 9, kind: input, shape index: {}]
  %s10 = inlined_call_operand.vmem [shape: bf16[2,16,64], index: 10, kind: output, shape index: {}]
  %s11 = sld [smem:[#allocation0]]
  $region73: #{fpn_cat3x3_head_forward.2} parent=0
    _
  %s13 = ssub.s32 1, %s11
  %s14 = scalar_select 0, %s13, %s11
  loop: start=0, step=1, limit=4
  $region2: #{fpn_cat3x3_head_forward.2} parent=0 // loop_pre_header
    _
  $region3: #{fpn_cat3x3_head_forward.2} parent=0 // loop_header
    %s16 = sphi 0, %s20
    %p17 = scmp.ge.s32.totalorder %s16, 4
    %s26 = sphi 0, %s28
    %s29 = sphi 0, %s26
    %s30 = sphi 0, %s29
    %s46 = sphi 0, %s30
    %s52 = sphi 0, %s54
    %s55 = sphi 0, %s52
    %s56 = sphi 0, %s55
    %s72 = sphi 0, %s56
    %s76 = sphi 0, %s76
    %s78 = sphi 0, %s76
    %s79 = sphi 0, %s78
    %s93 = sphi 0, %s79
    %s97 = sphi 0, %s97
    %s99 = sphi 0, %s97
    %s100 = sphi 0, %s99
    %s114 = sphi 0, %s100
    %s118 = sphi 0, %s118
    %s120 = sphi 0, %s118
    %s121 = sphi 0, %s120
    %s135 = sphi 0, %s121
    %s139 = sphi 0, %s139
    %s141 = sphi 0, %s139
    %s142 = sphi 0, %s141
    %s156 = sphi 0, %s142
    %s160 = sphi 0, %s160
    %s162 = sphi 0, %s160
    %s163 = sphi 0, %s162
    %s177 = sphi 0, %s163
    %s181 = sphi 0, %s181
    %s183 = sphi 0, %s181
    %s184 = sphi 0, %s183
    %s198 = sphi 0, %s184
    %s202 = sphi 0, %s202
    %s204 = sphi 0, %s202
    %s205 = sphi 0, %s204
    %s219 = sphi 0, %s205
    %s223 = sphi 0, %s223
    %s225 = sphi 0, %s223
    %s226 = sphi 0, %s225
    %s240 = sphi 0, %s226
    %s246 = sphi 0, %s248
    %s249 = sphi 0, %s246
    %s250 = sphi 0, %s249
    %s266 = sphi 0, %s250
  $region4: #{fpn_cat3x3_head_forward.2} parent=0 // loop_header_branch
    %19 = sbr.rel (%p17) target = $region8
  $region5: #{fpn_cat3x3_head_forward.2} parent=0 // loop_body
    %s21 = ssub.s32 %s16, 1
    %s22 = ssub.s32 %s16, 2
    %s23 = sadd.s32 %s16, 1
    %s24 = ssub.s32 %s16, %s23
    %p25 = scmp.eq.s32.totalorder %s24, 0
    %s27 = sadd.s32 %s26, 1
    %s28 = scalar_select %p25, %s26, %s27
    %p31 = pneg %p25
    %p32 = scmp.eq.s32.totalorder %s16, 1
    %p33 = por %p31, %p32
    %p34 = scmp.ne.s32.totalorder %s26, %s29
    %p35 = scmp.eq.s32.totalorder %s16, 0
    %p36 = por %p34, %p35
    %p37 = scmp.ne.s32.totalorder %s26, %s29
    %p38 = scmp.eq.s32.totalorder %s21, 1
    %p39 = por %p37, %p38
    %p40 = scmp.ne.s32.totalorder %s29, %s30
    %p41 = scmp.eq.s32.totalorder %s21, 0
    %p42 = por %p40, %p41
    %p43 = scmp.ne.s32.totalorder %s29, %s30
    %p44 = scmp.eq.s32.totalorder %s22, 1
    %p45 = por %p43, %p44
    %p47 = scmp.ne.s32.totalorder %s30, %s46
    %p48 = scmp.eq.s32.totalorder %s22, 0
    %p49 = por %p47, %p48
    %s50 = ssub.s32 %s16, %s23
    %p51 = scmp.eq.s32.totalorder %s50, 0
    %s53 = sadd.s32 %s52, 1
    %s54 = scalar_select %p51, %s52, %s53
    %p57 = pneg %p51
    %p58 = scmp.eq.s32.totalorder %s16, 1
    %p59 = por %p57, %p58
    %p60 = scmp.ne.s32.totalorder %s52, %s55
    %p61 = scmp.eq.s32.totalorder %s16, 0
    %p62 = por %p60, %p61
    %p63 = scmp.ne.s32.totalorder %s52, %s55
    %p64 = scmp.eq.s32.totalorder %s21, 1
    %p65 = por %p63, %p64
    %p66 = scmp.ne.s32.totalorder %s55, %s56
    %p67 = scmp.eq.s32.totalorder %s21, 0
    %p68 = por %p66, %p67
    %p69 = scmp.ne.s32.totalorder %s55, %s56
    %p70 = scmp.eq.s32.totalorder %s22, 1
    %p71 = por %p69, %p70
    %p73 = scmp.ne.s32.totalorder %s56, %s72
    %p74 = scmp.eq.s32.totalorder %s22, 0
    %p75 = por %p73, %p74
    %s77 = sadd.s32 %s76, 1
    %p80 = scmp.eq.s32.totalorder %s16, 1
    %p81 = scmp.ne.s32.totalorder %s76, %s78
    %p82 = scmp.eq.s32.totalorder %s16, 0
    %p83 = por %p81, %p82
    %p84 = scmp.ne.s32.totalorder %s76, %s78
    %p85 = scmp.eq.s32.totalorder %s21, 1
    %p86 = por %p84, %p85
    %p87 = scmp.ne.s32.totalorder %s78, %s79
    %p88 = scmp.eq.s32.totalorder %s21, 0
    %p89 = por %p87, %p88
    %p90 = scmp.ne.s32.totalorder %s78, %s79
    %p91 = scmp.eq.s32.totalorder %s22, 1
    %p92 = por %p90, %p91
    %p94 = scmp.ne.s32.totalorder %s79, %s93
    %p95 = scmp.eq.s32.totalorder %s22, 0
    %p96 = por %p94, %p95
    %s98 = sadd.s32 %s97, 1
    %p101 = scmp.eq.s32.totalorder %s16, 1
    %p102 = scmp.ne.s32.totalorder %s97, %s99
    %p103 = scmp.eq.s32.totalorder %s16, 0
    %p104 = por %p102, %p103
    %p105 = scmp.ne.s32.totalorder %s97, %s99
    %p106 = scmp.eq.s32.totalorder %s21, 1
    %p107 = por %p105, %p106
    %p108 = scmp.ne.s32.totalorder %s99, %s100
    %p109 = scmp.eq.s32.totalorder %s21, 0
    %p110 = por %p108, %p109
    %p111 = scmp.ne.s32.totalorder %s99, %s100
    %p112 = scmp.eq.s32.totalorder %s22, 1
    %p113 = por %p111, %p112
    %p115 = scmp.ne.s32.totalorder %s100, %s114
    %p116 = scmp.eq.s32.totalorder %s22, 0
    %p117 = por %p115, %p116
    %s119 = sadd.s32 %s118, 1
    %p122 = scmp.eq.s32.totalorder %s16, 1
    %p123 = scmp.ne.s32.totalorder %s118, %s120
    %p124 = scmp.eq.s32.totalorder %s16, 0
    %p125 = por %p123, %p124
    %p126 = scmp.ne.s32.totalorder %s118, %s120
    %p127 = scmp.eq.s32.totalorder %s21, 1
    %p128 = por %p126, %p127
    %p129 = scmp.ne.s32.totalorder %s120, %s121
    %p130 = scmp.eq.s32.totalorder %s21, 0
    %p131 = por %p129, %p130
    %p132 = scmp.ne.s32.totalorder %s120, %s121
    %p133 = scmp.eq.s32.totalorder %s22, 1
    %p134 = por %p132, %p133
    %p136 = scmp.ne.s32.totalorder %s121, %s135
    %p137 = scmp.eq.s32.totalorder %s22, 0
    %p138 = por %p136, %p137
    %s140 = sadd.s32 %s139, 1
    %p143 = scmp.eq.s32.totalorder %s16, 1
    %p144 = scmp.ne.s32.totalorder %s139, %s141
    %p145 = scmp.eq.s32.totalorder %s16, 0
    %p146 = por %p144, %p145
    %p147 = scmp.ne.s32.totalorder %s139, %s141
    %p148 = scmp.eq.s32.totalorder %s21, 1
    %p149 = por %p147, %p148
    %p150 = scmp.ne.s32.totalorder %s141, %s142
    %p151 = scmp.eq.s32.totalorder %s21, 0
    %p152 = por %p150, %p151
    %p153 = scmp.ne.s32.totalorder %s141, %s142
    %p154 = scmp.eq.s32.totalorder %s22, 1
    %p155 = por %p153, %p154
    %p157 = scmp.ne.s32.totalorder %s142, %s156
    %p158 = scmp.eq.s32.totalorder %s22, 0
    %p159 = por %p157, %p158
    %s161 = sadd.s32 %s160, 1
    %p164 = scmp.eq.s32.totalorder %s16, 1
    %p165 = scmp.ne.s32.totalorder %s160, %s162
    %p166 = scmp.eq.s32.totalorder %s16, 0
    %p167 = por %p165, %p166
    %p168 = scmp.ne.s32.totalorder %s160, %s162
    %p169 = scmp.eq.s32.totalorder %s21, 1
    %p170 = por %p168, %p169
    %p171 = scmp.ne.s32.totalorder %s162, %s163
    %p172 = scmp.eq.s32.totalorder %s21, 0
    %p173 = por %p171, %p172
    %p174 = scmp.ne.s32.totalorder %s162, %s163
    %p175 = scmp.eq.s32.totalorder %s22, 1
    %p176 = por %p174, %p175
    %p178 = scmp.ne.s32.totalorder %s163, %s177
    %p179 = scmp.eq.s32.totalorder %s22, 0
    %p180 = por %p178, %p179
    %s182 = sadd.s32 %s181, 1
    %p185 = scmp.eq.s32.totalorder %s16, 1
    %p186 = scmp.ne.s32.totalorder %s181, %s183
    %p187 = scmp.eq.s32.totalorder %s16, 0
    %p188 = por %p186, %p187
    %p189 = scmp.ne.s32.totalorder %s181, %s183
    %p190 = scmp.eq.s32.totalorder %s21, 1
    %p191 = por %p189, %p190
    %p192 = scmp.ne.s32.totalorder %s183, %s184
    %p193 = scmp.eq.s32.totalorder %s21, 0
    %p194 = por %p192, %p193
    %p195 = scmp.ne.s32.totalorder %s183, %s184
    %p196 = scmp.eq.s32.totalorder %s22, 1
    %p197 = por %p195, %p196
    %p199 = scmp.ne.s32.totalorder %s184, %s198
    %p200 = scmp.eq.s32.totalorder %s22, 0
    %p201 = por %p199, %p200
    %s203 = sadd.s32 %s202, 1
    %p206 = scmp.eq.s32.totalorder %s16, 1
    %p207 = scmp.ne.s32.totalorder %s202, %s204
    %p208 = scmp.eq.s32.totalorder %s16, 0
    %p209 = por %p207, %p208
    %p210 = scmp.ne.s32.totalorder %s202, %s204
    %p211 = scmp.eq.s32.totalorder %s21, 1
    %p212 = por %p210, %p211
    %p213 = scmp.ne.s32.totalorder %s204, %s205
    %p214 = scmp.eq.s32.totalorder %s21, 0
    %p215 = por %p213, %p214
    %p216 = scmp.ne.s32.totalorder %s204, %s205
    %p217 = scmp.eq.s32.totalorder %s22, 1
    %p218 = por %p216, %p217
    %p220 = scmp.ne.s32.totalorder %s205, %s219
    %p221 = scmp.eq.s32.totalorder %s22, 0
    %p222 = por %p220, %p221
    %s224 = sadd.s32 %s223, 1
    %p227 = scmp.eq.s32.totalorder %s16, 1
    %p228 = scmp.ne.s32.totalorder %s223, %s225
    %p229 = scmp.eq.s32.totalorder %s16, 0
    %p230 = por %p228, %p229
    %p231 = scmp.ne.s32.totalorder %s223, %s225
    %p232 = scmp.eq.s32.totalorder %s21, 1
    %p233 = por %p231, %p232
    %p234 = scmp.ne.s32.totalorder %s225, %s226
    %p235 = scmp.eq.s32.totalorder %s21, 0
    %p236 = por %p234, %p235
    %p237 = scmp.ne.s32.totalorder %s225, %s226
    %p238 = scmp.eq.s32.totalorder %s22, 1
    %p239 = por %p237, %p238
    %p241 = scmp.ne.s32.totalorder %s226, %s240
    %p242 = scmp.eq.s32.totalorder %s22, 0
    %p243 = por %p241, %p242
    %s244 = ssub.s32 %s16, %s23
    %p245 = scmp.eq.s32.totalorder %s244, 0
    %s247 = sadd.s32 %s246, 1
    %s248 = scalar_select %p245, %s246, %s247
    %p251 = pneg %p245
    %p252 = scmp.eq.s32.totalorder %s16, 1
    %p253 = por %p251, %p252
    %p254 = scmp.ne.s32.totalorder %s246, %s249
    %p255 = scmp.eq.s32.totalorder %s16, 0
    %p256 = por %p254, %p255
    %p257 = scmp.ne.s32.totalorder %s246, %s249
    %p258 = scmp.eq.s32.totalorder %s21, 1
    %p259 = por %p257, %p258
    %p260 = scmp.ne.s32.totalorder %s249, %s250
    %p261 = scmp.eq.s32.totalorder %s21, 0
    %p262 = por %p260, %p261
    %p263 = scmp.ne.s32.totalorder %s249, %s250
    %p264 = scmp.eq.s32.totalorder %s22, 1
    %p265 = por %p263, %p264
    %p267 = scmp.ne.s32.totalorder %s250, %s266
    %p268 = scmp.eq.s32.totalorder %s22, 0
    %p269 = por %p267, %p268
    %p270 = scmp.le.s32.totalorder 1, %s16
    %p271 = scmp.lt.s32.totalorder %s16, 3
    %p272 = pnand %p270, %p271
    %p273 = pneg %p272
    // Predicated region
    $region9: #{fpn_cat3x3_head_forward.2} parent=5 // pred_check
      _
    $region10: #{fpn_cat3x3_head_forward.2} parent=5 // pred_check_branch
      %275 = sbr.rel (%p272) target = $region12
    $region11: #{fpn_cat3x3_head_forward.2} parent=5 // pred_region
      %s276 = ssub.s32 %s16, 1
      // Predicated region
      $region13: #{fpn_cat3x3_head_forward.2} parent=11 // pred_check
        %p277 = pneg %p89
      $region14: #{fpn_cat3x3_head_forward.2} parent=11 // pred_check_branch
        %279 = sbr.rel (%p277) target = $region16
      $region15: #{fpn_cat3x3_head_forward.2} parent=11 // pred_region
        _
      $region16: #{fpn_cat3x3_head_forward.2} parent=11 // pred_fallthru
        _
      // Predicated region
      $region17: #{fpn_cat3x3_head_forward.2} parent=11 // pred_check
        %p280 = pneg %p110
      $region18: #{fpn_cat3x3_head_forward.2} parent=11 // pred_check_branch
        %282 = sbr.rel (%p280) target = $region20
      $region19: #{fpn_cat3x3_head_forward.2} parent=11 // pred_region
        _
      $region20: #{fpn_cat3x3_head_forward.2} parent=11 // pred_fallthru
        _
      // Predicated region
      $region21: #{fpn_cat3x3_head_forward.2} parent=11 // pred_check
        %p283 = pneg %p131
      $region22: #{fpn_cat3x3_head_forward.2} parent=11 // pred_check_branch
        %285 = sbr.rel (%p283) target = $region24
      $region23: #{fpn_cat3x3_head_forward.2} parent=11 // pred_region
        _
      $region24: #{fpn_cat3x3_head_forward.2} parent=11 // pred_fallthru
        _
      // Predicated region
      $region25: #{fpn_cat3x3_head_forward.2} parent=11 // pred_check
        %p286 = pneg %p152
      $region26: #{fpn_cat3x3_head_forward.2} parent=11 // pred_check_branch
        %288 = sbr.rel (%p286) target = $region28
      $region27: #{fpn_cat3x3_head_forward.2} parent=11 // pred_region
        _
      $region28: #{fpn_cat3x3_head_forward.2} parent=11 // pred_fallthru
        _
      // Predicated region
      $region29: #{fpn_cat3x3_head_forward.2} parent=11 // pred_check
        %p289 = pneg %p173
      $region30: #{fpn_cat3x3_head_forward.2} parent=11 // pred_check_branch
        %291 = sbr.rel (%p289) target = $region32
      $region31: #{fpn_cat3x3_head_forward.2} parent=11 // pred_region
        _
      $region32: #{fpn_cat3x3_head_forward.2} parent=11 // pred_fallthru
        _
      // Predicated region
      $region33: #{fpn_cat3x3_head_forward.2} parent=11 // pred_check
        %p292 = pneg %p194
      $region34: #{fpn_cat3x3_head_forward.2} parent=11 // pred_check_branch
        %294 = sbr.rel (%p292) target = $region36
      $region35: #{fpn_cat3x3_head_forward.2} parent=11 // pred_region
        _
      $region36: #{fpn_cat3x3_head_forward.2} parent=11 // pred_fallthru
        _
      // Predicated region
      $region37: #{fpn_cat3x3_head_forward.2} parent=11 // pred_check
        %p295 = pneg %p215
      $region38: #{fpn_cat3x3_head_forward.2} parent=11 // pred_check_branch
        %297 = sbr.rel (%p295) target = $region40
      $region39: #{fpn_cat3x3_head_forward.2} parent=11 // pred_region
        _
      $region40: #{fpn_cat3x3_head_forward.2} parent=11 // pred_fallthru
        _
      // Predicated region
      $region41: #{fpn_cat3x3_head_forward.2} parent=11 // pred_check
        %p298 = pneg %p236
      $region42: #{fpn_cat3x3_head_forward.2} parent=11 // pred_check_branch
        %300 = sbr.rel (%p298) target = $region44
      $region43: #{fpn_cat3x3_head_forward.2} parent=11 // pred_region
        _
      $region44: #{fpn_cat3x3_head_forward.2} parent=11 // pred_fallthru
        _
    $region12: #{fpn_cat3x3_head_forward.2} parent=5 // pred_fallthru
      _
    %p301 = scmp.lt.s32.totalorder %s16, 2
    // Predicated region
    $region45: #{fpn_cat3x3_head_forward.2} parent=5 // pred_check
      %p302 = pneg %p301
    $region46: #{fpn_cat3x3_head_forward.2} parent=5 // pred_check_branch
      %304 = sbr.rel (%p302) target = $region48
    $region47: #{fpn_cat3x3_head_forward.2} parent=5 // pred_region
      // Predicated region
      $region49: #{fpn_cat3x3_head_forward.2} parent=47 // pred_check
        %p305 = pneg %p36
      $region50: #{fpn_cat3x3_head_forward.2} parent=47 // pred_check_branch
        %307 = sbr.rel (%p305) target = $region52
      $region51: #{fpn_cat3x3_head_forward.2} parent=47 // pred_region
        %p308 = scmp.lt.s32.totalorder %s16, 1
        %s309 = scalar_select %p308, %s16, 1
        %s310 = smul.addr %s309, 128
        %s311 = smul.addr %s310, 8
        %s312 = scalar_lea.vmem %s0, %s311
      $region52: #{fpn_cat3x3_head_forward.2} parent=47 // pred_fallthru
        _
      // Predicated region
      $region53: #{fpn_cat3x3_head_forward.2} parent=47 // pred_check
        %p313 = pneg %p62
      $region54: #{fpn_cat3x3_head_forward.2} parent=47 // pred_check_branch
        %315 = sbr.rel (%p313) target = $region56
      $region55: #{fpn_cat3x3_head_forward.2} parent=47 // pred_region
        %p316 = scmp.lt.s32.totalorder %s16, 1
        %s317 = scalar_select %p316, %s16, 1
        %s318 = smul.addr %s317, 8
        %s319 = smul.addr %s318, 8
        %s320 = scalar_lea.vmem %s1, %s319
      $region56: #{fpn_cat3x3_head_forward.2} parent=47 // pred_fallthru
        _
    $region48: #{fpn_cat3x3_head_forward.2} parent=5 // pred_fallthru
      _
    %p321 = scmp.le.s32.totalorder 1, %s16
    %p322 = scmp.lt.s32.totalorder %s16, 3
    %p323 = pnand %p321, %p322
    %p324 = pneg %p323
    // Predicated region
    $region57: #{fpn_cat3x3_head_forward.2} parent=5 // pred_check
      _
    $region58: #{fpn_cat3x3_head_forward.2} parent=5 // pred_check_branch
      %326 = sbr.rel (%p323) target = $region60
    $region59: #{fpn_cat3x3_head_forward.2} parent=5 // pred_region
      %s327 = ssub.s32 %s16, 1
      %p328 = scmp.lt.s32.totalorder %s21, 1
      %s329 = scalar_select %p328, %s21, 1
      %s330 = smul.addr %s329, 128
      %s331 = smul.addr %s330, 8
      %s332 = scalar_lea.vmem %s0, %s331
      %p333 = pneg %p42
      %p334 = pneg %p39
      %p335 = scmp.lt.s32.totalorder %s21, 1
      %s336 = scalar_select %p335, %s21, 1
      %s337 = smul.addr %s336, 8
      %s338 = smul.addr %s337, 8
      %s339 = scalar_lea.vmem %s1, %s338
      %p340 = pneg %p68
      %p341 = pneg %p65
      %p342 = pneg %p89
      %p343 = pneg %p86
      %p344 = pneg %p110
      %p345 = pneg %p107
      %p346 = pneg %p131
      %p347 = pneg %p128
      %p348 = pneg %p152
      %p349 = pneg %p149
      %p350 = pneg %p173
      %p351 = pneg %p170
      %p352 = pneg %p194
      %p353 = pneg %p191
      %p354 = pneg %p215
      %p355 = pneg %p212
      %p356 = pneg %p236
      %p357 = pneg %p233
      %p358 = pneg %p262
      %p359 = pneg %p259
      %p360 = scmp.lt.s32.totalorder %s21, 1
      %s361 = scalar_select %p360, %s21, 1
      %s362 = smul.addr %s361, 2
      %s363 = smul.addr %s362, 4
      %s364 = scalar_lea.vmem %s10, %s363
      %p365 = scmp.lt.s32.totalorder %s21, 1
      %s366 = scalar_select %p365, %s21, 1
      %s367 = smul.addr %s366, 128
      %s368 = smul.addr %s367, 8
      %s369 = scalar_lea.vmem %s0, %s368
      %p370 = scmp.lt.s32.totalorder %s21, 1
      %s371 = scalar_select %p370, %s21, 1
      %s372 = smul.addr %s371, 8
      %s373 = smul.addr %s372, 8
      %s374 = scalar_lea.vmem %s1, %s373
      %p375 = scmp.lt.s32.totalorder %s21, 1
      %s376 = scalar_select %p375, %s21, 1
      %s377 = smul.addr %s376, 2
      %s378 = smul.addr %s377, 4
      %s379 = scalar_lea.vmem %s10, %s378
      %v381 = vld [vmem:[%s374] sm:$0xff]
      %v382 = vld [vmem:[%s374 + $0x8] sm:$0xff]
      %v383 = vld [vmem:[%s374 + $0x10] sm:$0xff]
      %v384 = vld [vmem:[%s374 + $0x18] sm:$0xff]
      %v385 = vld [vmem:[%s374 + $0x20] sm:$0xff]
      %v386 = vld [vmem:[%s374 + $0x28] sm:$0xff]
      %v387 = vld [vmem:[%s374 + $0x30] sm:$0xff]
      %v388 = vld [vmem:[%s374 + $0x38] sm:$0xff]
      %v389 = vpack.c.bf16 %v382, %v381
      %v390 = vpack.c.bf16 %v384, %v383
      %v391 = vpack.c.bf16 %v386, %v385
      %v392 = vpack.c.bf16 %v388, %v387
      %v393 = vld [vmem:[%s2] sm:$0xf]
      %v394 = vld [vmem:[%s2 + $0x4] sm:$0xf]
      %v395 = vld [vmem:[%s3] sm:$0xff]
      %v396 = vld [vmem:[%s3 + $0x8] sm:$0xff]
      %398 = vset.pattern.permute.xlu0 0
      %399 = vperm.xlu0 %398, %v395
      %v400 = vpop.permute.xlu0 %399
      %403 = vset.pattern.permute.xlu0 0
      %404 = vperm.xlu0 %403, %v396
      %v405 = vpop.permute.xlu0 %404
      %v409 = vunpack.c.l.b16 %v393
      %v410 = vunpack.c.l.b16 %v394
      %v411 = vpack.c.b16 %v410, %v409
      %vm412 = vcmask 523264
      %v414 = vsel %vm412, %v411, 0
      %416 = vmatpush.bf16.msra.mxu0 0
      %417 = vmatpush.bf16.msra.mxu0 0
      %418 = vmatpush.bf16.msra.mxu0 0
      %419 = vmatpush.bf16.msra.mxu0 0
      %420 = vmatpush.bf16.msra.mxu0 %v392
      %421 = vmatpush.bf16.msra.mxu0 %v391
      %422 = vmatpush.bf16.msra.mxu0 %v390
      %423 = vmatpush.bf16.msra.mxu0 %v389
      %424 = vmatmul.bf16.gmra.mxu0 %v414
      %v425 = vpop.f32.mrf.mxu0
      %v426 = vadd.f32 %v400, %v425
      %v427 = vpop.f32.mrf.mxu0
      %v428 = vadd.f32 %v405, %v427
      %429 = vdwg.mxu0
      %v430 = vmax.f32 %v426, 0.0
      %v431 = vmax.f32 %v428, 0.0
      %v432 = vld [vmem:[%s369] sm:$0xff]
      %v433 = vld [vmem:[%s369 + $0x8] sm:$0xff]
      %v434 = vld [vmem:[%s369 + $0x10] sm:$0xff]
      %v435 = vld [vmem:[%s369 + $0x18] sm:$0xff]
      %v436 = vld [vmem:[%s369 + $0x20] sm:$0xff]
      %v437 = vld [vmem:[%s369 + $0x28] sm:$0xff]
      %v438 = vld [vmem:[%s369 + $0x30] sm:$0xff]
      %v439 = vld [vmem:[%s369 + $0x38] sm:$0xff]
      %v440 = vld [vmem:[%s369 + $0x40] sm:$0xff]
      %v441 = vld [vmem:[%s369 + $0x48] sm:$0xff]
      %v442 = vld [vmem:[%s369 + $0x50] sm:$0xff]
      %v443 = vld [vmem:[%s369 + $0x58] sm:$0xff]
      %v444 = vld [vmem:[%s369 + $0x60] sm:$0xff]
      %v445 = vld [vmem:[%s369 + $0x68] sm:$0xff]
      %v446 = vld [vmem:[%s369 + $0x70] sm:$0xff]
      %v447 = vld [vmem:[%s369 + $0x78] sm:$0xff]
      %v448 = vld [vmem:[%s369 + $0x80] sm:$0xff]
      %v449 = vld [vmem:[%s369 + $0x88] sm:$0xff]
      %v450 = vld [vmem:[%s369 + $0x90] sm:$0xff]
      %v451 = vld [vmem:[%s369 + $0x98] sm:$0xff]
      %v452 = vld [vmem:[%s369 + $0xa0] sm:$0xff]
      %v453 = vld [vmem:[%s369 + $0xa8] sm:$0xff]
      %v454 = vld [vmem:[%s369 + $0xb0] sm:$0xff]
      %v455 = vld [vmem:[%s369 + $0xb8] sm:$0xff]
      %v456 = vld [vmem:[%s369 + $0xc0] sm:$0xff]
      %v457 = vld [vmem:[%s369 + $0xc8] sm:$0xff]
      %v458 = vld [vmem:[%s369 + $0xd0] sm:$0xff]
      %v459 = vld [vmem:[%s369 + $0xd8] sm:$0xff]
      %v460 = vld [vmem:[%s369 + $0xe0] sm:$0xff]
      %v461 = vld [vmem:[%s369 + $0xe8] sm:$0xff]
      %v462 = vld [vmem:[%s369 + $0xf0] sm:$0xff]
      %v463 = vld [vmem:[%s369 + $0xf8] sm:$0xff]
      %v464 = vld [vmem:[%s369 + $0x100] sm:$0xff]
      %v465 = vld [vmem:[%s369 + $0x108] sm:$0xff]
      %v466 = vld [vmem:[%s369 + $0x110] sm:$0xff]
      %v467 = vld [vmem:[%s369 + $0x118] sm:$0xff]
      %v468 = vld [vmem:[%s369 + $0x120] sm:$0xff]
      %v469 = vld [vmem:[%s369 + $0x128] sm:$0xff]
      %v470 = vld [vmem:[%s369 + $0x130] sm:$0xff]
      %v471 = vld [vmem:[%s369 + $0x138] sm:$0xff]
      %v472 = vld [vmem:[%s369 + $0x140] sm:$0xff]
      %v473 = vld [vmem:[%s369 + $0x148] sm:$0xff]
      %v474 = vld [vmem:[%s369 + $0x150] sm:$0xff]
      %v475 = vld [vmem:[%s369 + $0x158] sm:$0xff]
      %v476 = vld [vmem:[%s369 + $0x160] sm:$0xff]
      %v477 = vld [vmem:[%s369 + $0x168] sm:$0xff]
      %v478 = vld [vmem:[%s369 + $0x170] sm:$0xff]
      %v479 = vld [vmem:[%s369 + $0x178] sm:$0xff]
      %v480 = vld [vmem:[%s369 + $0x180] sm:$0xff]
      %v481 = vld [vmem:[%s369 + $0x188] sm:$0xff]
      %v482 = vld [vmem:[%s369 + $0x190] sm:$0xff]
      %v483 = vld [vmem:[%s369 + $0x198] sm:$0xff]
      %v484 = vld [vmem:[%s369 + $0x1a0] sm:$0xff]
      %v485 = vld [vmem:[%s369 + $0x1a8] sm:$0xff]
      %v486 = vld [vmem:[%s369 + $0x1b0] sm:$0xff]
      %v487 = vld [vmem:[%s369 + $0x1b8] sm:$0xff]
      %v488 = vld [vmem:[%s369 + $0x1c0] sm:$0xff]
      %v489 = vld [vmem:[%s369 + $0x1c8] sm:$0xff]
      %v490 = vld [vmem:[%s369 + $0x1d0] sm:$0xff]
      %v491 = vld [vmem:[%s369 + $0x1d8] sm:$0xff]
      %v492 = vld [vmem:[%s369 + $0x1e0] sm:$0xff]
      %v493 = vld [vmem:[%s369 + $0x1e8] sm:$0xff]
      %v494 = vld [vmem:[%s369 + $0x1f0] sm:$0xff]
      %v495 = vld [vmem:[%s369 + $0x1f8] sm:$0xff]
      %v496 = vld [vmem:[%s369 + $0x200] sm:$0xff]
      %v497 = vld [vmem:[%s369 + $0x208] sm:$0xff]
      %v498 = vld [vmem:[%s369 + $0x210] sm:$0xff]
      %v499 = vld [vmem:[%s369 + $0x218] sm:$0xff]
      %v500 = vld [vmem:[%s369 + $0x220] sm:$0xff]
      %v501 = vld [vmem:[%s369 + $0x228] sm:$0xff]
      %v502 = vld [vmem:[%s369 + $0x230] sm:$0xff]
      %v503 = vld [vmem:[%s369 + $0x238] sm:$0xff]
      %v504 = vld [vmem:[%s369 + $0x240] sm:$0xff]
      %v505 = vld [vmem:[%s369 + $0x248] sm:$0xff]
      %v506 = vld [vmem:[%s369 + $0x250] sm:$0xff]
      %v507 = vld [vmem:[%s369 + $0x258] sm:$0xff]
      %v508 = vld [vmem:[%s369 + $0x260] sm:$0xff]
      %v509 = vld [vmem:[%s369 + $0x268] sm:$0xff]
      %v510 = vld [vmem:[%s369 + $0x270] sm:$0xff]
      %v511 = vld [vmem:[%s369 + $0x278] sm:$0xff]
      %v512 = vld [vmem:[%s369 + $0x280] sm:$0xff]
      %v513 = vld [vmem:[%s369 + $0x288] sm:$0xff]
      %v514 = vld [vmem:[%s369 + $0x290] sm:$0xff]
      %v515 = vld [vmem:[%s369 + $0x298] sm:$0xff]
      %v516 = vld [vmem:[%s369 + $0x2a0] sm:$0xff]
      %v517 = vld [vmem:[%s369 + $0x2a8] sm:$0xff]
      %v518 = vld [vmem:[%s369 + $0x2b0] sm:$0xff]
      %v519 = vld [vmem:[%s369 + $0x2b8] sm:$0xff]
      %v520 = vld [vmem:[%s369 + $0x2c0] sm:$0xff]
      %v521 = vld [vmem:[%s369 + $0x2c8] sm:$0xff]
      %v522 = vld [vmem:[%s369 + $0x2d0] sm:$0xff]
      %v523 = vld [vmem:[%s369 + $0x2d8] sm:$0xff]
      %v524 = vld [vmem:[%s369 + $0x2e0] sm:$0xff]
      %v525 = vld [vmem:[%s369 + $0x2e8] sm:$0xff]
      %v526 = vld [vmem:[%s369 + $0x2f0] sm:$0xff]
      %v527 = vld [vmem:[%s369 + $0x2f8] sm:$0xff]
      %v528 = vld [vmem:[%s369 + $0x300] sm:$0xff]
      %v529 = vld [vmem:[%s369 + $0x308] sm:$0xff]
      %v530 = vld [vmem:[%s369 + $0x310] sm:$0xff]
      %v531 = vld [vmem:[%s369 + $0x318] sm:$0xff]
      %v532 = vld [vmem:[%s369 + $0x320] sm:$0xff]
      %v533 = vld [vmem:[%s369 + $0x328] sm:$0xff]
      %v534 = vld [vmem:[%s369 + $0x330] sm:$0xff]
      %v535 = vld [vmem:[%s369 + $0x338] sm:$0xff]
      %v536 = vld [vmem:[%s369 + $0x340] sm:$0xff]
      %v537 = vld [vmem:[%s369 + $0x348] sm:$0xff]
      %v538 = vld [vmem:[%s369 + $0x350] sm:$0xff]
      %v539 = vld [vmem:[%s369 + $0x358] sm:$0xff]
      %v540 = vld [vmem:[%s369 + $0x360] sm:$0xff]
      %v541 = vld [vmem:[%s369 + $0x368] sm:$0xff]
      %v542 = vld [vmem:[%s369 + $0x370] sm:$0xff]
      %v543 = vld [vmem:[%s369 + $0x378] sm:$0xff]
      %v544 = vld [vmem:[%s369 + $0x380] sm:$0xff]
      %v545 = vld [vmem:[%s369 + $0x388] sm:$0xff]
      %v546 = vld [vmem:[%s369 + $0x390] sm:$0xff]
      %v547 = vld [vmem:[%s369 + $0x398] sm:$0xff]
      %v548 = vld [vmem:[%s369 + $0x3a0] sm:$0xff]
      %v549 = vld [vmem:[%s369 + $0x3a8] sm:$0xff]
      %v550 = vld [vmem:[%s369 + $0x3b0] sm:$0xff]
      %v551 = vld [vmem:[%s369 + $0x3b8] sm:$0xff]
      %v552 = vld [vmem:[%s369 + $0x3c0] sm:$0xff]
      %v553 = vld [vmem:[%s369 + $0x3c8] sm:$0xff]
      %v554 = vld [vmem:[%s369 + $0x3d0] sm:$0xff]
      %v555 = vld [vmem:[%s369 + $0x3d8] sm:$0xff]
      %v556 = vld [vmem:[%s369 + $0x3e0] sm:$0xff]
      %v557 = vld [vmem:[%s369 + $0x3e8] sm:$0xff]
      %v558 = vld [vmem:[%s369 + $0x3f0] sm:$0xff]
      %v559 = vld [vmem:[%s369 + $0x3f8] sm:$0xff]
      %v560 = vpack.c.bf16 %v433, %v432
      %v561 = vpack.c.bf16 %v435, %v434
      %v562 = vpack.c.bf16 %v437, %v436
      %v563 = vpack.c.bf16 %v439, %v438
      %v564 = vpack.c.bf16 %v441, %v440
      %v565 = vpack.c.bf16 %v443, %v442
      %v566 = vpack.c.bf16 %v445, %v444
      %v567 = vpack.c.bf16 %v447, %v446
      %v568 = vpack.c.bf16 %v449, %v448
      %v569 = vpack.c.bf16 %v451, %v450
      %v570 = vpack.c.bf16 %v453, %v452
      %v571 = vpack.c.bf16 %v455, %v454
      %v572 = vpack.c.bf16 %v457, %v456
      %v573 = vpack.c.bf16 %v459, %v458
      %v574 = vpack.c.bf16 %v461, %v460
      %v575 = vpack.c.bf16 %v463, %v462
      %v576 = vpack.c.bf16 %v465, %v464
      %v577 = vpack.c.bf16 %v467, %v466
      %v578 = vpack.c.bf16 %v469, %v468
      %v579 = vpack.c.bf16 %v471, %v470
      %v580 = vpack.c.bf16 %v473, %v472
      %v581 = vpack.c.bf16 %v475, %v474
      %v582 = vpack.c.bf16 %v477, %v476
      %v583 = vpack.c.bf16 %v479, %v478
      %v584 = vpack.c.bf16 %v481, %v480
      %v585 = vpack.c.bf16 %v483, %v482
      %v586 = vpack.c.bf16 %v485, %v484
      %v587 = vpack.c.bf16 %v487, %v486
      %v588 = vpack.c.bf16 %v489, %v488
      %v589 = vpack.c.bf16 %v491, %v490
      %v590 = vpack.c.bf16 %v493, %v492
      %v591 = vpack.c.bf16 %v495, %v494
      %v592 = vpack.c.bf16 %v497, %v496
      %v593 = vpack.c.bf16 %v499, %v498
      %v594 = vpack.c.bf16 %v501, %v500
      %v595 = vpack.c.bf16 %v503, %v502
      %v596 = vpack.c.bf16 %v505, %v504
      %v597 = vpack.c.bf16 %v507, %v506
      %v598 = vpack.c.bf16 %v509, %v508
      %v599 = vpack.c.bf16 %v511, %v510
      %v600 = vpack.c.bf16 %v513, %v512
      %v601 = vpack.c.bf16 %v515, %v514
      %v602 = vpack.c.bf16 %v517, %v516
      %v603 = vpack.c.bf16 %v519, %v518
      %v604 = vpack.c.bf16 %v521, %v520
      %v605 = vpack.c.bf16 %v523, %v522
      %v606 = vpack.c.bf16 %v525, %v524
      %v607 = vpack.c.bf16 %v527, %v526
      %v608 = vpack.c.bf16 %v529, %v528
      %v609 = vpack.c.bf16 %v531, %v530
      %v610 = vpack.c.bf16 %v533, %v532
      %v611 = vpack.c.bf16 %v535, %v534
      %v612 = vpack.c.bf16 %v537, %v536
      %v613 = vpack.c.bf16 %v539, %v538
      %v614 = vpack.c.bf16 %v541, %v540
      %v615 = vpack.c.bf16 %v543, %v542
      %v616 = vpack.c.bf16 %v545, %v544
      %v617 = vpack.c.bf16 %v547, %v546
      %v618 = vpack.c.bf16 %v549, %v548
      %v619 = vpack.c.bf16 %v551, %v550
      %v620 = vpack.c.bf16 %v553, %v552
      %v621 = vpack.c.bf16 %v555, %v554
      %v622 = vpack.c.bf16 %v557, %v556
      %v623 = vpack.c.bf16 %v559, %v558
      %v624 = vld [vmem:[%s4] sm:$0xff]
      %v625 = vld [vmem:[%s4 + $0x8] sm:$0xff]
      %v626 = vld [vmem:[%s4 + $0x10] sm:$0xff]
      %v627 = vld [vmem:[%s4 + $0x18] sm:$0xff]
      %v628 = vld [vmem:[%s4 + $0x20] sm:$0xff]
      %v629 = vld [vmem:[%s4 + $0x28] sm:$0xff]
      %v630 = vld [vmem:[%s4 + $0x30] sm:$0xff]
      %v631 = vld [vmem:[%s4 + $0x38] sm:$0xff]
      %v632 = vld [vmem:[%s5] sm:$0xff]
      %v633 = vld [vmem:[%s5 + $0x8] sm:$0xff]
      %635 = vset.pattern.permute.xlu0 0
      %636 = vperm.xlu0 %635, %v632
      %v637 = vpop.permute.xlu0 %636
      %640 = vset.pattern.permute.xlu0 0
      %641 = vperm.xlu0 %640, %v633
      %v642 = vpop.permute.xlu0 %641
      %v652 = vunpack.c.l.b16 %v624
      %v653 = vunpack.c.h.b16 %v624
      %v654 = vunpack.c.l.b16 %v625
      %v655 = vunpack.c.h.b16 %v625
      %v656 = vunpack.c.l.b16 %v626
      %v657 = vunpack.c.h.b16 %v626
      %v658 = vunpack.c.l.b16 %v627
      %v659 = vunpack.c.h.b16 %v627
      %v660 = vunpack.c.l.b16 %v628
      %v661 = vunpack.c.h.b16 %v628
      %v662 = vunpack.c.l.b16 %v629
      %v663 = vunpack.c.h.b16 %v629
      %v664 = vunpack.c.l.b16 %v630
      %v665 = vunpack.c.h.b16 %v630
      %v666 = vunpack.c.l.b16 %v631
      %v667 = vunpack.c.h.b16 %v631
      %v668 = vpack.c.b16 %v660, %v652
      %v669 = vpack.c.b16 %v661, %v653
      %v670 = vpack.c.b16 %v662, %v654
      %v671 = vpack.c.b16 %v663, %v655
      %v672 = vpack.c.b16 %v664, %v656
      %v673 = vpack.c.b16 %v665, %v657
      %v674 = vpack.c.b16 %v666, %v658
      %v675 = vpack.c.b16 %v667, %v659
      %684 = vmatpush.bf16.msra.mxu0 %v567
      %685 = vmatpush.bf16.msra.mxu0 %v566
      %686 = vmatpush.bf16.msra.mxu0 %v565
      %687 = vmatpush.bf16.msra.mxu0 %v564
      %688 = vmatpush.bf16.msra.mxu0 %v563
      %689 = vmatpush.bf16.msra.mxu0 %v562
      %690 = vmatpush.bf16.msra.mxu0 %v561
      %691 = vmatpush.bf16.msra.mxu0 %v560
      %692 = vmatmul.bf16.gmra.mxu0 %v668
      %v693 = vpop.f32.mrf.mxu0
      %v694 = vadd.f32 %v637, %v693
      %v695 = vpop.f32.mrf.mxu0
      %v696 = vadd.f32 %v642, %v695
      %697 = vdwg.mxu0
      %698 = vmatpush.bf16.msra.mxu0 %v575
      %699 = vmatpush.bf16.msra.mxu0 %v574
      %700 = vmatpush.bf16.msra.mxu0 %v573
      %701 = vmatpush.bf16.msra.mxu0 %v572
      %702 = vmatpush.bf16.msra.mxu0 %v571
      %703 = vmatpush.bf16.msra.mxu0 %v570
      %704 = vmatpush.bf16.msra.mxu0 %v569
      %705 = vmatpush.bf16.msra.mxu0 %v568
      %706 = vmatmul.bf16.gmra.mxu0 %v669
      %v707 = vpop.f32.mrf.mxu0
      %v708 = vadd.f32 %v694, %v707
      %v709 = vpop.f32.mrf.mxu0
      %v710 = vadd.f32 %v696, %v709
      %711 = vdwg.mxu0
      %712 = vmatpush.bf16.msra.mxu0 %v583
      %713 = vmatpush.bf16.msra.mxu0 %v582
      %714 = vmatpush.bf16.msra.mxu0 %v581
      %715 = vmatpush.bf16.msra.mxu0 %v580
      %716 = vmatpush.bf16.msra.mxu0 %v579
      %717 = vmatpush.bf16.msra.mxu0 %v578
      %718 = vmatpush.bf16.msra.mxu0 %v577
      %719 = vmatpush.bf16.msra.mxu0 %v576
      %720 = vmatmul.bf16.gmra.mxu0 %v670
      %v721 = vpop.f32.mrf.mxu0
      %v722 = vadd.f32 %v708, %v721
      %v723 = vpop.f32.mrf.mxu0
      %v724 = vadd.f32 %v710, %v723
      %725 = vdwg.mxu0
      %726 = vmatpush.bf16.msra.mxu0 %v591
      %727 = vmatpush.bf16.msra.mxu0 %v590
      %728 = vmatpush.bf16.msra.mxu0 %v589
      %729 = vmatpush.bf16.msra.mxu0 %v588
      %730 = vmatpush.bf16.msra.mxu0 %v587
      %731 = vmatpush.bf16.msra.mxu0 %v586
      %732 = vmatpush.bf16.msra.mxu0 %v585
      %733 = vmatpush.bf16.msra.mxu0 %v584
      %734 = vmatmul.bf16.gmra.mxu0 %v671
      %v735 = vpop.f32.mrf.mxu0
      %v736 = vadd.f32 %v722, %v735
      %v737 = vpop.f32.mrf.mxu0
      %v738 = vadd.f32 %v724, %v737
      %739 = vdwg.mxu0
      %740 = vmatpush.bf16.msra.mxu0 %v599
      %741 = vmatpush.bf16.msra.mxu0 %v598
      %742 = vmatpush.bf16.msra.mxu0 %v597
      %743 = vmatpush.bf16.msra.mxu0 %v596
      %744 = vmatpush.bf16.msra.mxu0 %v595
      %745 = vmatpush.bf16.msra.mxu0 %v594
      %746 = vmatpush.bf16.msra.mxu0 %v593
      %747 = vmatpush.bf16.msra.mxu0 %v592
      %748 = vmatmul.bf16.gmra.mxu0 %v672
      %v749 = vpop.f32.mrf.mxu0
      %v750 = vadd.f32 %v736, %v749
      %v751 = vpop.f32.mrf.mxu0
      %v752 = vadd.f32 %v738, %v751
      %753 = vdwg.mxu0
      %754 = vmatpush.bf16.msra.mxu0 %v607
      %755 = vmatpush.bf16.msra.mxu0 %v606
      %756 = vmatpush.bf16.msra.mxu0 %v605
      %757 = vmatpush.bf16.msra.mxu0 %v604
      %758 = vmatpush.bf16.msra.mxu0 %v603
      %759 = vmatpush.bf16.msra.mxu0 %v602
      %760 = vmatpush.bf16.msra.mxu0 %v601
      %761 = vmatpush.bf16.msra.mxu0 %v600
      %762 = vmatmul.bf16.gmra.mxu0 %v673
      %v763 = vpop.f32.mrf.mxu0
      %v764 = vadd.f32 %v750, %v763
      %v765 = vpop.f32.mrf.mxu0
      %v766 = vadd.f32 %v752, %v765
      %767 = vdwg.mxu0
      %768 = vmatpush.bf16.msra.mxu0 %v615
      %769 = vmatpush.bf16.msra.mxu0 %v614
      %770 = vmatpush.bf16.msra.mxu0 %v613
      %771 = vmatpush.bf16.msra.mxu0 %v612
      %772 = vmatpush.bf16.msra.mxu0 %v611
      %773 = vmatpush.bf16.msra.mxu0 %v610
      %774 = vmatpush.bf16.msra.mxu0 %v609
      %775 = vmatpush.bf16.msra.mxu0 %v608
      %776 = vmatmul.bf16.gmra.mxu0 %v674
      %v777 = vpop.f32.mrf.mxu0
      %v778 = vadd.f32 %v764, %v777
      %v779 = vpop.f32.mrf.mxu0
      %v780 = vadd.f32 %v766, %v779
      %781 = vdwg.mxu0
      %782 = vmatpush.bf16.msra.mxu0 %v623
      %783 = vmatpush.bf16.msra.mxu0 %v622
      %784 = vmatpush.bf16.msra.mxu0 %v621
      %785 = vmatpush.bf16.msra.mxu0 %v620
      %786 = vmatpush.bf16.msra.mxu0 %v619
      %787 = vmatpush.bf16.msra.mxu0 %v618
      %788 = vmatpush.bf16.msra.mxu0 %v617
      %789 = vmatpush.bf16.msra.mxu0 %v616
      %790 = vmatmul.bf16.gmra.mxu0 %v675
      %v791 = vpop.f32.mrf.mxu0
      %v792 = vadd.f32 %v778, %v791
      %v793 = vpop.f32.mrf.mxu0
      %v794 = vadd.f32 %v780, %v793
      %795 = vdwg.mxu0
      %v796 = vmax.f32 %v792, 0.0
      %v797 = vmax.f32 %v794, 0.0
      %v798 = vpack.c.bf16 %v431, %v430
      %v799 = vld [vmem:[%s6] sm:$0xf]
      %v800 = vld [vmem:[%s6 + $0x4] sm:$0xf]
      %v803 = vunpack.c.l.b16 %v799
      %v804 = vunpack.c.l.b16 %v800
      %v805 = vpack.c.b16 %v804, %v803
      %vm807 = vcmask 130048
      %v809 = vsel %vm807, %v798, 0
      %811 = vmatpush.bf16.msra.mxu0 0
      %812 = vmatpush.bf16.msra.mxu0 0
      %813 = vmatpush.bf16.msra.mxu0 0
      %814 = vmatpush.bf16.msra.mxu0 0
      %815 = vmatpush.bf16.msra.mxu0 0
      %816 = vmatpush.bf16.msra.mxu0 0
      %817 = vmatpush.bf16.msra.mxu0 0
      %818 = vmatpush.bf16.msra.mxu0 %v805
      %819 = vmatmul.bf16.gmra.mxu0 %v809
      %v820 = vpop.f32.mrf.mxu0
      %v821 = vadd.f32 0.0, %v820
      %v822 = vpop.f32.mrf.mxu0
      %v823 = vadd.f32 0.0, %v822
      %824 = vdwg.mxu0
      %825 = vst [vmem:[#allocation2] sm:$0xff] 0
      %vm826 = vcmask 519168
      %827 = vst.msk [vmem:[#allocation2 + $0x8] sm:$0xf] %vm826, 0
      %828 = vst [vmem:[#allocation2 + $0xc] sm:$0xff] 0
      %829 = vst.msk [vmem:[#allocation2 + $0x14] sm:$0xf] %vm826, 0
      %830 = vst [vmem:[#allocation2 + $0x18] sm:$0xff] 0
      %831 = vst.msk [vmem:[#allocation2 + $0x20] sm:$0xf] %vm826, 0
      %832 = vst [vmem:[#allocation2 + $0x24] sm:$0xff] 0
      %833 = vst.msk [vmem:[#allocation2 + $0x2c] sm:$0xf] %vm826, 0
      %v834 = vpack.c.bf16 %v796, %v796
      %v835 = vpack.c.bf16 %v797, %v797
      %836 = vst.msk [vmem:[#allocation2 + $0x4] sm:$0xf] %vm826, %v834
      %837 = vst.msk [vmem:[#allocation2 + $0x10] sm:$0xf] %vm826, %v835
      %v838 = vpack.c.bf16 %v821, %v821
      %v839 = vpack.c.bf16 %v823, %v823
      %840 = vst.msk [vmem:[#allocation2 + $0x1c] sm:$0xf] %vm826, %v838
      %841 = vst.msk [vmem:[#allocation2 + $0x28] sm:$0xf] %vm826, %v839
      %v842 = vld [vmem:[#allocation2] sm:$0xff]
      %v843 = vld [vmem:[#allocation2 + $0xc] sm:$0xff]
      %v844 = vld [vmem:[#allocation2 + $0x18] sm:$0xff]
      %v845 = vld [vmem:[#allocation2 + $0x24] sm:$0xff]
      %v846 = vld [vmem:[%s7] sm:$0xf]
      %v847 = vld [vmem:[%s7 + $0x4] sm:$0xf]
      %v850 = vunpack.c.l.b16 %v846
      %v851 = vunpack.c.l.b16 %v847
      %v852 = vpack.c.b16 %v851, %v850
      %v857 = vunpack.c.l.b16 %v842
      %v858 = vunpack.c.h.b16 %v842
      %v859 = vunpack.c.l.b16 %v843
      %v860 = vunpack.c.h.b16 %v843
      %v861 = vunpack.c.l.b16 %v844
      %v862 = vunpack.c.h.b16 %v844
      %v863 = vunpack.c.l.b16 %v845
      %v864 = vunpack.c.h.b16 %v845
      %v865 = vpack.c.b16 %v859, %v857
      %v866 = vpack.c.b16 %v860, %v858
      %v867 = vpack.c.b16 %v863, %v861
      %v868 = vpack.c.b16 %v864, %v862
      %869 = vrot.lane.b32.xlu0 %v865, 9
      %v870 = vpop.permute.xlu0 %869
      %871 = vrot.lane.b32.xlu0 %v866, 9
      %v872 = vpop.permute.xlu0 %871
      %873 = vrot.lane.b32.xlu0 %v867, 9
      %v874 = vpop.permute.xlu0 %873
      %875 = vrot.lane.b32.xlu0 %v868, 9
      %v876 = vpop.permute.xlu0 %875
      %vm877 = vcmask 72704
      %v878 = vsel %vm877, %v870, %v872
      %v879 = vsel %vm877, %v874, %v876
      %vm882 = vcmask 261120
      %v884 = vsel %vm882, %v852, 0
      %886 = vmatpush.bf16.msra.mxu0 0
      %887 = vmatpush.bf16.msra.mxu0 0
      %888 = vmatpush.bf16.msra.mxu0 0
      %889 = vmatpush.bf16.msra.mxu0 0
      %890 = vmatpush.bf16.msra.mxu0 0
      %891 = vmatpush.bf16.msra.mxu0 0
      %892 = vmatpush.bf16.msra.mxu0 %v879
      %893 = vmatpush.bf16.msra.mxu0 %v878
      %894 = vmatmul.bf16.gmra.mxu0 %v884
      %v895 = vpop.f32.mrf.mxu0
      %v896 = vadd.f32 0.0, %v895
      %v897 = vpop.f32.mrf.mxu0
      %v898 = vadd.f32 0.0, %v897
      %899 = vdwg.mxu0
      %v900 = vld [vmem:[%s9] sm:$0x1]
      %v902 = vperm.slane %v900, 0
      %v904 = vmul.f32 %v896, %v902
      %v905 = vmul.f32 %v898, %v902
      %v906 = vadd.f32 %v904, 0.0
      %v907 = vadd.f32 %v905, 0.0
      %s908 = scalar_lea.vmem %s7, 8
      %v909 = vld [vmem:[%s908] sm:$0xf]
      %v910 = vld [vmem:[%s908 + $0x4] sm:$0xf]
      %v913 = vunpack.c.l.b16 %v909
      %v914 = vunpack.c.l.b16 %v910
      %v915 = vpack.c.b16 %v914, %v913
      %916 = vrot.lane.b32.xlu0 %v865, 8
      %v917 = vpop.permute.xlu0 %916
      %918 = vrot.lane.b32.xlu0 %v866, 8
      %v919 = vpop.permute.xlu0 %918
      %920 = vrot.lane.b32.xlu0 %v867, 8
      %v921 = vpop.permute.xlu0 %920
      %922 = vrot.lane.b32.xlu0 %v868, 8
      %v923 = vpop.permute.xlu0 %922
      %vm924 = vcmask 64512
      %v925 = vsel %vm924, %v917, %v919
      %v926 = vsel %vm924, %v921, %v923
      %v930 = vsel %vm882, %v915, 0
      %932 = vmatpush.bf16.msra.mxu0 0
      %933 = vmatpush.bf16.msra.mxu0 0
      %934 = vmatpush.bf16.msra.mxu0 0
      %935 = vmatpush.bf16.msra.mxu0 0
      %936 = vmatpush.bf16.msra.mxu0 0
      %937 = vmatpush.bf16.msra.mxu0 0
      %938 = vmatpush.bf16.msra.mxu0 %v926
      %939 = vmatpush.bf16.msra.mxu0 %v925
      %940 = vmatmul.bf16.gmra.mxu0 %v930
      %v941 = vpop.f32.mrf.mxu0
      %v942 = vadd.f32 0.0, %v941
      %v943 = vpop.f32.mrf.mxu0
      %v944 = vadd.f32 0.0, %v943
      %945 = vdwg.mxu0
      %v946 = vadd.f32 %v906, %v942
      %v947 = vadd.f32 %v907, %v944
      %s948 = scalar_lea.vmem %s7, 16
      %v949 = vld [vmem:[%s948] sm:$0xf]
      %v950 = vld [vmem:[%s948 + $0x4] sm:$0xf]
      %v953 = vunpack.c.l.b16 %v949
      %v954 = vunpack.c.l.b16 %v950
      %v955 = vpack.c.b16 %v954, %v953
      %956 = vrot.lane.b32.xlu0 %v865, 7
      %v957 = vpop.permute.xlu0 %956
      %958 = vrot.lane.b32.xlu0 %v866, 7
      %v959 = vpop.permute.xlu0 %958
      %960 = vrot.lane.b32.xlu0 %v867, 7
      %v961 = vpop.permute.xlu0 %960
      %962 = vrot.lane.b32.xlu0 %v868, 7
      %v963 = vpop.permute.xlu0 %962
      %vm964 = vcmask 56320
      %v965 = vsel %vm964, %v957, %v959
      %v966 = vsel %vm964, %v961, %v963
      %v970 = vsel %vm882, %v955, 0
      %972 = vmatpush.bf16.msra.mxu0 0
      %973 = vmatpush.bf16.msra.mxu0 0
      %974 = vmatpush.bf16.msra.mxu0 0
      %975 = vmatpush.bf16.msra.mxu0 0
      %976 = vmatpush.bf16.msra.mxu0 0
      %977 = vmatpush.bf16.msra.mxu0 0
      %978 = vmatpush.bf16.msra.mxu0 %v966
      %979 = vmatpush.bf16.msra.mxu0 %v965
      %980 = vmatmul.bf16.gmra.mxu0 %v970
      %v981 = vpop.f32.mrf.mxu0
      %v982 = vadd.f32 0.0, %v981
      %v983 = vpop.f32.mrf.mxu0
      %v984 = vadd.f32 0.0, %v983
      %985 = vdwg.mxu0
      %s986 = scalar_lea.vmem %s9, 2
      %v987 = vld [vmem:[%s986] sm:$0x1]
      %v989 = vperm.slane %v987, 0
      %v991 = vmul.f32 %v982, %v989
      %v992 = vmul.f32 %v984, %v989
      %v993 = vadd.f32 %v946, %v991
      %v994 = vadd.f32 %v947, %v992
      %s995 = scalar_lea.vmem %s7, 24
      %v996 = vld [vmem:[%s995] sm:$0xf]
      %v997 = vld [vmem:[%s995 + $0x4] sm:$0xf]
      %v1000 = vunpack.c.l.b16 %v996
      %v1001 = vunpack.c.l.b16 %v997
      %v1002 = vpack.c.b16 %v1001, %v1000
      %1003 = vrot.lane.b32.xlu0 %v865, 1
      %v1004 = vpop.permute.xlu0 %1003
      %1005 = vrot.lane.b32.xlu0 %v866, 1
      %v1006 = vpop.permute.xlu0 %1005
      %1007 = vrot.lane.b32.xlu0 %v867, 1
      %v1008 = vpop.permute.xlu0 %1007
      %1009 = vrot.lane.b32.xlu0 %v868, 1
      %v1010 = vpop.permute.xlu0 %1009
      %vm1011 = vcmask 7168
      %v1012 = vsel %vm1011, %v1004, %v1006
      %v1013 = vsel %vm1011, %v1008, %v1010
      %v1017 = vsel %vm882, %v1002, 0
      %1019 = vmatpush.bf16.msra.mxu0 0
      %1020 = vmatpush.bf16.msra.mxu0 0
      %1021 = vmatpush.bf16.msra.mxu0 0
      %1022 = vmatpush.bf16.msra.mxu0 0
      %1023 = vmatpush.bf16.msra.mxu0 0
      %1024 = vmatpush.bf16.msra.mxu0 0
      %1025 = vmatpush.bf16.msra.mxu0 %v1013
      %1026 = vmatpush.bf16.msra.mxu0 %v1012
      %1027 = vmatmul.bf16.gmra.mxu0 %v1017
      %v1028 = vpop.f32.mrf.mxu0
      %v1029 = vadd.f32 0.0, %v1028
      %v1030 = vpop.f32.mrf.mxu0
      %v1031 = vadd.f32 0.0, %v1030
      %1032 = vdwg.mxu0
      %v1033 = vmul.f32 %v1029, %v902
      %v1034 = vmul.f32 %v1031, %v902
      %v1035 = vadd.f32 %v993, %v1033
      %v1036 = vadd.f32 %v994, %v1034
      %v1037 = vld [vmem:[#allocation2 + $0x4] sm:$0xf]
      %v1038 = vld [vmem:[#allocation2 + $0x10] sm:$0xf]
      %v1039 = vld [vmem:[#allocation2 + $0x1c] sm:$0xf]
      %v1040 = vld [vmem:[#allocation2 + $0x28] sm:$0xf]
      %s1041 = scalar_lea.vmem %s7, 32
      %v1042 = vld [vmem:[%s1041] sm:$0xf]
      %v1043 = vld [vmem:[%s1041 + $0x4] sm:$0xf]
      %v1046 = vunpack.c.l.b16 %v1042
      %v1047 = vunpack.c.l.b16 %v1043
      %v1048 = vpack.c.b16 %v1047, %v1046
      %v1053 = vunpack.c.l.b16 %v1037
      %v1054 = vunpack.c.l.b16 %v1038
      %v1055 = vunpack.c.l.b16 %v1039
      %v1056 = vunpack.c.l.b16 %v1040
      %v1057 = vpack.c.b16 %v1054, %v1053
      %v1058 = vpack.c.b16 %v1056, %v1055
      %v1062 = vsel %vm882, %v1048, 0
      %1064 = vmatpush.bf16.msra.mxu0 0
      %1065 = vmatpush.bf16.msra.mxu0 0
      %1066 = vmatpush.bf16.msra.mxu0 0
      %1067 = vmatpush.bf16.msra.mxu0 0
      %1068 = vmatpush.bf16.msra.mxu0 0
      %1069 = vmatpush.bf16.msra.mxu0 0
      %1070 = vmatpush.bf16.msra.mxu0 %v1058
      %1071 = vmatpush.bf16.msra.mxu0 %v1057
      %1072 = vmatmul.bf16.gmra.mxu0 %v1062
      %v1073 = vpop.f32.mrf.mxu0
      %v1074 = vadd.f32 0.0, %v1073
      %v1075 = vpop.f32.mrf.mxu0
      %v1076 = vadd.f32 0.0, %v1075
      %1077 = vdwg.mxu0
      %v1078 = vadd.f32 %v1035, %v1074
      %v1079 = vadd.f32 %v1036, %v1076
      %s1080 = scalar_lea.vmem %s7, 40
      %v1081 = vld [vmem:[%s1080] sm:$0xf]
      %v1082 = vld [vmem:[%s1080 + $0x4] sm:$0xf]
      %v1085 = vunpack.c.l.b16 %v1081
      %v1086 = vunpack.c.l.b16 %v1082
      %v1087 = vpack.c.b16 %v1086, %v1085
      %1088 = vrot.lane.b32.xlu0 %v1057, 127
      %v1089 = vpop.permute.xlu0 %1088
      %1090 = vrot.lane.b32.xlu0 %v1058, 127
      %v1091 = vpop.permute.xlu0 %1090
      %v1095 = vsel %vm882, %v1087, 0
      %1097 = vmatpush.bf16.msra.mxu0 0
      %1098 = vmatpush.bf16.msra.mxu0 0
      %1099 = vmatpush.bf16.msra.mxu0 0
      %1100 = vmatpush.bf16.msra.mxu0 0
      %1101 = vmatpush.bf16.msra.mxu0 0
      %1102 = vmatpush.bf16.msra.mxu0 0
      %1103 = vmatpush.bf16.msra.mxu0 %v1091
      %1104 = vmatpush.bf16.msra.mxu0 %v1089
      %1105 = vmatmul.bf16.gmra.mxu0 %v1095
      %v1106 = vpop.f32.mrf.mxu0
      %v1107 = vadd.f32 0.0, %v1106
      %v1108 = vpop.f32.mrf.mxu0
      %v1109 = vadd.f32 0.0, %v1108
      %1110 = vdwg.mxu0
      %v1111 = vmul.f32 %v1107, %v989
      %v1112 = vmul.f32 %v1109, %v989
      %v1113 = vadd.f32 %v1078, %v1111
      %v1114 = vadd.f32 %v1079, %v1112
      %s1115 = scalar_lea.vmem %s7, 48
      %v1116 = vld [vmem:[%s1115] sm:$0xf]
      %v1117 = vld [vmem:[%s1115 + $0x4] sm:$0xf]
      %v1120 = vunpack.c.l.b16 %v1116
      %v1121 = vunpack.c.l.b16 %v1117
      %v1122 = vpack.c.b16 %v1121, %v1120
      %1123 = vrot.lane.b32.xlu0 %v1057, 121
      %v1124 = vpop.permute.xlu0 %1123
      %1125 = vrot.lane.b32.xlu0 %v1058, 121
      %v1126 = vpop.permute.xlu0 %1125
      %v1130 = vsel %vm882, %v1122, 0
      %1132 = vmatpush.bf16.msra.mxu0 0
      %1133 = vmatpush.bf16.msra.mxu0 0
      %1134 = vmatpush.bf16.msra.mxu0 0
      %1135 = vmatpush.bf16.msra.mxu0 0
      %1136 = vmatpush.bf16.msra.mxu0 0
      %1137 = vmatpush.bf16.msra.mxu0 0
      %1138 = vmatpush.bf16.msra.mxu0 %v1126
      %1139 = vmatpush.bf16.msra.mxu0 %v1124
      %1140 = vmatmul.bf16.gmra.mxu0 %v1130
      %v1141 = vpop.f32.mrf.mxu0
      %v1142 = vadd.f32 0.0, %v1141
      %v1143 = vpop.f32.mrf.mxu0
      %v1144 = vadd.f32 0.0, %v1143
      %1145 = vdwg.mxu0
      %v1146 = vmul.f32 %v1142, %v902
      %v1147 = vmul.f32 %v1144, %v902
      %v1148 = vadd.f32 %v1113, %v1146
      %v1149 = vadd.f32 %v1114, %v1147
      %s1150 = scalar_lea.vmem %s7, 56
      %v1151 = vld [vmem:[%s1150] sm:$0xf]
      %v1152 = vld [vmem:[%s1150 + $0x4] sm:$0xf]
      %v1155 = vunpack.c.l.b16 %v1151
      %v1156 = vunpack.c.l.b16 %v1152
      %v1157 = vpack.c.b16 %v1156, %v1155
      %1158 = vrot.lane.b32.xlu0 %v1057, 120
      %v1159 = vpop.permute.xlu0 %1158
      %1160 = vrot.lane.b32.xlu0 %v1058, 120
      %v1161 = vpop.permute.xlu0 %1160
      %v1165 = vsel %vm882, %v1157, 0
      %1167 = vmatpush.bf16.msra.mxu0 0
      %1168 = vmatpush.bf16.msra.mxu0 0
      %1169 = vmatpush.bf16.msra.mxu0 0
      %1170 = vmatpush.bf16.msra.mxu0 0
      %1171 = vmatpush.bf16.msra.mxu0 0
      %1172 = vmatpush.bf16.msra.mxu0 0
      %1173 = vmatpush.bf16.msra.mxu0 %v1161
      %1174 = vmatpush.bf16.msra.mxu0 %v1159
      %1175 = vmatmul.bf16.gmra.mxu0 %v1165
      %v1176 = vpop.f32.mrf.mxu0
      %v1177 = vadd.f32 0.0, %v1176
      %v1178 = vpop.f32.mrf.mxu0
      %v1179 = vadd.f32 0.0, %v1178
      %1180 = vdwg.mxu0
      %v1181 = vadd.f32 %v1148, %v1177
      %v1182 = vadd.f32 %v1149, %v1179
      %s1183 = scalar_lea.vmem %s7, 64
      %v1184 = vld [vmem:[%s1183] sm:$0xf]
      %v1185 = vld [vmem:[%s1183 + $0x4] sm:$0xf]
      %v1188 = vunpack.c.l.b16 %v1184
      %v1189 = vunpack.c.l.b16 %v1185
      %v1190 = vpack.c.b16 %v1189, %v1188
      %1191 = vrot.lane.b32.xlu0 %v1057, 119
      %v1192 = vpop.permute.xlu0 %1191
      %1193 = vrot.lane.b32.xlu0 %v1058, 119
      %v1194 = vpop.permute.xlu0 %1193
      %v1198 = vsel %vm882, %v1190, 0
      %1200 = vmatpush.bf16.msra.mxu0 0
      %1201 = vmatpush.bf16.msra.mxu0 0
      %1202 = vmatpush.bf16.msra.mxu0 0
      %1203 = vmatpush.bf16.msra.mxu0 0
      %1204 = vmatpush.bf16.msra.mxu0 0
      %1205 = vmatpush.bf16.msra.mxu0 0
      %1206 = vmatpush.bf16.msra.mxu0 %v1194
      %1207 = vmatpush.bf16.msra.mxu0 %v1192
      %1208 = vmatmul.bf16.gmra.mxu0 %v1198
      %v1209 = vpop.f32.mrf.mxu0
      %v1210 = vadd.f32 0.0, %v1209
      %v1211 = vpop.f32.mrf.mxu0
      %v1212 = vadd.f32 0.0, %v1211
      %1213 = vdwg.mxu0
      %v1214 = vmul.f32 %v1210, %v989
      %v1215 = vmul.f32 %v1212, %v989
      %v1216 = vadd.f32 %v1181, %v1214
      %v1217 = vadd.f32 %v1182, %v1215
      %v1218 = vld [vmem:[%s8] sm:$0xff]
      %v1219 = vld [vmem:[%s8 + $0x8] sm:$0xff]
      %1221 = vset.pattern.permute.xlu0 0
      %1222 = vperm.xlu0 %1221, %v1218
      %v1223 = vpop.permute.xlu0 %1222
      %1226 = vset.pattern.permute.xlu0 0
      %1227 = vperm.xlu0 %1226, %v1219
      %v1228 = vpop.permute.xlu0 %1227
      %v1230 = vadd.f32 %v1216, %v1223
      %v1231 = vadd.f32 %v1217, %v1228
      %v1232 = vmax.f32 %v1230, 0.0
      %v1233 = vmax.f32 %v1231, 0.0
      %v1234 = vpack.c.bf16 %v1232, %v1232
      %v1235 = vpack.c.bf16 %v1233, %v1233
      %1236 = vst.msk [vmem:[%s379] sm:$0xf] %vm826, %v1234
      %1237 = vst.msk [vmem:[%s379 + $0x4] sm:$0xf] %vm826, %v1235
      %p1238 = scmp.lt.s32.totalorder %s21, 1
      %s1239 = scalar_select %p1238, %s21, 1
      %s1240 = smul.addr %s1239, 2
      %s1241 = smul.addr %s1240, 4
      %s1242 = scalar_lea.vmem %s10, %s1241
      // Predicated region
      $region61: #{fpn_cat3x3_head_forward.2} parent=59 // pred_check
        %p1243 = pneg %p259
      $region62: #{fpn_cat3x3_head_forward.2} parent=59 // pred_check_branch
        %1245 = sbr.rel (%p1243) target = $region64
      $region63: #{fpn_cat3x3_head_forward.2} parent=59 // pred_region
        _
      $region64: #{fpn_cat3x3_head_forward.2} parent=59 // pred_fallthru
        _
    $region60: #{fpn_cat3x3_head_forward.2} parent=5 // pred_fallthru
      _
    %p1246 = scmp.le.s32.totalorder 2, %s16
    // Predicated region
    $region65: #{fpn_cat3x3_head_forward.2} parent=5 // pred_check
      %p1247 = pneg %p1246
    $region66: #{fpn_cat3x3_head_forward.2} parent=5 // pred_check_branch
      %1249 = sbr.rel (%p1247) target = $region68
    $region67: #{fpn_cat3x3_head_forward.2} parent=5 // pred_region
      %s1250 = ssub.s32 %s16, 2
      // Predicated region
      $region69: #{fpn_cat3x3_head_forward.2} parent=67 // pred_check
        %p1251 = pneg %p265
      $region70: #{fpn_cat3x3_head_forward.2} parent=67 // pred_check_branch
        %1253 = sbr.rel (%p1251) target = $region72
      $region71: #{fpn_cat3x3_head_forward.2} parent=67 // pred_region
        %p1254 = scmp.lt.s32.totalorder %s22, 1
        %s1255 = scalar_select %p1254, %s22, 1
        %s1256 = smul.addr %s1255, 2
        %s1257 = smul.addr %s1256, 4
        %s1258 = scalar_lea.vmem %s10, %s1257
      $region72: #{fpn_cat3x3_head_forward.2} parent=67 // pred_fallthru
        _
    $region68: #{fpn_cat3x3_head_forward.2} parent=5 // pred_fallthru
      _
  $region6: #{fpn_cat3x3_head_forward.2} parent=0 // loop_footer
    %s20 = sadd.s32 1, %s16
  $region7: #{fpn_cat3x3_head_forward.2} parent=0 // loop_footer_branch
    %15 = sbr.rel target = $region3
  $region8: #{fpn_cat3x3_head_forward.2} parent=0 // loop_exit
    _

// kernel: fpn_cat3x3_head_forward.3
$region0: #{fpn_cat3x3_head_forward.3}
  #allocation0 [shape = 'u32[]', space=smem, size = 0x4, offset = 0x4, fixed_abs, tag = 'smem constant byte address 0x4 - core index']
  #allocation1 [shape = 'u32[72,128]{1,0:T(1,128)}', space=vmem, size = 0x9000, scoped, tag = 'internal scratch']
  #allocation2 [shape = 'bf16[32,512]{1,0:T(8,128)(2,1)}', space=vmem, size = 0x8000, scoped, tag = 'scratch operand']
  %s0 = inlined_call_operand.vmem [shape: f32[2,512,256], index: 0, kind: input, shape index: {}]
  %s1 = inlined_call_operand.vmem [shape: bf16[2,16,64], index: 1, kind: input, shape index: {}]
  %s2 = inlined_call_operand.vmem [shape: bf16[16,512], index: 2, kind: input, shape index: {}]
  %s3 = inlined_call_operand.vmem [shape: f32[16,1], index: 3, kind: input, shape index: {}]
  %s4 = inlined_call_operand.vmem [shape: bf16[64,256], index: 4, kind: input, shape index: {}]
  %s5 = inlined_call_operand.vmem [shape: bf16[9,16,32], index: 5, kind: input, shape index: {}]
  %s6 = inlined_call_operand.vmem [shape: f32[16,1], index: 6, kind: input, shape index: {}]
  %s7 = inlined_call_operand.vmem [shape: bf16[8,16], index: 7, kind: input, shape index: {}]
  %s8 = inlined_call_operand.vmem [shape: f32[8,1], index: 8, kind: input, shape index: {}]
  %s9 = inlined_call_operand.vmem [shape: f32[3,1,256], index: 9, kind: input, shape index: {}]
  %s10 = inlined_call_operand.vmem [shape: f32[2,8,256], index: 10, kind: output, shape index: {}]
  %s11 = sld [smem:[#allocation0]]
  $region73: #{fpn_cat3x3_head_forward.3} parent=0
    _
  %s13 = ssub.s32 1, %s11
  %s14 = scalar_select 0, %s13, %s11
  loop: start=0, step=1, limit=4
  $region2: #{fpn_cat3x3_head_forward.3} parent=0 // loop_pre_header
    _
  $region3: #{fpn_cat3x3_head_forward.3} parent=0 // loop_header
    %s16 = sphi 0, %s20
    %p17 = scmp.ge.s32.totalorder %s16, 4
    %s26 = sphi 0, %s28
    %s29 = sphi 0, %s26
    %s30 = sphi 0, %s29
    %s46 = sphi 0, %s30
    %s52 = sphi 0, %s54
    %s55 = sphi 0, %s52
    %s56 = sphi 0, %s55
    %s72 = sphi 0, %s56
    %s76 = sphi 0, %s76
    %s78 = sphi 0, %s76
    %s79 = sphi 0, %s78
    %s93 = sphi 0, %s79
    %s97 = sphi 0, %s97
    %s99 = sphi 0, %s97
    %s100 = sphi 0, %s99
    %s114 = sphi 0, %s100
    %s118 = sphi 0, %s118
    %s120 = sphi 0, %s118
    %s121 = sphi 0, %s120
    %s135 = sphi 0, %s121
    %s139 = sphi 0, %s139
    %s141 = sphi 0, %s139
    %s142 = sphi 0, %s141
    %s156 = sphi 0, %s142
    %s160 = sphi 0, %s160
    %s162 = sphi 0, %s160
    %s163 = sphi 0, %s162
    %s177 = sphi 0, %s163
    %s181 = sphi 0, %s181
    %s183 = sphi 0, %s181
    %s184 = sphi 0, %s183
    %s198 = sphi 0, %s184
    %s202 = sphi 0, %s202
    %s204 = sphi 0, %s202
    %s205 = sphi 0, %s204
    %s219 = sphi 0, %s205
    %s223 = sphi 0, %s223
    %s225 = sphi 0, %s223
    %s226 = sphi 0, %s225
    %s240 = sphi 0, %s226
    %s246 = sphi 0, %s248
    %s249 = sphi 0, %s246
    %s250 = sphi 0, %s249
    %s266 = sphi 0, %s250
  $region4: #{fpn_cat3x3_head_forward.3} parent=0 // loop_header_branch
    %19 = sbr.rel (%p17) target = $region8
  $region5: #{fpn_cat3x3_head_forward.3} parent=0 // loop_body
    %s21 = ssub.s32 %s16, 1
    %s22 = ssub.s32 %s16, 2
    %s23 = sadd.s32 %s16, 1
    %s24 = ssub.s32 %s16, %s23
    %p25 = scmp.eq.s32.totalorder %s24, 0
    %s27 = sadd.s32 %s26, 1
    %s28 = scalar_select %p25, %s26, %s27
    %p31 = pneg %p25
    %p32 = scmp.eq.s32.totalorder %s16, 1
    %p33 = por %p31, %p32
    %p34 = scmp.ne.s32.totalorder %s26, %s29
    %p35 = scmp.eq.s32.totalorder %s16, 0
    %p36 = por %p34, %p35
    %p37 = scmp.ne.s32.totalorder %s26, %s29
    %p38 = scmp.eq.s32.totalorder %s21, 1
    %p39 = por %p37, %p38
    %p40 = scmp.ne.s32.totalorder %s29, %s30
    %p41 = scmp.eq.s32.totalorder %s21, 0
    %p42 = por %p40, %p41
    %p43 = scmp.ne.s32.totalorder %s29, %s30
    %p44 = scmp.eq.s32.totalorder %s22, 1
    %p45 = por %p43, %p44
    %p47 = scmp.ne.s32.totalorder %s30, %s46
    %p48 = scmp.eq.s32.totalorder %s22, 0
    %p49 = por %p47, %p48
    %s50 = ssub.s32 %s16, %s23
    %p51 = scmp.eq.s32.totalorder %s50, 0
    %s53 = sadd.s32 %s52, 1
    %s54 = scalar_select %p51, %s52, %s53
    %p57 = pneg %p51
    %p58 = scmp.eq.s32.totalorder %s16, 1
    %p59 = por %p57, %p58
    %p60 = scmp.ne.s32.totalorder %s52, %s55
    %p61 = scmp.eq.s32.totalorder %s16, 0
    %p62 = por %p60, %p61
    %p63 = scmp.ne.s32.totalorder %s52, %s55
    %p64 = scmp.eq.s32.totalorder %s21, 1
    %p65 = por %p63, %p64
    %p66 = scmp.ne.s32.totalorder %s55, %s56
    %p67 = scmp.eq.s32.totalorder %s21, 0
    %p68 = por %p66, %p67
    %p69 = scmp.ne.s32.totalorder %s55, %s56
    %p70 = scmp.eq.s32.totalorder %s22, 1
    %p71 = por %p69, %p70
    %p73 = scmp.ne.s32.totalorder %s56, %s72
    %p74 = scmp.eq.s32.totalorder %s22, 0
    %p75 = por %p73, %p74
    %s77 = sadd.s32 %s76, 1
    %p80 = scmp.eq.s32.totalorder %s16, 1
    %p81 = scmp.ne.s32.totalorder %s76, %s78
    %p82 = scmp.eq.s32.totalorder %s16, 0
    %p83 = por %p81, %p82
    %p84 = scmp.ne.s32.totalorder %s76, %s78
    %p85 = scmp.eq.s32.totalorder %s21, 1
    %p86 = por %p84, %p85
    %p87 = scmp.ne.s32.totalorder %s78, %s79
    %p88 = scmp.eq.s32.totalorder %s21, 0
    %p89 = por %p87, %p88
    %p90 = scmp.ne.s32.totalorder %s78, %s79
    %p91 = scmp.eq.s32.totalorder %s22, 1
    %p92 = por %p90, %p91
    %p94 = scmp.ne.s32.totalorder %s79, %s93
    %p95 = scmp.eq.s32.totalorder %s22, 0
    %p96 = por %p94, %p95
    %s98 = sadd.s32 %s97, 1
    %p101 = scmp.eq.s32.totalorder %s16, 1
    %p102 = scmp.ne.s32.totalorder %s97, %s99
    %p103 = scmp.eq.s32.totalorder %s16, 0
    %p104 = por %p102, %p103
    %p105 = scmp.ne.s32.totalorder %s97, %s99
    %p106 = scmp.eq.s32.totalorder %s21, 1
    %p107 = por %p105, %p106
    %p108 = scmp.ne.s32.totalorder %s99, %s100
    %p109 = scmp.eq.s32.totalorder %s21, 0
    %p110 = por %p108, %p109
    %p111 = scmp.ne.s32.totalorder %s99, %s100
    %p112 = scmp.eq.s32.totalorder %s22, 1
    %p113 = por %p111, %p112
    %p115 = scmp.ne.s32.totalorder %s100, %s114
    %p116 = scmp.eq.s32.totalorder %s22, 0
    %p117 = por %p115, %p116
    %s119 = sadd.s32 %s118, 1
    %p122 = scmp.eq.s32.totalorder %s16, 1
    %p123 = scmp.ne.s32.totalorder %s118, %s120
    %p124 = scmp.eq.s32.totalorder %s16, 0
    %p125 = por %p123, %p124
    %p126 = scmp.ne.s32.totalorder %s118, %s120
    %p127 = scmp.eq.s32.totalorder %s21, 1
    %p128 = por %p126, %p127
    %p129 = scmp.ne.s32.totalorder %s120, %s121
    %p130 = scmp.eq.s32.totalorder %s21, 0
    %p131 = por %p129, %p130
    %p132 = scmp.ne.s32.totalorder %s120, %s121
    %p133 = scmp.eq.s32.totalorder %s22, 1
    %p134 = por %p132, %p133
    %p136 = scmp.ne.s32.totalorder %s121, %s135
    %p137 = scmp.eq.s32.totalorder %s22, 0
    %p138 = por %p136, %p137
    %s140 = sadd.s32 %s139, 1
    %p143 = scmp.eq.s32.totalorder %s16, 1
    %p144 = scmp.ne.s32.totalorder %s139, %s141
    %p145 = scmp.eq.s32.totalorder %s16, 0
    %p146 = por %p144, %p145
    %p147 = scmp.ne.s32.totalorder %s139, %s141
    %p148 = scmp.eq.s32.totalorder %s21, 1
    %p149 = por %p147, %p148
    %p150 = scmp.ne.s32.totalorder %s141, %s142
    %p151 = scmp.eq.s32.totalorder %s21, 0
    %p152 = por %p150, %p151
    %p153 = scmp.ne.s32.totalorder %s141, %s142
    %p154 = scmp.eq.s32.totalorder %s22, 1
    %p155 = por %p153, %p154
    %p157 = scmp.ne.s32.totalorder %s142, %s156
    %p158 = scmp.eq.s32.totalorder %s22, 0
    %p159 = por %p157, %p158
    %s161 = sadd.s32 %s160, 1
    %p164 = scmp.eq.s32.totalorder %s16, 1
    %p165 = scmp.ne.s32.totalorder %s160, %s162
    %p166 = scmp.eq.s32.totalorder %s16, 0
    %p167 = por %p165, %p166
    %p168 = scmp.ne.s32.totalorder %s160, %s162
    %p169 = scmp.eq.s32.totalorder %s21, 1
    %p170 = por %p168, %p169
    %p171 = scmp.ne.s32.totalorder %s162, %s163
    %p172 = scmp.eq.s32.totalorder %s21, 0
    %p173 = por %p171, %p172
    %p174 = scmp.ne.s32.totalorder %s162, %s163
    %p175 = scmp.eq.s32.totalorder %s22, 1
    %p176 = por %p174, %p175
    %p178 = scmp.ne.s32.totalorder %s163, %s177
    %p179 = scmp.eq.s32.totalorder %s22, 0
    %p180 = por %p178, %p179
    %s182 = sadd.s32 %s181, 1
    %p185 = scmp.eq.s32.totalorder %s16, 1
    %p186 = scmp.ne.s32.totalorder %s181, %s183
    %p187 = scmp.eq.s32.totalorder %s16, 0
    %p188 = por %p186, %p187
    %p189 = scmp.ne.s32.totalorder %s181, %s183
    %p190 = scmp.eq.s32.totalorder %s21, 1
    %p191 = por %p189, %p190
    %p192 = scmp.ne.s32.totalorder %s183, %s184
    %p193 = scmp.eq.s32.totalorder %s21, 0
    %p194 = por %p192, %p193
    %p195 = scmp.ne.s32.totalorder %s183, %s184
    %p196 = scmp.eq.s32.totalorder %s22, 1
    %p197 = por %p195, %p196
    %p199 = scmp.ne.s32.totalorder %s184, %s198
    %p200 = scmp.eq.s32.totalorder %s22, 0
    %p201 = por %p199, %p200
    %s203 = sadd.s32 %s202, 1
    %p206 = scmp.eq.s32.totalorder %s16, 1
    %p207 = scmp.ne.s32.totalorder %s202, %s204
    %p208 = scmp.eq.s32.totalorder %s16, 0
    %p209 = por %p207, %p208
    %p210 = scmp.ne.s32.totalorder %s202, %s204
    %p211 = scmp.eq.s32.totalorder %s21, 1
    %p212 = por %p210, %p211
    %p213 = scmp.ne.s32.totalorder %s204, %s205
    %p214 = scmp.eq.s32.totalorder %s21, 0
    %p215 = por %p213, %p214
    %p216 = scmp.ne.s32.totalorder %s204, %s205
    %p217 = scmp.eq.s32.totalorder %s22, 1
    %p218 = por %p216, %p217
    %p220 = scmp.ne.s32.totalorder %s205, %s219
    %p221 = scmp.eq.s32.totalorder %s22, 0
    %p222 = por %p220, %p221
    %s224 = sadd.s32 %s223, 1
    %p227 = scmp.eq.s32.totalorder %s16, 1
    %p228 = scmp.ne.s32.totalorder %s223, %s225
    %p229 = scmp.eq.s32.totalorder %s16, 0
    %p230 = por %p228, %p229
    %p231 = scmp.ne.s32.totalorder %s223, %s225
    %p232 = scmp.eq.s32.totalorder %s21, 1
    %p233 = por %p231, %p232
    %p234 = scmp.ne.s32.totalorder %s225, %s226
    %p235 = scmp.eq.s32.totalorder %s21, 0
    %p236 = por %p234, %p235
    %p237 = scmp.ne.s32.totalorder %s225, %s226
    %p238 = scmp.eq.s32.totalorder %s22, 1
    %p239 = por %p237, %p238
    %p241 = scmp.ne.s32.totalorder %s226, %s240
    %p242 = scmp.eq.s32.totalorder %s22, 0
    %p243 = por %p241, %p242
    %s244 = ssub.s32 %s16, %s23
    %p245 = scmp.eq.s32.totalorder %s244, 0
    %s247 = sadd.s32 %s246, 1
    %s248 = scalar_select %p245, %s246, %s247
    %p251 = pneg %p245
    %p252 = scmp.eq.s32.totalorder %s16, 1
    %p253 = por %p251, %p252
    %p254 = scmp.ne.s32.totalorder %s246, %s249
    %p255 = scmp.eq.s32.totalorder %s16, 0
    %p256 = por %p254, %p255
    %p257 = scmp.ne.s32.totalorder %s246, %s249
    %p258 = scmp.eq.s32.totalorder %s21, 1
    %p259 = por %p257, %p258
    %p260 = scmp.ne.s32.totalorder %s249, %s250
    %p261 = scmp.eq.s32.totalorder %s21, 0
    %p262 = por %p260, %p261
    %p263 = scmp.ne.s32.totalorder %s249, %s250
    %p264 = scmp.eq.s32.totalorder %s22, 1
    %p265 = por %p263, %p264
    %p267 = scmp.ne.s32.totalorder %s250, %s266
    %p268 = scmp.eq.s32.totalorder %s22, 0
    %p269 = por %p267, %p268
    %p270 = scmp.le.s32.totalorder 1, %s16
    %p271 = scmp.lt.s32.totalorder %s16, 3
    %p272 = pnand %p270, %p271
    %p273 = pneg %p272
    // Predicated region
    $region9: #{fpn_cat3x3_head_forward.3} parent=5 // pred_check
      _
    $region10: #{fpn_cat3x3_head_forward.3} parent=5 // pred_check_branch
      %275 = sbr.rel (%p272) target = $region12
    $region11: #{fpn_cat3x3_head_forward.3} parent=5 // pred_region
      %s276 = ssub.s32 %s16, 1
      // Predicated region
      $region13: #{fpn_cat3x3_head_forward.3} parent=11 // pred_check
        %p277 = pneg %p89
      $region14: #{fpn_cat3x3_head_forward.3} parent=11 // pred_check_branch
        %279 = sbr.rel (%p277) target = $region16
      $region15: #{fpn_cat3x3_head_forward.3} parent=11 // pred_region
        _
      $region16: #{fpn_cat3x3_head_forward.3} parent=11 // pred_fallthru
        _
      // Predicated region
      $region17: #{fpn_cat3x3_head_forward.3} parent=11 // pred_check
        %p280 = pneg %p110
      $region18: #{fpn_cat3x3_head_forward.3} parent=11 // pred_check_branch
        %282 = sbr.rel (%p280) target = $region20
      $region19: #{fpn_cat3x3_head_forward.3} parent=11 // pred_region
        _
      $region20: #{fpn_cat3x3_head_forward.3} parent=11 // pred_fallthru
        _
      // Predicated region
      $region21: #{fpn_cat3x3_head_forward.3} parent=11 // pred_check
        %p283 = pneg %p131
      $region22: #{fpn_cat3x3_head_forward.3} parent=11 // pred_check_branch
        %285 = sbr.rel (%p283) target = $region24
      $region23: #{fpn_cat3x3_head_forward.3} parent=11 // pred_region
        _
      $region24: #{fpn_cat3x3_head_forward.3} parent=11 // pred_fallthru
        _
      // Predicated region
      $region25: #{fpn_cat3x3_head_forward.3} parent=11 // pred_check
        %p286 = pneg %p152
      $region26: #{fpn_cat3x3_head_forward.3} parent=11 // pred_check_branch
        %288 = sbr.rel (%p286) target = $region28
      $region27: #{fpn_cat3x3_head_forward.3} parent=11 // pred_region
        _
      $region28: #{fpn_cat3x3_head_forward.3} parent=11 // pred_fallthru
        _
      // Predicated region
      $region29: #{fpn_cat3x3_head_forward.3} parent=11 // pred_check
        %p289 = pneg %p173
      $region30: #{fpn_cat3x3_head_forward.3} parent=11 // pred_check_branch
        %291 = sbr.rel (%p289) target = $region32
      $region31: #{fpn_cat3x3_head_forward.3} parent=11 // pred_region
        _
      $region32: #{fpn_cat3x3_head_forward.3} parent=11 // pred_fallthru
        _
      // Predicated region
      $region33: #{fpn_cat3x3_head_forward.3} parent=11 // pred_check
        %p292 = pneg %p194
      $region34: #{fpn_cat3x3_head_forward.3} parent=11 // pred_check_branch
        %294 = sbr.rel (%p292) target = $region36
      $region35: #{fpn_cat3x3_head_forward.3} parent=11 // pred_region
        _
      $region36: #{fpn_cat3x3_head_forward.3} parent=11 // pred_fallthru
        _
      // Predicated region
      $region37: #{fpn_cat3x3_head_forward.3} parent=11 // pred_check
        %p295 = pneg %p215
      $region38: #{fpn_cat3x3_head_forward.3} parent=11 // pred_check_branch
        %297 = sbr.rel (%p295) target = $region40
      $region39: #{fpn_cat3x3_head_forward.3} parent=11 // pred_region
        _
      $region40: #{fpn_cat3x3_head_forward.3} parent=11 // pred_fallthru
        _
      // Predicated region
      $region41: #{fpn_cat3x3_head_forward.3} parent=11 // pred_check
        %p298 = pneg %p236
      $region42: #{fpn_cat3x3_head_forward.3} parent=11 // pred_check_branch
        %300 = sbr.rel (%p298) target = $region44
      $region43: #{fpn_cat3x3_head_forward.3} parent=11 // pred_region
        _
      $region44: #{fpn_cat3x3_head_forward.3} parent=11 // pred_fallthru
        _
    $region12: #{fpn_cat3x3_head_forward.3} parent=5 // pred_fallthru
      _
    %p301 = scmp.lt.s32.totalorder %s16, 2
    // Predicated region
    $region45: #{fpn_cat3x3_head_forward.3} parent=5 // pred_check
      %p302 = pneg %p301
    $region46: #{fpn_cat3x3_head_forward.3} parent=5 // pred_check_branch
      %304 = sbr.rel (%p302) target = $region48
    $region47: #{fpn_cat3x3_head_forward.3} parent=5 // pred_region
      // Predicated region
      $region49: #{fpn_cat3x3_head_forward.3} parent=47 // pred_check
        %p305 = pneg %p36
      $region50: #{fpn_cat3x3_head_forward.3} parent=47 // pred_check_branch
        %307 = sbr.rel (%p305) target = $region52
      $region51: #{fpn_cat3x3_head_forward.3} parent=47 // pred_region
        %p308 = scmp.lt.s32.totalorder %s16, 1
        %s309 = scalar_select %p308, %s16, 1
        %s310 = smul.addr %s309, 128
        %s311 = smul.addr %s310, 8
        %s312 = scalar_lea.vmem %s0, %s311
      $region52: #{fpn_cat3x3_head_forward.3} parent=47 // pred_fallthru
        _
      // Predicated region
      $region53: #{fpn_cat3x3_head_forward.3} parent=47 // pred_check
        %p313 = pneg %p62
      $region54: #{fpn_cat3x3_head_forward.3} parent=47 // pred_check_branch
        %315 = sbr.rel (%p313) target = $region56
      $region55: #{fpn_cat3x3_head_forward.3} parent=47 // pred_region
        %p316 = scmp.lt.s32.totalorder %s16, 1
        %s317 = scalar_select %p316, %s16, 1
        %s318 = smul.addr %s317, 2
        %s319 = smul.addr %s318, 4
        %s320 = scalar_lea.vmem %s1, %s319
      $region56: #{fpn_cat3x3_head_forward.3} parent=47 // pred_fallthru
        _
    $region48: #{fpn_cat3x3_head_forward.3} parent=5 // pred_fallthru
      _
    %p321 = scmp.le.s32.totalorder 1, %s16
    %p322 = scmp.lt.s32.totalorder %s16, 3
    %p323 = pnand %p321, %p322
    %p324 = pneg %p323
    // Predicated region
    $region57: #{fpn_cat3x3_head_forward.3} parent=5 // pred_check
      _
    $region58: #{fpn_cat3x3_head_forward.3} parent=5 // pred_check_branch
      %326 = sbr.rel (%p323) target = $region60
    $region59: #{fpn_cat3x3_head_forward.3} parent=5 // pred_region
      %s327 = ssub.s32 %s16, 1
      %p328 = scmp.lt.s32.totalorder %s21, 1
      %s329 = scalar_select %p328, %s21, 1
      %s330 = smul.addr %s329, 128
      %s331 = smul.addr %s330, 8
      %s332 = scalar_lea.vmem %s0, %s331
      %p333 = pneg %p42
      %p334 = pneg %p39
      %p335 = scmp.lt.s32.totalorder %s21, 1
      %s336 = scalar_select %p335, %s21, 1
      %s337 = smul.addr %s336, 2
      %s338 = smul.addr %s337, 4
      %s339 = scalar_lea.vmem %s1, %s338
      %p340 = pneg %p68
      %p341 = pneg %p65
      %p342 = pneg %p89
      %p343 = pneg %p86
      %p344 = pneg %p110
      %p345 = pneg %p107
      %p346 = pneg %p131
      %p347 = pneg %p128
      %p348 = pneg %p152
      %p349 = pneg %p149
      %p350 = pneg %p173
      %p351 = pneg %p170
      %p352 = pneg %p194
      %p353 = pneg %p191
      %p354 = pneg %p215
      %p355 = pneg %p212
      %p356 = pneg %p236
      %p357 = pneg %p233
      %p358 = pneg %p262
      %p359 = pneg %p259
      %p360 = scmp.lt.s32.totalorder %s21, 1
      %s361 = scalar_select %p360, %s21, 1
      %s362 = smul.addr %s361, 2
      %s363 = smul.addr %s362, 8
      %s364 = scalar_lea.vmem %s10, %s363
      %p365 = scmp.lt.s32.totalorder %s21, 1
      %s366 = scalar_select %p365, %s21, 1
      %s367 = smul.addr %s366, 128
      %s368 = smul.addr %s367, 8
      %s369 = scalar_lea.vmem %s0, %s368
      %p370 = scmp.lt.s32.totalorder %s21, 1
      %s371 = scalar_select %p370, %s21, 1
      %s372 = smul.addr %s371, 2
      %s373 = smul.addr %s372, 4
      %s374 = scalar_lea.vmem %s1, %s373
      %p375 = scmp.lt.s32.totalorder %s21, 1
      %s376 = scalar_select %p375, %s21, 1
      %s377 = smul.addr %s376, 2
      %s378 = smul.addr %s377, 8
      %s379 = scalar_lea.vmem %s10, %s378
      %v381 = vld [vmem:[%s369] sm:$0xff]
      %v382 = vld [vmem:[%s369 + $0x8] sm:$0xff]
      %v383 = vld [vmem:[%s369 + $0x10] sm:$0xff]
      %v384 = vld [vmem:[%s369 + $0x18] sm:$0xff]
      %v385 = vld [vmem:[%s369 + $0x20] sm:$0xff]
      %v386 = vld [vmem:[%s369 + $0x28] sm:$0xff]
      %v387 = vld [vmem:[%s369 + $0x30] sm:$0xff]
      %v388 = vld [vmem:[%s369 + $0x38] sm:$0xff]
      %v389 = vld [vmem:[%s369 + $0x40] sm:$0xff]
      %v390 = vld [vmem:[%s369 + $0x48] sm:$0xff]
      %v391 = vld [vmem:[%s369 + $0x50] sm:$0xff]
      %v392 = vld [vmem:[%s369 + $0x58] sm:$0xff]
      %v393 = vld [vmem:[%s369 + $0x60] sm:$0xff]
      %v394 = vld [vmem:[%s369 + $0x68] sm:$0xff]
      %v395 = vld [vmem:[%s369 + $0x70] sm:$0xff]
      %v396 = vld [vmem:[%s369 + $0x78] sm:$0xff]
      %v397 = vld [vmem:[%s369 + $0x80] sm:$0xff]
      %v398 = vld [vmem:[%s369 + $0x88] sm:$0xff]
      %v399 = vld [vmem:[%s369 + $0x90] sm:$0xff]
      %v400 = vld [vmem:[%s369 + $0x98] sm:$0xff]
      %v401 = vld [vmem:[%s369 + $0xa0] sm:$0xff]
      %v402 = vld [vmem:[%s369 + $0xa8] sm:$0xff]
      %v403 = vld [vmem:[%s369 + $0xb0] sm:$0xff]
      %v404 = vld [vmem:[%s369 + $0xb8] sm:$0xff]
      %v405 = vld [vmem:[%s369 + $0xc0] sm:$0xff]
      %v406 = vld [vmem:[%s369 + $0xc8] sm:$0xff]
      %v407 = vld [vmem:[%s369 + $0xd0] sm:$0xff]
      %v408 = vld [vmem:[%s369 + $0xd8] sm:$0xff]
      %v409 = vld [vmem:[%s369 + $0xe0] sm:$0xff]
      %v410 = vld [vmem:[%s369 + $0xe8] sm:$0xff]
      %v411 = vld [vmem:[%s369 + $0xf0] sm:$0xff]
      %v412 = vld [vmem:[%s369 + $0xf8] sm:$0xff]
      %v413 = vld [vmem:[%s369 + $0x100] sm:$0xff]
      %v414 = vld [vmem:[%s369 + $0x108] sm:$0xff]
      %v415 = vld [vmem:[%s369 + $0x110] sm:$0xff]
      %v416 = vld [vmem:[%s369 + $0x118] sm:$0xff]
      %v417 = vld [vmem:[%s369 + $0x120] sm:$0xff]
      %v418 = vld [vmem:[%s369 + $0x128] sm:$0xff]
      %v419 = vld [vmem:[%s369 + $0x130] sm:$0xff]
      %v420 = vld [vmem:[%s369 + $0x138] sm:$0xff]
      %v421 = vld [vmem:[%s369 + $0x140] sm:$0xff]
      %v422 = vld [vmem:[%s369 + $0x148] sm:$0xff]
      %v423 = vld [vmem:[%s369 + $0x150] sm:$0xff]
      %v424 = vld [vmem:[%s369 + $0x158] sm:$0xff]
      %v425 = vld [vmem:[%s369 + $0x160] sm:$0xff]
      %v426 = vld [vmem:[%s369 + $0x168] sm:$0xff]
      %v427 = vld [vmem:[%s369 + $0x170] sm:$0xff]
      %v428 = vld [vmem:[%s369 + $0x178] sm:$0xff]
      %v429 = vld [vmem:[%s369 + $0x180] sm:$0xff]
      %v430 = vld [vmem:[%s369 + $0x188] sm:$0xff]
      %v431 = vld [vmem:[%s369 + $0x190] sm:$0xff]
      %v432 = vld [vmem:[%s369 + $0x198] sm:$0xff]
      %v433 = vld [vmem:[%s369 + $0x1a0] sm:$0xff]
      %v434 = vld [vmem:[%s369 + $0x1a8] sm:$0xff]
      %v435 = vld [vmem:[%s369 + $0x1b0] sm:$0xff]
      %v436 = vld [vmem:[%s369 + $0x1b8] sm:$0xff]
      %v437 = vld [vmem:[%s369 + $0x1c0] sm:$0xff]
      %v438 = vld [vmem:[%s369 + $0x1c8] sm:$0xff]
      %v439 = vld [vmem:[%s369 + $0x1d0] sm:$0xff]
      %v440 = vld [vmem:[%s369 + $0x1d8] sm:$0xff]
      %v441 = vld [vmem:[%s369 + $0x1e0] sm:$0xff]
      %v442 = vld [vmem:[%s369 + $0x1e8] sm:$0xff]
      %v443 = vld [vmem:[%s369 + $0x1f0] sm:$0xff]
      %v444 = vld [vmem:[%s369 + $0x1f8] sm:$0xff]
      %v445 = vld [vmem:[%s369 + $0x200] sm:$0xff]
      %v446 = vld [vmem:[%s369 + $0x208] sm:$0xff]
      %v447 = vld [vmem:[%s369 + $0x210] sm:$0xff]
      %v448 = vld [vmem:[%s369 + $0x218] sm:$0xff]
      %v449 = vld [vmem:[%s369 + $0x220] sm:$0xff]
      %v450 = vld [vmem:[%s369 + $0x228] sm:$0xff]
      %v451 = vld [vmem:[%s369 + $0x230] sm:$0xff]
      %v452 = vld [vmem:[%s369 + $0x238] sm:$0xff]
      %v453 = vld [vmem:[%s369 + $0x240] sm:$0xff]
      %v454 = vld [vmem:[%s369 + $0x248] sm:$0xff]
      %v455 = vld [vmem:[%s369 + $0x250] sm:$0xff]
      %v456 = vld [vmem:[%s369 + $0x258] sm:$0xff]
      %v457 = vld [vmem:[%s369 + $0x260] sm:$0xff]
      %v458 = vld [vmem:[%s369 + $0x268] sm:$0xff]
      %v459 = vld [vmem:[%s369 + $0x270] sm:$0xff]
      %v460 = vld [vmem:[%s369 + $0x278] sm:$0xff]
      %v461 = vld [vmem:[%s369 + $0x280] sm:$0xff]
      %v462 = vld [vmem:[%s369 + $0x288] sm:$0xff]
      %v463 = vld [vmem:[%s369 + $0x290] sm:$0xff]
      %v464 = vld [vmem:[%s369 + $0x298] sm:$0xff]
      %v465 = vld [vmem:[%s369 + $0x2a0] sm:$0xff]
      %v466 = vld [vmem:[%s369 + $0x2a8] sm:$0xff]
      %v467 = vld [vmem:[%s369 + $0x2b0] sm:$0xff]
      %v468 = vld [vmem:[%s369 + $0x2b8] sm:$0xff]
      %v469 = vld [vmem:[%s369 + $0x2c0] sm:$0xff]
      %v470 = vld [vmem:[%s369 + $0x2c8] sm:$0xff]
      %v471 = vld [vmem:[%s369 + $0x2d0] sm:$0xff]
      %v472 = vld [vmem:[%s369 + $0x2d8] sm:$0xff]
      %v473 = vld [vmem:[%s369 + $0x2e0] sm:$0xff]
      %v474 = vld [vmem:[%s369 + $0x2e8] sm:$0xff]
      %v475 = vld [vmem:[%s369 + $0x2f0] sm:$0xff]
      %v476 = vld [vmem:[%s369 + $0x2f8] sm:$0xff]
      %v477 = vld [vmem:[%s369 + $0x300] sm:$0xff]
      %v478 = vld [vmem:[%s369 + $0x308] sm:$0xff]
      %v479 = vld [vmem:[%s369 + $0x310] sm:$0xff]
      %v480 = vld [vmem:[%s369 + $0x318] sm:$0xff]
      %v481 = vld [vmem:[%s369 + $0x320] sm:$0xff]
      %v482 = vld [vmem:[%s369 + $0x328] sm:$0xff]
      %v483 = vld [vmem:[%s369 + $0x330] sm:$0xff]
      %v484 = vld [vmem:[%s369 + $0x338] sm:$0xff]
      %v485 = vld [vmem:[%s369 + $0x340] sm:$0xff]
      %v486 = vld [vmem:[%s369 + $0x348] sm:$0xff]
      %v487 = vld [vmem:[%s369 + $0x350] sm:$0xff]
      %v488 = vld [vmem:[%s369 + $0x358] sm:$0xff]
      %v489 = vld [vmem:[%s369 + $0x360] sm:$0xff]
      %v490 = vld [vmem:[%s369 + $0x368] sm:$0xff]
      %v491 = vld [vmem:[%s369 + $0x370] sm:$0xff]
      %v492 = vld [vmem:[%s369 + $0x378] sm:$0xff]
      %v493 = vld [vmem:[%s369 + $0x380] sm:$0xff]
      %v494 = vld [vmem:[%s369 + $0x388] sm:$0xff]
      %v495 = vld [vmem:[%s369 + $0x390] sm:$0xff]
      %v496 = vld [vmem:[%s369 + $0x398] sm:$0xff]
      %v497 = vld [vmem:[%s369 + $0x3a0] sm:$0xff]
      %v498 = vld [vmem:[%s369 + $0x3a8] sm:$0xff]
      %v499 = vld [vmem:[%s369 + $0x3b0] sm:$0xff]
      %v500 = vld [vmem:[%s369 + $0x3b8] sm:$0xff]
      %v501 = vld [vmem:[%s369 + $0x3c0] sm:$0xff]
      %v502 = vld [vmem:[%s369 + $0x3c8] sm:$0xff]
      %v503 = vld [vmem:[%s369 + $0x3d0] sm:$0xff]
      %v504 = vld [vmem:[%s369 + $0x3d8] sm:$0xff]
      %v505 = vld [vmem:[%s369 + $0x3e0] sm:$0xff]
      %v506 = vld [vmem:[%s369 + $0x3e8] sm:$0xff]
      %v507 = vld [vmem:[%s369 + $0x3f0] sm:$0xff]
      %v508 = vld [vmem:[%s369 + $0x3f8] sm:$0xff]
      %v509 = vpack.c.bf16 %v383, %v381
      %v510 = vpack.c.bf16 %v384, %v382
      %v511 = vpack.c.bf16 %v387, %v385
      %v512 = vpack.c.bf16 %v388, %v386
      %v513 = vpack.c.bf16 %v391, %v389
      %v514 = vpack.c.bf16 %v392, %v390
      %v515 = vpack.c.bf16 %v395, %v393
      %v516 = vpack.c.bf16 %v396, %v394
      %v517 = vpack.c.bf16 %v399, %v397
      %v518 = vpack.c.bf16 %v400, %v398
      %v519 = vpack.c.bf16 %v403, %v401
      %v520 = vpack.c.bf16 %v404, %v402
      %v521 = vpack.c.bf16 %v407, %v405
      %v522 = vpack.c.bf16 %v408, %v406
      %v523 = vpack.c.bf16 %v411, %v409
      %v524 = vpack.c.bf16 %v412, %v410
      %v525 = vpack.c.bf16 %v415, %v413
      %v526 = vpack.c.bf16 %v416, %v414
      %v527 = vpack.c.bf16 %v419, %v417
      %v528 = vpack.c.bf16 %v420, %v418
      %v529 = vpack.c.bf16 %v423, %v421
      %v530 = vpack.c.bf16 %v424, %v422
      %v531 = vpack.c.bf16 %v427, %v425
      %v532 = vpack.c.bf16 %v428, %v426
      %v533 = vpack.c.bf16 %v431, %v429
      %v534 = vpack.c.bf16 %v432, %v430
      %v535 = vpack.c.bf16 %v435, %v433
      %v536 = vpack.c.bf16 %v436, %v434
      %v537 = vpack.c.bf16 %v439, %v437
      %v538 = vpack.c.bf16 %v440, %v438
      %v539 = vpack.c.bf16 %v443, %v441
      %v540 = vpack.c.bf16 %v444, %v442
      %v541 = vpack.c.bf16 %v447, %v445
      %v542 = vpack.c.bf16 %v448, %v446
      %v543 = vpack.c.bf16 %v451, %v449
      %v544 = vpack.c.bf16 %v452, %v450
      %v545 = vpack.c.bf16 %v455, %v453
      %v546 = vpack.c.bf16 %v456, %v454
      %v547 = vpack.c.bf16 %v459, %v457
      %v548 = vpack.c.bf16 %v460, %v458
      %v549 = vpack.c.bf16 %v463, %v461
      %v550 = vpack.c.bf16 %v464, %v462
      %v551 = vpack.c.bf16 %v467, %v465
      %v552 = vpack.c.bf16 %v468, %v466
      %v553 = vpack.c.bf16 %v471, %v469
      %v554 = vpack.c.bf16 %v472, %v470
      %v555 = vpack.c.bf16 %v475, %v473
      %v556 = vpack.c.bf16 %v476, %v474
      %v557 = vpack.c.bf16 %v479, %v477
      %v558 = vpack.c.bf16 %v480, %v478
      %v559 = vpack.c.bf16 %v483, %v481
      %v560 = vpack.c.bf16 %v484, %v482
      %v561 = vpack.c.bf16 %v487, %v485
      %v562 = vpack.c.bf16 %v488, %v486
      %v563 = vpack.c.bf16 %v491, %v489
      %v564 = vpack.c.bf16 %v492, %v490
      %v565 = vpack.c.bf16 %v495, %v493
      %v566 = vpack.c.bf16 %v496, %v494
      %v567 = vpack.c.bf16 %v499, %v497
      %v568 = vpack.c.bf16 %v500, %v498
      %v569 = vpack.c.bf16 %v503, %v501
      %v570 = vpack.c.bf16 %v504, %v502
      %v571 = vpack.c.bf16 %v507, %v505
      %v572 = vpack.c.bf16 %v508, %v506
      %v573 = vld [vmem:[%s2] sm:$0xff]
      %v574 = vld [vmem:[%s2 + $0x8] sm:$0xff]
      %v575 = vld [vmem:[%s2 + $0x10] sm:$0xff]
      %v576 = vld [vmem:[%s2 + $0x18] sm:$0xff]
      %v577 = vld [vmem:[%s3] sm:$0xff]
      %v578 = vld [vmem:[%s3 + $0x8] sm:$0xff]
      %580 = vset.pattern.permute.xlu0 0
      %581 = vperm.xlu0 %580, %v577
      %v582 = vpop.permute.xlu0 %581
      %585 = vset.pattern.permute.xlu0 0
      %586 = vperm.xlu0 %585, %v578
      %v587 = vpop.permute.xlu0 %586
      %v593 = vunpack.c.l.b16 %v573
      %v594 = vunpack.c.h.b16 %v573
      %v595 = vunpack.c.l.b16 %v574
      %v596 = vunpack.c.h.b16 %v574
      %v597 = vunpack.c.l.b16 %v575
      %v598 = vunpack.c.h.b16 %v575
      %v599 = vunpack.c.l.b16 %v576
      %v600 = vunpack.c.h.b16 %v576
      %v601 = vpack.c.b16 %v597, %v593
      %v602 = vpack.c.b16 %v598, %v594
      %v603 = vpack.c.b16 %v599, %v595
      %v604 = vpack.c.b16 %v600, %v596
      %609 = vmatpush.bf16.msra.mxu0 %v523
      %610 = vmatpush.bf16.msra.mxu0 %v521
      %611 = vmatpush.bf16.msra.mxu0 %v519
      %612 = vmatpush.bf16.msra.mxu0 %v517
      %613 = vmatpush.bf16.msra.mxu0 %v515
      %614 = vmatpush.bf16.msra.mxu0 %v513
      %615 = vmatpush.bf16.msra.mxu0 %v511
      %616 = vmatpush.bf16.msra.mxu0 %v509
      %617 = vmatmul.bf16.gmra.mxu0 %v601
      %v618 = vpop.f32.mrf.mxu0
      %v619 = vadd.f32 %v582, %v618
      %v620 = vpop.f32.mrf.mxu0
      %v621 = vadd.f32 %v587, %v620
      %622 = vdwg.mxu0
      %623 = vmatpush.bf16.msra.mxu0 %v539
      %624 = vmatpush.bf16.msra.mxu0 %v537
      %625 = vmatpush.bf16.msra.mxu0 %v535
      %626 = vmatpush.bf16.msra.mxu0 %v533
      %627 = vmatpush.bf16.msra.mxu0 %v531
      %628 = vmatpush.bf16.msra.mxu0 %v529
      %629 = vmatpush.bf16.msra.mxu0 %v527
      %630 = vmatpush.bf16.msra.mxu0 %v525
      %631 = vmatmul.bf16.gmra.mxu0 %v602
      %v632 = vpop.f32.mrf.mxu0
      %v633 = vadd.f32 %v619, %v632
      %v634 = vpop.f32.mrf.mxu0
      %v635 = vadd.f32 %v621, %v634
      %636 = vdwg.mxu0
      %637 = vmatpush.bf16.msra.mxu0 %v555
      %638 = vmatpush.bf16.msra.mxu0 %v553
      %639 = vmatpush.bf16.msra.mxu0 %v551
      %640 = vmatpush.bf16.msra.mxu0 %v549
      %641 = vmatpush.bf16.msra.mxu0 %v547
      %642 = vmatpush.bf16.msra.mxu0 %v545
      %643 = vmatpush.bf16.msra.mxu0 %v543
      %644 = vmatpush.bf16.msra.mxu0 %v541
      %645 = vmatmul.bf16.gmra.mxu0 %v603
      %v646 = vpop.f32.mrf.mxu0
      %v647 = vadd.f32 %v633, %v646
      %v648 = vpop.f32.mrf.mxu0
      %v649 = vadd.f32 %v635, %v648
      %650 = vdwg.mxu0
      %651 = vmatpush.bf16.msra.mxu0 %v571
      %652 = vmatpush.bf16.msra.mxu0 %v569
      %653 = vmatpush.bf16.msra.mxu0 %v567
      %654 = vmatpush.bf16.msra.mxu0 %v565
      %655 = vmatpush.bf16.msra.mxu0 %v563
      %656 = vmatpush.bf16.msra.mxu0 %v561
      %657 = vmatpush.bf16.msra.mxu0 %v559
      %658 = vmatpush.bf16.msra.mxu0 %v557
      %659 = vmatmul.bf16.gmra.mxu0 %v604
      %v660 = vpop.f32.mrf.mxu0
      %v661 = vadd.f32 %v647, %v660
      %v662 = vpop.f32.mrf.mxu0
      %v663 = vadd.f32 %v649, %v662
      %664 = vdwg.mxu0
      %665 = vmatpush.bf16.msra.mxu0 %v524
      %666 = vmatpush.bf16.msra.mxu0 %v522
      %667 = vmatpush.bf16.msra.mxu0 %v520
      %668 = vmatpush.bf16.msra.mxu0 %v518
      %669 = vmatpush.bf16.msra.mxu0 %v516
      %670 = vmatpush.bf16.msra.mxu0 %v514
      %671 = vmatpush.bf16.msra.mxu0 %v512
      %672 = vmatpush.bf16.msra.mxu0 %v510
      %673 = vmatmul.bf16.gmra.mxu0 %v601
      %v674 = vpop.f32.mrf.mxu0
      %v675 = vadd.f32 %v582, %v674
      %v676 = vpop.f32.mrf.mxu0
      %v677 = vadd.f32 %v587, %v676
      %678 = vdwg.mxu0
      %679 = vmatpush.bf16.msra.mxu0 %v540
      %680 = vmatpush.bf16.msra.mxu0 %v538
      %681 = vmatpush.bf16.msra.mxu0 %v536
      %682 = vmatpush.bf16.msra.mxu0 %v534
      %683 = vmatpush.bf16.msra.mxu0 %v532
      %684 = vmatpush.bf16.msra.mxu0 %v530
      %685 = vmatpush.bf16.msra.mxu0 %v528
      %686 = vmatpush.bf16.msra.mxu0 %v526
      %687 = vmatmul.bf16.gmra.mxu0 %v602
      %v688 = vpop.f32.mrf.mxu0
      %v689 = vadd.f32 %v675, %v688
      %v690 = vpop.f32.mrf.mxu0
      %v691 = vadd.f32 %v677, %v690
      %692 = vdwg.mxu0
      %693 = vmatpush.bf16.msra.mxu0 %v556
      %694 = vmatpush.bf16.msra.mxu0 %v554
      %695 = vmatpush.bf16.msra.mxu0 %v552
      %696 = vmatpush.bf16.msra.mxu0 %v550
      %697 = vmatpush.bf16.msra.mxu0 %v548
      %698 = vmatpush.bf16.msra.mxu0 %v546
      %699 = vmatpush.bf16.msra.mxu0 %v544
      %700 = vmatpush.bf16.msra.mxu0 %v542
      %701 = vmatmul.bf16.gmra.mxu0 %v603
      %v702 = vpop.f32.mrf.mxu0
      %v703 = vadd.f32 %v689, %v702
      %v704 = vpop.f32.mrf.mxu0
      %v705 = vadd.f32 %v691, %v704
      %706 = vdwg.mxu0
      %707 = vmatpush.bf16.msra.mxu0 %v572
      %708 = vmatpush.bf16.msra.mxu0 %v570
      %709 = vmatpush.bf16.msra.mxu0 %v568
      %710 = vmatpush.bf16.msra.mxu0 %v566
      %711 = vmatpush.bf16.msra.mxu0 %v564
      %712 = vmatpush.bf16.msra.mxu0 %v562
      %713 = vmatpush.bf16.msra.mxu0 %v560
      %714 = vmatpush.bf16.msra.mxu0 %v558
      %715 = vmatmul.bf16.gmra.mxu0 %v604
      %v716 = vpop.f32.mrf.mxu0
      %v717 = vadd.f32 %v703, %v716
      %v718 = vpop.f32.mrf.mxu0
      %v719 = vadd.f32 %v705, %v718
      %720 = vdwg.mxu0
      %v721 = vmax.f32 %v661, 0.0
      %v722 = vmax.f32 %v717, 0.0
      %v723 = vmax.f32 %v663, 0.0
      %v724 = vmax.f32 %v719, 0.0
      %v725 = vld [vmem:[%s374] sm:$0xf]
      %v726 = vld [vmem:[%s374 + $0x4] sm:$0xf]
      %v727 = vld [vmem:[%s4] sm:$0xff]
      %v728 = vld [vmem:[%s4 + $0x8] sm:$0xff]
      %v729 = vld [vmem:[%s4 + $0x10] sm:$0xff]
      %v730 = vld [vmem:[%s4 + $0x18] sm:$0xff]
      %v731 = vld [vmem:[%s4 + $0x20] sm:$0xff]
      %v732 = vld [vmem:[%s4 + $0x28] sm:$0xff]
      %v733 = vld [vmem:[%s4 + $0x30] sm:$0xff]
      %v734 = vld [vmem:[%s4 + $0x38] sm:$0xff]
      %v737 = vunpack.c.l.b16 %v725
      %v738 = vunpack.c.l.b16 %v726
      %v739 = vpack.c.b16 %v738, %v737
      %v748 = vunpack.c.l.b16 %v727
      %v749 = vunpack.c.h.b16 %v727
      %v750 = vunpack.c.l.b16 %v728
      %v751 = vunpack.c.h.b16 %v728
      %v752 = vunpack.c.l.b16 %v729
      %v753 = vunpack.c.h.b16 %v729
      %v754 = vunpack.c.l.b16 %v730
      %v755 = vunpack.c.h.b16 %v730
      %v756 = vunpack.c.l.b16 %v731
      %v757 = vunpack.c.h.b16 %v731
      %v758 = vunpack.c.l.b16 %v732
      %v759 = vunpack.c.h.b16 %v732
      %v760 = vunpack.c.l.b16 %v733
      %v761 = vunpack.c.h.b16 %v733
      %v762 = vunpack.c.l.b16 %v734
      %v763 = vunpack.c.h.b16 %v734
      %v764 = vpack.c.b16 %v750, %v748
      %v765 = vpack.c.b16 %v751, %v749
      %v766 = vpack.c.b16 %v754, %v752
      %v767 = vpack.c.b16 %v755, %v753
      %v768 = vpack.c.b16 %v758, %v756
      %v769 = vpack.c.b16 %v759, %v757
      %v770 = vpack.c.b16 %v762, %v760
      %v771 = vpack.c.b16 %v763, %v761
      %vm780 = vcmask 523264
      %v782 = vsel %vm780, %v739, 0
      %784 = vmatpush.bf16.msra.mxu0 0
      %785 = vmatpush.bf16.msra.mxu0 0
      %786 = vmatpush.bf16.msra.mxu0 0
      %787 = vmatpush.bf16.msra.mxu0 0
      %788 = vmatpush.bf16.msra.mxu0 %v770
      %789 = vmatpush.bf16.msra.mxu0 %v768
      %790 = vmatpush.bf16.msra.mxu0 %v766
      %791 = vmatpush.bf16.msra.mxu0 %v764
      %792 = vmatmul.bf16.gmra.mxu0 %v782
      %v793 = vpop.f32.mrf.mxu0
      %v794 = vadd.f32 0.0, %v793
      %v795 = vpop.f32.mrf.mxu0
      %v796 = vadd.f32 0.0, %v795
      %797 = vdwg.mxu0
      %798 = vmatpush.bf16.msra.mxu0 0
      %799 = vmatpush.bf16.msra.mxu0 0
      %800 = vmatpush.bf16.msra.mxu0 0
      %801 = vmatpush.bf16.msra.mxu0 0
      %802 = vmatpush.bf16.msra.mxu0 %v771
      %803 = vmatpush.bf16.msra.mxu0 %v769
      %804 = vmatpush.bf16.msra.mxu0 %v767
      %805 = vmatpush.bf16.msra.mxu0 %v765
      %806 = vmatmul.bf16.gmra.mxu0 %v782
      %v807 = vpop.f32.mrf.mxu0
      %v808 = vadd.f32 0.0, %v807
      %v809 = vpop.f32.mrf.mxu0
      %v810 = vadd.f32 0.0, %v809
      %811 = vdwg.mxu0
      %812 = vst [vmem:[#allocation2] sm:$0xff] 0
      %813 = vst [vmem:[#allocation2 + $0x8] sm:$0xff] 0
      %814 = vst [vmem:[#allocation2 + $0x10] sm:$0xff] 0
      %815 = vst [vmem:[#allocation2 + $0x18] sm:$0xff] 0
      %816 = vst [vmem:[#allocation2 + $0x20] sm:$0xff] 0
      %817 = vst [vmem:[#allocation2 + $0x28] sm:$0xff] 0
      %818 = vst [vmem:[#allocation2 + $0x30] sm:$0xff] 0
      %819 = vst [vmem:[#allocation2 + $0x38] sm:$0xff] 0
      %v820 = vpack.c.bf16 %v722, %v721
      %v821 = vpack.c.bf16 %v724, %v723
      %822 = vst [vmem:[#allocation2 + $0x4] sm:$0xff] %v820
      %823 = vst [vmem:[#allocation2 + $0x14] sm:$0xff] %v821
      %v824 = vpack.c.bf16 %v808, %v794
      %v825 = vpack.c.bf16 %v810, %v796
      %826 = vst [vmem:[#allocation2 + $0x24] sm:$0xff] %v824
      %827 = vst [vmem:[#allocation2 + $0x34] sm:$0xff] %v825
      %v828 = vld [vmem:[#allocation2] sm:$0xff]
      %v829 = vld [vmem:[#allocation2 + $0x8] sm:$0xf]
      %v830 = vld [vmem:[#allocation2 + $0x10] sm:$0xff]
      %v831 = vld [vmem:[#allocation2 + $0x18] sm:$0xf]
      %v832 = vld [vmem:[#allocation2 + $0x20] sm:$0xff]
      %v833 = vld [vmem:[#allocation2 + $0x28] sm:$0xf]
      %v834 = vld [vmem:[#allocation2 + $0x30] sm:$0xff]
      %v835 = vld [vmem:[#allocation2 + $0x38] sm:$0xf]
      %v836 = vld [vmem:[%s5] sm:$0xf]
      %v837 = vld [vmem:[%s5 + $0x4] sm:$0xf]
      %v840 = vunpack.c.l.b16 %v836
      %v841 = vunpack.c.l.b16 %v837
      %v842 = vpack.c.b16 %v841, %v840
      %v851 = vunpack.c.l.b16 %v828
      %v852 = vunpack.c.h.b16 %v828
      %v853 = vunpack.c.l.b16 %v829
      %v854 = vunpack.c.l.b16 %v830
      %v855 = vunpack.c.h.b16 %v830
      %v856 = vunpack.c.l.b16 %v831
      %v857 = vunpack.c.l.b16 %v832
      %v858 = vunpack.c.h.b16 %v832
      %v859 = vunpack.c.l.b16 %v833
      %v860 = vunpack.c.l.b16 %v834
      %v861 = vunpack.c.h.b16 %v834
      %v862 = vunpack.c.l.b16 %v835
      %v863 = vpack.c.b16 %v854, %v851
      %v864 = vpack.c.b16 %v855, %v852
      %v865 = vpack.c.b16 %v856, %v853
      %v866 = vpack.c.b16 %v860, %v857
      %v867 = vpack.c.b16 %v861, %v858
      %v868 = vpack.c.b16 %v862, %v859
      %869 = vrot.lane.b32.xlu0 %v863, 17
      %v870 = vpop.permute.xlu0 %869
      %871 = vrot.lane.b32.xlu0 %v864, 17
      %v872 = vpop.permute.xlu0 %871
      %873 = vrot.lane.b32.xlu0 %v865, 17
      %v874 = vpop.permute.xlu0 %873
      %875 = vrot.lane.b32.xlu0 %v866, 17
      %v876 = vpop.permute.xlu0 %875
      %877 = vrot.lane.b32.xlu0 %v867, 17
      %v878 = vpop.permute.xlu0 %877
      %879 = vrot.lane.b32.xlu0 %v868, 17
      %v880 = vpop.permute.xlu0 %879
      %vm881 = vcmask 138240
      %v882 = vsel %vm881, %v870, %v872
      %v883 = vsel %vm881, %v872, %v874
      %v884 = vsel %vm881, %v876, %v878
      %v885 = vsel %vm881, %v878, %v880
      %vm890 = vcmask 261120
      %v892 = vsel %vm890, %v842, 0
      %894 = vmatpush.bf16.msra.mxu0 0
      %895 = vmatpush.bf16.msra.mxu0 0
      %896 = vmatpush.bf16.msra.mxu0 0
      %897 = vmatpush.bf16.msra.mxu0 0
      %898 = vmatpush.bf16.msra.mxu0 0
      %899 = vmatpush.bf16.msra.mxu0 0
      %900 = vmatpush.bf16.msra.mxu0 %v884
      %901 = vmatpush.bf16.msra.mxu0 %v882
      %902 = vmatmul.bf16.gmra.mxu0 %v892
      %v903 = vpop.f32.mrf.mxu0
      %v904 = vadd.f32 0.0, %v903
      %v905 = vpop.f32.mrf.mxu0
      %v906 = vadd.f32 0.0, %v905
      %907 = vdwg.mxu0
      %908 = vmatpush.bf16.msra.mxu0 0
      %909 = vmatpush.bf16.msra.mxu0 0
      %910 = vmatpush.bf16.msra.mxu0 0
      %911 = vmatpush.bf16.msra.mxu0 0
      %912 = vmatpush.bf16.msra.mxu0 0
      %913 = vmatpush.bf16.msra.mxu0 0
      %914 = vmatpush.bf16.msra.mxu0 %v885
      %915 = vmatpush.bf16.msra.mxu0 %v883
      %916 = vmatmul.bf16.gmra.mxu0 %v892
      %v917 = vpop.f32.mrf.mxu0
      %v918 = vadd.f32 0.0, %v917
      %v919 = vpop.f32.mrf.mxu0
      %v920 = vadd.f32 0.0, %v919
      %921 = vdwg.mxu0
      %v922 = vld [vmem:[%s9] sm:$0x3]
      %v924 = vperm.slane %v922, 0
      %v925 = vperm.slane %v922, 1
      %v928 = vmul.f32 %v904, %v924
      %v929 = vmul.f32 %v918, %v925
      %v930 = vmul.f32 %v906, %v924
      %v931 = vmul.f32 %v920, %v925
      %v932 = vadd.f32 %v928, 0.0
      %v933 = vadd.f32 %v929, 0.0
      %v934 = vadd.f32 %v930, 0.0
      %v935 = vadd.f32 %v931, 0.0
      %s936 = scalar_lea.vmem %s5, 8
      %v937 = vld [vmem:[%s936] sm:$0xf]
      %v938 = vld [vmem:[%s936 + $0x4] sm:$0xf]
      %v941 = vunpack.c.l.b16 %v937
      %v942 = vunpack.c.l.b16 %v938
      %v943 = vpack.c.b16 %v942, %v941
      %944 = vrot.lane.b32.xlu0 %v863, 16
      %v945 = vpop.permute.xlu0 %944
      %946 = vrot.lane.b32.xlu0 %v864, 16
      %v947 = vpop.permute.xlu0 %946
      %948 = vrot.lane.b32.xlu0 %v865, 16
      %v949 = vpop.permute.xlu0 %948
      %950 = vrot.lane.b32.xlu0 %v866, 16
      %v951 = vpop.permute.xlu0 %950
      %952 = vrot.lane.b32.xlu0 %v867, 16
      %v953 = vpop.permute.xlu0 %952
      %954 = vrot.lane.b32.xlu0 %v868, 16
      %v955 = vpop.permute.xlu0 %954
      %vm956 = vcmask 130048
      %v957 = vsel %vm956, %v945, %v947
      %v958 = vsel %vm956, %v947, %v949
      %v959 = vsel %vm956, %v951, %v953
      %v960 = vsel %vm956, %v953, %v955
      %v966 = vsel %vm890, %v943, 0
      %968 = vmatpush.bf16.msra.mxu0 0
      %969 = vmatpush.bf16.msra.mxu0 0
      %970 = vmatpush.bf16.msra.mxu0 0
      %971 = vmatpush.bf16.msra.mxu0 0
      %972 = vmatpush.bf16.msra.mxu0 0
      %973 = vmatpush.bf16.msra.mxu0 0
      %974 = vmatpush.bf16.msra.mxu0 %v959
      %975 = vmatpush.bf16.msra.mxu0 %v957
      %976 = vmatmul.bf16.gmra.mxu0 %v966
      %v977 = vpop.f32.mrf.mxu0
      %v978 = vadd.f32 0.0, %v977
      %v979 = vpop.f32.mrf.mxu0
      %v980 = vadd.f32 0.0, %v979
      %981 = vdwg.mxu0
      %982 = vmatpush.bf16.msra.mxu0 0
      %983 = vmatpush.bf16.msra.mxu0 0
      %984 = vmatpush.bf16.msra.mxu0 0
      %985 = vmatpush.bf16.msra.mxu0 0
      %986 = vmatpush.bf16.msra.mxu0 0
      %987 = vmatpush.bf16.msra.mxu0 0
      %988 = vmatpush.bf16.msra.mxu0 %v960
      %989 = vmatpush.bf16.msra.mxu0 %v958
      %990 = vmatmul.bf16.gmra.mxu0 %v966
      %v991 = vpop.f32.mrf.mxu0
      %v992 = vadd.f32 0.0, %v991
      %v993 = vpop.f32.mrf.mxu0
      %v994 = vadd.f32 0.0, %v993
      %995 = vdwg.mxu0
      %v996 = vadd.f32 %v932, %v978
      %v997 = vadd.f32 %v933, %v992
      %v998 = vadd.f32 %v934, %v980
      %v999 = vadd.f32 %v935, %v994
      %s1000 = scalar_lea.vmem %s5, 16
      %v1001 = vld [vmem:[%s1000] sm:$0xf]
      %v1002 = vld [vmem:[%s1000 + $0x4] sm:$0xf]
      %v1005 = vunpack.c.l.b16 %v1001
      %v1006 = vunpack.c.l.b16 %v1002
      %v1007 = vpack.c.b16 %v1006, %v1005
      %1008 = vrot.lane.b32.xlu0 %v863, 15
      %v1009 = vpop.permute.xlu0 %1008
      %1010 = vrot.lane.b32.xlu0 %v864, 15
      %v1011 = vpop.permute.xlu0 %1010
      %1012 = vrot.lane.b32.xlu0 %v865, 15
      %v1013 = vpop.permute.xlu0 %1012
      %1014 = vrot.lane.b32.xlu0 %v866, 15
      %v1015 = vpop.permute.xlu0 %1014
      %1016 = vrot.lane.b32.xlu0 %v867, 15
      %v1017 = vpop.permute.xlu0 %1016
      %1018 = vrot.lane.b32.xlu0 %v868, 15
      %v1019 = vpop.permute.xlu0 %1018
      %vm1020 = vcmask 121856
      %v1021 = vsel %vm1020, %v1009, %v1011
      %v1022 = vsel %vm1020, %v1011, %v1013
      %v1023 = vsel %vm1020, %v1015, %v1017
      %v1024 = vsel %vm1020, %v1017, %v1019
      %v1030 = vsel %vm890, %v1007, 0
      %1032 = vmatpush.bf16.msra.mxu0 0
      %1033 = vmatpush.bf16.msra.mxu0 0
      %1034 = vmatpush.bf16.msra.mxu0 0
      %1035 = vmatpush.bf16.msra.mxu0 0
      %1036 = vmatpush.bf16.msra.mxu0 0
      %1037 = vmatpush.bf16.msra.mxu0 0
      %1038 = vmatpush.bf16.msra.mxu0 %v1023
      %1039 = vmatpush.bf16.msra.mxu0 %v1021
      %1040 = vmatmul.bf16.gmra.mxu0 %v1030
      %v1041 = vpop.f32.mrf.mxu0
      %v1042 = vadd.f32 0.0, %v1041
      %v1043 = vpop.f32.mrf.mxu0
      %v1044 = vadd.f32 0.0, %v1043
      %1045 = vdwg.mxu0
      %1046 = vmatpush.bf16.msra.mxu0 0
      %1047 = vmatpush.bf16.msra.mxu0 0
      %1048 = vmatpush.bf16.msra.mxu0 0
      %1049 = vmatpush.bf16.msra.mxu0 0
      %1050 = vmatpush.bf16.msra.mxu0 0
      %1051 = vmatpush.bf16.msra.mxu0 0
      %1052 = vmatpush.bf16.msra.mxu0 %v1024
      %1053 = vmatpush.bf16.msra.mxu0 %v1022
      %1054 = vmatmul.bf16.gmra.mxu0 %v1030
      %v1055 = vpop.f32.mrf.mxu0
      %v1056 = vadd.f32 0.0, %v1055
      %v1057 = vpop.f32.mrf.mxu0
      %v1058 = vadd.f32 0.0, %v1057
      %1059 = vdwg.mxu0
      %s1060 = scalar_lea.vmem %s9, 4
      %v1061 = vld [vmem:[%s1060] sm:$0x3]
      %v1063 = vperm.slane %v1061, 0
      %v1064 = vperm.slane %v1061, 1
      %v1067 = vmul.f32 %v1042, %v1063
      %v1068 = vmul.f32 %v1056, %v1064
      %v1069 = vmul.f32 %v1044, %v1063
      %v1070 = vmul.f32 %v1058, %v1064
      %v1071 = vadd.f32 %v996, %v1067
      %v1072 = vadd.f32 %v997, %v1068
      %v1073 = vadd.f32 %v998, %v1069
      %v1074 = vadd.f32 %v999, %v1070
      %s1075 = scalar_lea.vmem %s5, 24
      %v1076 = vld [vmem:[%s1075] sm:$0xf]
      %v1077 = vld [vmem:[%s1075 + $0x4] sm:$0xf]
      %v1080 = vunpack.c.l.b16 %v1076
      %v1081 = vunpack.c.l.b16 %v1077
      %v1082 = vpack.c.b16 %v1081, %v1080
      %1083 = vrot.lane.b32.xlu0 %v863, 1
      %v1084 = vpop.permute.xlu0 %1083
      %1085 = vrot.lane.b32.xlu0 %v864, 1
      %v1086 = vpop.permute.xlu0 %1085
      %1087 = vrot.lane.b32.xlu0 %v865, 1
      %v1088 = vpop.permute.xlu0 %1087
      %1089 = vrot.lane.b32.xlu0 %v866, 1
      %v1090 = vpop.permute.xlu0 %1089
      %1091 = vrot.lane.b32.xlu0 %v867, 1
      %v1092 = vpop.permute.xlu0 %1091
      %1093 = vrot.lane.b32.xlu0 %v868, 1
      %v1094 = vpop.permute.xlu0 %1093
      %vm1095 = vcmask 7168
      %v1096 = vsel %vm1095, %v1084, %v1086
      %v1097 = vsel %vm1095, %v1086, %v1088
      %v1098 = vsel %vm1095, %v1090, %v1092
      %v1099 = vsel %vm1095, %v1092, %v1094
      %v1105 = vsel %vm890, %v1082, 0
      %1107 = vmatpush.bf16.msra.mxu0 0
      %1108 = vmatpush.bf16.msra.mxu0 0
      %1109 = vmatpush.bf16.msra.mxu0 0
      %1110 = vmatpush.bf16.msra.mxu0 0
      %1111 = vmatpush.bf16.msra.mxu0 0
      %1112 = vmatpush.bf16.msra.mxu0 0
      %1113 = vmatpush.bf16.msra.mxu0 %v1098
      %1114 = vmatpush.bf16.msra.mxu0 %v1096
      %1115 = vmatmul.bf16.gmra.mxu0 %v1105
      %v1116 = vpop.f32.mrf.mxu0
      %v1117 = vadd.f32 0.0, %v1116
      %v1118 = vpop.f32.mrf.mxu0
      %v1119 = vadd.f32 0.0, %v1118
      %1120 = vdwg.mxu0
      %1121 = vmatpush.bf16.msra.mxu0 0
      %1122 = vmatpush.bf16.msra.mxu0 0
      %1123 = vmatpush.bf16.msra.mxu0 0
      %1124 = vmatpush.bf16.msra.mxu0 0
      %1125 = vmatpush.bf16.msra.mxu0 0
      %1126 = vmatpush.bf16.msra.mxu0 0
      %1127 = vmatpush.bf16.msra.mxu0 %v1099
      %1128 = vmatpush.bf16.msra.mxu0 %v1097
      %1129 = vmatmul.bf16.gmra.mxu0 %v1105
      %v1130 = vpop.f32.mrf.mxu0
      %v1131 = vadd.f32 0.0, %v1130
      %v1132 = vpop.f32.mrf.mxu0
      %v1133 = vadd.f32 0.0, %v1132
      %1134 = vdwg.mxu0
      %v1135 = vmul.f32 %v1117, %v924
      %v1136 = vmul.f32 %v1131, %v925
      %v1137 = vmul.f32 %v1119, %v924
      %v1138 = vmul.f32 %v1133, %v925
      %v1139 = vadd.f32 %v1071, %v1135
      %v1140 = vadd.f32 %v1072, %v1136
      %v1141 = vadd.f32 %v1073, %v1137
      %v1142 = vadd.f32 %v1074, %v1138
      %v1143 = vld [vmem:[#allocation2 + $0x4] sm:$0xff]
      %v1144 = vld [vmem:[#allocation2 + $0x14] sm:$0xff]
      %v1145 = vld [vmem:[#allocation2 + $0x24] sm:$0xff]
      %v1146 = vld [vmem:[#allocation2 + $0x34] sm:$0xff]
      %s1147 = scalar_lea.vmem %s5, 32
      %v1148 = vld [vmem:[%s1147] sm:$0xf]
      %v1149 = vld [vmem:[%s1147 + $0x4] sm:$0xf]
      %v1152 = vunpack.c.l.b16 %v1148
      %v1153 = vunpack.c.l.b16 %v1149
      %v1154 = vpack.c.b16 %v1153, %v1152
      %v1159 = vunpack.c.l.b16 %v1143
      %v1160 = vunpack.c.h.b16 %v1143
      %v1161 = vunpack.c.l.b16 %v1144
      %v1162 = vunpack.c.h.b16 %v1144
      %v1163 = vunpack.c.l.b16 %v1145
      %v1164 = vunpack.c.h.b16 %v1145
      %v1165 = vunpack.c.l.b16 %v1146
      %v1166 = vunpack.c.h.b16 %v1146
      %v1167 = vpack.c.b16 %v1161, %v1159
      %v1168 = vpack.c.b16 %v1162, %v1160
      %v1169 = vpack.c.b16 %v1165, %v1163
      %v1170 = vpack.c.b16 %v1166, %v1164
      %v1176 = vsel %vm890, %v1154, 0
      %1178 = vmatpush.bf16.msra.mxu0 0
      %1179 = vmatpush.bf16.msra.mxu0 0
      %1180 = vmatpush.bf16.msra.mxu0 0
      %1181 = vmatpush.bf16.msra.mxu0 0
      %1182 = vmatpush.bf16.msra.mxu0 0
      %1183 = vmatpush.bf16.msra.mxu0 0
      %1184 = vmatpush.bf16.msra.mxu0 %v1169
      %1185 = vmatpush.bf16.msra.mxu0 %v1167
      %1186 = vmatmul.bf16.gmra.mxu0 %v1176
      %v1187 = vpop.f32.mrf.mxu0
      %v1188 = vadd.f32 0.0, %v1187
      %v1189 = vpop.f32.mrf.mxu0
      %v1190 = vadd.f32 0.0, %v1189
      %1191 = vdwg.mxu0
      %1192 = vmatpush.bf16.msra.mxu0 0
      %1193 = vmatpush.bf16.msra.mxu0 0
      %1194 = vmatpush.bf16.msra.mxu0 0
      %1195 = vmatpush.bf16.msra.mxu0 0
      %1196 = vmatpush.bf16.msra.mxu0 0
      %1197 = vmatpush.bf16.msra.mxu0 0
      %1198 = vmatpush.bf16.msra.mxu0 %v1170
      %1199 = vmatpush.bf16.msra.mxu0 %v1168
      %1200 = vmatmul.bf16.gmra.mxu0 %v1176
      %v1201 = vpop.f32.mrf.mxu0
      %v1202 = vadd.f32 0.0, %v1201
      %v1203 = vpop.f32.mrf.mxu0
      %v1204 = vadd.f32 0.0, %v1203
      %1205 = vdwg.mxu0
      %v1206 = vadd.f32 %v1139, %v1188
      %v1207 = vadd.f32 %v1140, %v1202
      %v1208 = vadd.f32 %v1141, %v1190
      %v1209 = vadd.f32 %v1142, %v1204
      %v1210 = vld [vmem:[#allocation2 + $0x4] sm:$0xff]
      %v1211 = vld [vmem:[#allocation2 + $0xc] sm:$0xf]
      %v1212 = vld [vmem:[#allocation2 + $0x14] sm:$0xff]
      %v1213 = vld [vmem:[#allocation2 + $0x1c] sm:$0xf]
      %v1214 = vld [vmem:[#allocation2 + $0x24] sm:$0xff]
      %v1215 = vld [vmem:[#allocation2 + $0x2c] sm:$0xf]
      %v1216 = vld [vmem:[#allocation2 + $0x34] sm:$0xff]
      %v1217 = vld [vmem:[#allocation2 + $0x3c] sm:$0xf]
      %s1218 = scalar_lea.vmem %s5, 40
      %v1219 = vld [vmem:[%s1218] sm:$0xf]
      %v1220 = vld [vmem:[%s1218 + $0x4] sm:$0xf]
      %v1223 = vunpack.c.l.b16 %v1219
      %v1224 = vunpack.c.l.b16 %v1220
      %v1225 = vpack.c.b16 %v1224, %v1223
      %v1234 = vunpack.c.l.b16 %v1210
      %v1235 = vunpack.c.h.b16 %v1210
      %v1236 = vunpack.c.l.b16 %v1211
      %v1237 = vunpack.c.l.b16 %v1212
      %v1238 = vunpack.c.h.b16 %v1212
      %v1239 = vunpack.c.l.b16 %v1213
      %v1240 = vunpack.c.l.b16 %v1214
      %v1241 = vunpack.c.h.b16 %v1214
      %v1242 = vunpack.c.l.b16 %v1215
      %v1243 = vunpack.c.l.b16 %v1216
      %v1244 = vunpack.c.h.b16 %v1216
      %v1245 = vunpack.c.l.b16 %v1217
      %v1246 = vpack.c.b16 %v1237, %v1234
      %v1247 = vpack.c.b16 %v1238, %v1235
      %v1248 = vpack.c.b16 %v1239, %v1236
      %v1249 = vpack.c.b16 %v1243, %v1240
      %v1250 = vpack.c.b16 %v1244, %v1241
      %v1251 = vpack.c.b16 %v1245, %v1242
      %1252 = vrot.lane.b32.xlu0 %v1246, 127
      %v1253 = vpop.permute.xlu0 %1252
      %1254 = vrot.lane.b32.xlu0 %v1247, 127
      %v1255 = vpop.permute.xlu0 %1254
      %1256 = vrot.lane.b32.xlu0 %v1248, 127
      %v1257 = vpop.permute.xlu0 %1256
      %1258 = vrot.lane.b32.xlu0 %v1249, 127
      %v1259 = vpop.permute.xlu0 %1258
      %1260 = vrot.lane.b32.xlu0 %v1250, 127
      %v1261 = vpop.permute.xlu0 %1260
      %1262 = vrot.lane.b32.xlu0 %v1251, 127
      %v1263 = vpop.permute.xlu0 %1262
      %vm1264 = vcmask 1039360
      %v1265 = vsel %vm1264, %v1253, %v1255
      %v1266 = vsel %vm1264, %v1255, %v1257
      %v1267 = vsel %vm1264, %v1259, %v1261
      %v1268 = vsel %vm1264, %v1261, %v1263
      %v1274 = vsel %vm890, %v1225, 0
      %1276 = vmatpush.bf16.msra.mxu0 0
      %1277 = vmatpush.bf16.msra.mxu0 0
      %1278 = vmatpush.bf16.msra.mxu0 0
      %1279 = vmatpush.bf16.msra.mxu0 0
      %1280 = vmatpush.bf16.msra.mxu0 0
      %1281 = vmatpush.bf16.msra.mxu0 0
      %1282 = vmatpush.bf16.msra.mxu0 %v1267
      %1283 = vmatpush.bf16.msra.mxu0 %v1265
      %1284 = vmatmul.bf16.gmra.mxu0 %v1274
      %v1285 = vpop.f32.mrf.mxu0
      %v1286 = vadd.f32 0.0, %v1285
      %v1287 = vpop.f32.mrf.mxu0
      %v1288 = vadd.f32 0.0, %v1287
      %1289 = vdwg.mxu0
      %1290 = vmatpush.bf16.msra.mxu0 0
      %1291 = vmatpush.bf16.msra.mxu0 0
      %1292 = vmatpush.bf16.msra.mxu0 0
      %1293 = vmatpush.bf16.msra.mxu0 0
      %1294 = vmatpush.bf16.msra.mxu0 0
      %1295 = vmatpush.bf16.msra.mxu0 0
      %1296 = vmatpush.bf16.msra.mxu0 %v1268
      %1297 = vmatpush.bf16.msra.mxu0 %v1266
      %1298 = vmatmul.bf16.gmra.mxu0 %v1274
      %v1299 = vpop.f32.mrf.mxu0
      %v1300 = vadd.f32 0.0, %v1299
      %v1301 = vpop.f32.mrf.mxu0
      %v1302 = vadd.f32 0.0, %v1301
      %1303 = vdwg.mxu0
      %v1304 = vmul.f32 %v1286, %v1063
      %v1305 = vmul.f32 %v1300, %v1064
      %v1306 = vmul.f32 %v1288, %v1063
      %v1307 = vmul.f32 %v1302, %v1064
      %v1308 = vadd.f32 %v1206, %v1304
      %v1309 = vadd.f32 %v1207, %v1305
      %v1310 = vadd.f32 %v1208, %v1306
      %v1311 = vadd.f32 %v1209, %v1307
      %s1312 = scalar_lea.vmem %s5, 48
      %v1313 = vld [vmem:[%s1312] sm:$0xf]
      %v1314 = vld [vmem:[%s1312 + $0x4] sm:$0xf]
      %v1317 = vunpack.c.l.b16 %v1313
      %v1318 = vunpack.c.l.b16 %v1314
      %v1319 = vpack.c.b16 %v1318, %v1317
      %1320 = vrot.lane.b32.xlu0 %v1246, 113
      %v1321 = vpop.permute.xlu0 %1320
      %1322 = vrot.lane.b32.xlu0 %v1247, 113
      %v1323 = vpop.permute.xlu0 %1322
      %1324 = vrot.lane.b32.xlu0 %v1248, 113
      %v1325 = vpop.permute.xlu0 %1324
      %1326 = vrot.lane.b32.xlu0 %v1249, 113
      %v1327 = vpop.permute.xlu0 %1326
      %1328 = vrot.lane.b32.xlu0 %v1250, 113
      %v1329 = vpop.permute.xlu0 %1328
      %1330 = vrot.lane.b32.xlu0 %v1251, 113
      %v1331 = vpop.permute.xlu0 %1330
      %vm1332 = vcmask 924672
      %v1333 = vsel %vm1332, %v1321, %v1323
      %v1334 = vsel %vm1332, %v1323, %v1325
      %v1335 = vsel %vm1332, %v1327, %v1329
      %v1336 = vsel %vm1332, %v1329, %v1331
      %v1342 = vsel %vm890, %v1319, 0
      %1344 = vmatpush.bf16.msra.mxu0 0
      %1345 = vmatpush.bf16.msra.mxu0 0
      %1346 = vmatpush.bf16.msra.mxu0 0
      %1347 = vmatpush.bf16.msra.mxu0 0
      %1348 = vmatpush.bf16.msra.mxu0 0
      %1349 = vmatpush.bf16.msra.mxu0 0
      %1350 = vmatpush.bf16.msra.mxu0 %v1335
      %1351 = vmatpush.bf16.msra.mxu0 %v1333
      %1352 = vmatmul.bf16.gmra.mxu0 %v1342
      %v1353 = vpop.f32.mrf.mxu0
      %v1354 = vadd.f32 0.0, %v1353
      %v1355 = vpop.f32.mrf.mxu0
      %v1356 = vadd.f32 0.0, %v1355
      %1357 = vdwg.mxu0
      %1358 = vmatpush.bf16.msra.mxu0 0
      %1359 = vmatpush.bf16.msra.mxu0 0
      %1360 = vmatpush.bf16.msra.mxu0 0
      %1361 = vmatpush.bf16.msra.mxu0 0
      %1362 = vmatpush.bf16.msra.mxu0 0
      %1363 = vmatpush.bf16.msra.mxu0 0
      %1364 = vmatpush.bf16.msra.mxu0 %v1336
      %1365 = vmatpush.bf16.msra.mxu0 %v1334
      %1366 = vmatmul.bf16.gmra.mxu0 %v1342
      %v1367 = vpop.f32.mrf.mxu0
      %v1368 = vadd.f32 0.0, %v1367
      %v1369 = vpop.f32.mrf.mxu0
      %v1370 = vadd.f32 0.0, %v1369
      %1371 = vdwg.mxu0
      %v1372 = vmul.f32 %v1354, %v924
      %v1373 = vmul.f32 %v1368, %v925
      %v1374 = vmul.f32 %v1356, %v924
      %v1375 = vmul.f32 %v1370, %v925
      %v1376 = vadd.f32 %v1308, %v1372
      %v1377 = vadd.f32 %v1309, %v1373
      %v1378 = vadd.f32 %v1310, %v1374
      %v1379 = vadd.f32 %v1311, %v1375
      %s1380 = scalar_lea.vmem %s5, 56
      %v1381 = vld [vmem:[%s1380] sm:$0xf]
      %v1382 = vld [vmem:[%s1380 + $0x4] sm:$0xf]
      %v1385 = vunpack.c.l.b16 %v1381
      %v1386 = vunpack.c.l.b16 %v1382
      %v1387 = vpack.c.b16 %v1386, %v1385
      %1388 = vrot.lane.b32.xlu0 %v1246, 112
      %v1389 = vpop.permute.xlu0 %1388
      %1390 = vrot.lane.b32.xlu0 %v1247, 112
      %v1391 = vpop.permute.xlu0 %1390
      %1392 = vrot.lane.b32.xlu0 %v1248, 112
      %v1393 = vpop.permute.xlu0 %1392
      %1394 = vrot.lane.b32.xlu0 %v1249, 112
      %v1395 = vpop.permute.xlu0 %1394
      %1396 = vrot.lane.b32.xlu0 %v1250, 112
      %v1397 = vpop.permute.xlu0 %1396
      %1398 = vrot.lane.b32.xlu0 %v1251, 112
      %v1399 = vpop.permute.xlu0 %1398
      %vm1400 = vcmask 916480
      %v1401 = vsel %vm1400, %v1389, %v1391
      %v1402 = vsel %vm1400, %v1391, %v1393
      %v1403 = vsel %vm1400, %v1395, %v1397
      %v1404 = vsel %vm1400, %v1397, %v1399
      %v1410 = vsel %vm890, %v1387, 0
      %1412 = vmatpush.bf16.msra.mxu0 0
      %1413 = vmatpush.bf16.msra.mxu0 0
      %1414 = vmatpush.bf16.msra.mxu0 0
      %1415 = vmatpush.bf16.msra.mxu0 0
      %1416 = vmatpush.bf16.msra.mxu0 0
      %1417 = vmatpush.bf16.msra.mxu0 0
      %1418 = vmatpush.bf16.msra.mxu0 %v1403
      %1419 = vmatpush.bf16.msra.mxu0 %v1401
      %1420 = vmatmul.bf16.gmra.mxu0 %v1410
      %v1421 = vpop.f32.mrf.mxu0
      %v1422 = vadd.f32 0.0, %v1421
      %v1423 = vpop.f32.mrf.mxu0
      %v1424 = vadd.f32 0.0, %v1423
      %1425 = vdwg.mxu0
      %1426 = vmatpush.bf16.msra.mxu0 0
      %1427 = vmatpush.bf16.msra.mxu0 0
      %1428 = vmatpush.bf16.msra.mxu0 0
      %1429 = vmatpush.bf16.msra.mxu0 0
      %1430 = vmatpush.bf16.msra.mxu0 0
      %1431 = vmatpush.bf16.msra.mxu0 0
      %1432 = vmatpush.bf16.msra.mxu0 %v1404
      %1433 = vmatpush.bf16.msra.mxu0 %v1402
      %1434 = vmatmul.bf16.gmra.mxu0 %v1410
      %v1435 = vpop.f32.mrf.mxu0
      %v1436 = vadd.f32 0.0, %v1435
      %v1437 = vpop.f32.mrf.mxu0
      %v1438 = vadd.f32 0.0, %v1437
      %1439 = vdwg.mxu0
      %v1440 = vadd.f32 %v1376, %v1422
      %v1441 = vadd.f32 %v1377, %v1436
      %v1442 = vadd.f32 %v1378, %v1424
      %v1443 = vadd.f32 %v1379, %v1438
      %s1444 = scalar_lea.vmem %s5, 64
      %v1445 = vld [vmem:[%s1444] sm:$0xf]
      %v1446 = vld [vmem:[%s1444 + $0x4] sm:$0xf]
      %v1449 = vunpack.c.l.b16 %v1445
      %v1450 = vunpack.c.l.b16 %v1446
      %v1451 = vpack.c.b16 %v1450, %v1449
      %1452 = vrot.lane.b32.xlu0 %v1246, 111
      %v1453 = vpop.permute.xlu0 %1452
      %1454 = vrot.lane.b32.xlu0 %v1247, 111
      %v1455 = vpop.permute.xlu0 %1454
      %1456 = vrot.lane.b32.xlu0 %v1248, 111
      %v1457 = vpop.permute.xlu0 %1456
      %1458 = vrot.lane.b32.xlu0 %v1249, 111
      %v1459 = vpop.permute.xlu0 %1458
      %1460 = vrot.lane.b32.xlu0 %v1250, 111
      %v1461 = vpop.permute.xlu0 %1460
      %1462 = vrot.lane.b32.xlu0 %v1251, 111
      %v1463 = vpop.permute.xlu0 %1462
      %vm1464 = vcmask 908288
      %v1465 = vsel %vm1464, %v1453, %v1455
      %v1466 = vsel %vm1464, %v1455, %v1457
      %v1467 = vsel %vm1464, %v1459, %v1461
      %v1468 = vsel %vm1464, %v1461, %v1463
      %v1474 = vsel %vm890, %v1451, 0
      %1476 = vmatpush.bf16.msra.mxu0 0
      %1477 = vmatpush.bf16.msra.mxu0 0
      %1478 = vmatpush.bf16.msra.mxu0 0
      %1479 = vmatpush.bf16.msra.mxu0 0
      %1480 = vmatpush.bf16.msra.mxu0 0
      %1481 = vmatpush.bf16.msra.mxu0 0
      %1482 = vmatpush.bf16.msra.mxu0 %v1467
      %1483 = vmatpush.bf16.msra.mxu0 %v1465
      %1484 = vmatmul.bf16.gmra.mxu0 %v1474
      %v1485 = vpop.f32.mrf.mxu0
      %v1486 = vadd.f32 0.0, %v1485
      %v1487 = vpop.f32.mrf.mxu0
      %v1488 = vadd.f32 0.0, %v1487
      %1489 = vdwg.mxu0
      %1490 = vmatpush.bf16.msra.mxu0 0
      %1491 = vmatpush.bf16.msra.mxu0 0
      %1492 = vmatpush.bf16.msra.mxu0 0
      %1493 = vmatpush.bf16.msra.mxu0 0
      %1494 = vmatpush.bf16.msra.mxu0 0
      %1495 = vmatpush.bf16.msra.mxu0 0
      %1496 = vmatpush.bf16.msra.mxu0 %v1468
      %1497 = vmatpush.bf16.msra.mxu0 %v1466
      %1498 = vmatmul.bf16.gmra.mxu0 %v1474
      %v1499 = vpop.f32.mrf.mxu0
      %v1500 = vadd.f32 0.0, %v1499
      %v1501 = vpop.f32.mrf.mxu0
      %v1502 = vadd.f32 0.0, %v1501
      %1503 = vdwg.mxu0
      %v1504 = vmul.f32 %v1486, %v1063
      %v1505 = vmul.f32 %v1500, %v1064
      %v1506 = vmul.f32 %v1488, %v1063
      %v1507 = vmul.f32 %v1502, %v1064
      %v1508 = vadd.f32 %v1440, %v1504
      %v1509 = vadd.f32 %v1441, %v1505
      %v1510 = vadd.f32 %v1442, %v1506
      %v1511 = vadd.f32 %v1443, %v1507
      %v1512 = vld [vmem:[%s6] sm:$0xff]
      %v1513 = vld [vmem:[%s6 + $0x8] sm:$0xff]
      %1515 = vset.pattern.permute.xlu0 0
      %1516 = vperm.xlu0 %1515, %v1512
      %v1517 = vpop.permute.xlu0 %1516
      %1520 = vset.pattern.permute.xlu0 0
      %1521 = vperm.xlu0 %1520, %v1513
      %v1522 = vpop.permute.xlu0 %1521
      %v1524 = vadd.f32 %v1508, %v1517
      %v1525 = vadd.f32 %v1509, %v1517
      %v1526 = vadd.f32 %v1510, %v1522
      %v1527 = vadd.f32 %v1511, %v1522
      %v1528 = vmax.f32 %v1524, 0.0
      %v1529 = vmax.f32 %v1525, 0.0
      %v1530 = vmax.f32 %v1526, 0.0
      %v1531 = vmax.f32 %v1527, 0.0
      %v1532 = vld [vmem:[%s7] sm:$0xf]
      %v1533 = vpack.c.bf16 %v1530, %v1528
      %v1534 = vpack.c.bf16 %v1531, %v1529
      %v1535 = vld [vmem:[%s8] sm:$0xff]
      %1537 = vset.pattern.permute.xlu0 0
      %1538 = vperm.xlu0 %1537, %v1535
      %v1539 = vpop.permute.xlu0 %1538
      %vm1541 = vcmask 130048
      %v1543 = vsel %vm1541, %v1532, 0
      %1545 = vmatpush.bf16.msra.mxu0 0
      %1546 = vmatpush.bf16.msra.mxu0 0
      %1547 = vmatpush.bf16.msra.mxu0 0
      %1548 = vmatpush.bf16.msra.mxu0 0
      %1549 = vmatpush.bf16.msra.mxu0 0
      %1550 = vmatpush.bf16.msra.mxu0 0
      %1551 = vmatpush.bf16.msra.mxu0 0
      %1552 = vmatpush.bf16.msra.mxu0 %v1533
      %1553 = vmatmul.bf16.gmra.mxu0 %v1543
      %v1554 = vpop.f32.mrf.mxu0
      %v1555 = vadd.f32 %v1539, %v1554
      %v1556 = vpop.f32.mrf.mxu0
      %1557 = vdwg.mxu0
      %1558 = vmatpush.bf16.msra.mxu0 0
      %1559 = vmatpush.bf16.msra.mxu0 0
      %1560 = vmatpush.bf16.msra.mxu0 0
      %1561 = vmatpush.bf16.msra.mxu0 0
      %1562 = vmatpush.bf16.msra.mxu0 0
      %1563 = vmatpush.bf16.msra.mxu0 0
      %1564 = vmatpush.bf16.msra.mxu0 0
      %1565 = vmatpush.bf16.msra.mxu0 %v1534
      %1566 = vmatmul.bf16.gmra.mxu0 %v1543
      %v1567 = vpop.f32.mrf.mxu0
      %v1568 = vadd.f32 %v1539, %v1567
      %v1569 = vpop.f32.mrf.mxu0
      %1570 = vdwg.mxu0
      %1571 = vst [vmem:[%s379] sm:$0xff] %v1555
      %1572 = vst [vmem:[%s379 + $0x8] sm:$0xff] %v1568
      %p1573 = scmp.lt.s32.totalorder %s21, 1
      %s1574 = scalar_select %p1573, %s21, 1
      %s1575 = smul.addr %s1574, 2
      %s1576 = smul.addr %s1575, 8
      %s1577 = scalar_lea.vmem %s10, %s1576
      // Predicated region
      $region61: #{fpn_cat3x3_head_forward.3} parent=59 // pred_check
        %p1578 = pneg %p259
      $region62: #{fpn_cat3x3_head_forward.3} parent=59 // pred_check_branch
        %1580 = sbr.rel (%p1578) target = $region64
      $region63: #{fpn_cat3x3_head_forward.3} parent=59 // pred_region
        _
      $region64: #{fpn_cat3x3_head_forward.3} parent=59 // pred_fallthru
        _
    $region60: #{fpn_cat3x3_head_forward.3} parent=5 // pred_fallthru
      _
    %p1581 = scmp.le.s32.totalorder 2, %s16
    // Predicated region
    $region65: #{fpn_cat3x3_head_forward.3} parent=5 // pred_check
      %p1582 = pneg %p1581
    $region66: #{fpn_cat3x3_head_forward.3} parent=5 // pred_check_branch
      %1584 = sbr.rel (%p1582) target = $region68
    $region67: #{fpn_cat3x3_head_forward.3} parent=5 // pred_region
      %s1585 = ssub.s32 %s16, 2
      // Predicated region
      $region69: #{fpn_cat3x3_head_forward.3} parent=67 // pred_check
        %p1586 = pneg %p265
      $region70: #{fpn_cat3x3_head_forward.3} parent=67 // pred_check_branch
        %1588 = sbr.rel (%p1586) target = $region72
      $region71: #{fpn_cat3x3_head_forward.3} parent=67 // pred_region
        %p1589 = scmp.lt.s32.totalorder %s22, 1
        %s1590 = scalar_select %p1589, %s22, 1
        %s1591 = smul.addr %s1590, 2
        %s1592 = smul.addr %s1591, 8
        %s1593 = scalar_lea.vmem %s10, %s1592
      $region72: #{fpn_cat3x3_head_forward.3} parent=67 // pred_fallthru
        _
    $region68: #{fpn_cat3x3_head_forward.3} parent=5 // pred_fallthru
      _
  $region6: #{fpn_cat3x3_head_forward.3} parent=0 // loop_footer
    %s20 = sadd.s32 1, %s16
  $region7: #{fpn_cat3x3_head_forward.3} parent=0 // loop_footer_branch
    %15 = sbr.rel target = $region3
  $region8: #{fpn_cat3x3_head_forward.3} parent=0 // loop_exit
    _

</llo_original>
